<compile_context>
chip_gen: v7x
topology: tpu7x:2x2x1
jax: 0.10.0
libtpu: 0.0.40
codegen_flags: <defaults>
</compile_context>

<pallas_src>
import jax
import jax.numpy as jnp
from jax.experimental import pallas as pl
from jax.experimental.pallas import tpu as pltpu


# ----------------------------- in-kernel helpers -----------------------------

def _gelu_tanh(y):
    # TODO(synk): PyTorch nn.GELU default is exact (erf-based); tanh approximation is
    # used since lax.erf lowering is not guaranteed on Mosaic (expect ~1e-3 mismatch).
    return 0.5 * y * (1.0 + jnp.tanh(0.7978845608028654 * (y + 0.044715 * y * y * y)))


def _three_nn_weights(p_tgt, p_src_t):
    """Row-normalized 3-NN inverse-squared-distance weights.

    p_tgt: (Nt, 3) target points; p_src_t: (3, Ns) source points (transposed).
    Returns a sparse (Nt, Ns) weight matrix so interpolation becomes one MXU matmul.
    """
    nt, ns = p_tgt.shape[0], p_src_t.shape[1]

    # squared-norm terms unrolled over the static coordinate dim (pure VPU, no reduce);
    # cross term goes to the MXU.
    tn = (p_tgt[:, 0:1] * p_tgt[:, 0:1]
          + p_tgt[:, 1:2] * p_tgt[:, 1:2]
          + p_tgt[:, 2:3] * p_tgt[:, 2:3])                          # (Nt, 1)
    sn = (p_src_t[0:1, :] * p_src_t[0:1, :]
          + p_src_t[1:2, :] * p_src_t[1:2, :]
          + p_src_t[2:3, :] * p_src_t[2:3, :])                      # (1, Ns)
    d = tn + sn - 2.0 * jnp.dot(p_tgt, p_src_t, preferred_element_type=jnp.float32)
    d = jnp.maximum(d, 0.0)                                         # guard FP cancellation

    recip = 1.0 / (d + 1e-8)
    lane = jax.lax.broadcasted_iota(jnp.int32, (nt, ns), 1)

    remaining = d
    w = jnp.zeros((nt, ns), jnp.float32)
    # select the 3 nearest neighbours per row (ties -> smallest index), building a
    # sparse weight matrix so the gather is a dense matmul.
    for _ in range(3):
        mval = jnp.min(remaining, axis=-1, keepdims=True)
        cand = jnp.where(remaining <= mval, lane, ns)
        sel = jnp.min(cand, axis=-1, keepdims=True)
        hit = lane == sel
        w = jnp.where(hit, recip, w)
        remaining = jnp.where(hit, jnp.inf, remaining)

    return w / jnp.sum(w, axis=-1, keepdims=True)


# ----------------------------- fused decoder kernel -----------------------------

def _decoder_fused_kernel(
        oh_ref, p1_ref, p2_ref, p2t_ref, p3t_ref, f1_ref, f2_ref, f3_ref,
        wc1_ref, bc1_ref, wc2_ref,
        w2s_ref, w2i_ref, b2a_ref, w2b_ref, b2b_ref,
        w1s_ref, w1i_ref, b1a_ref, w1b_ref, b1b_ref,
        w0s_ref, w0i_ref, b0a_ref, w0b_ref, b0b_ref,
        out_ref):
    """Whole DENetPartDecoder forward for one batch element (grid is over B)."""
    f32 = jnp.float32

    # ---- convc on the (1, 16) one-hot: the cls feature is constant over N, so run the
    #      MLP once per batch and broadcast-add later (N0x less work than the reference).
    h = jnp.dot(oh_ref[...], wc1_ref[...], preferred_element_type=f32) + bc1_ref[...]
    cls_vec = jnp.dot(_gelu_tanh(h), wc2_ref[...], preferred_element_type=f32)   # (1, C0)

    p1 = p1_ref[...]
    p2 = p2_ref[...]
    f1 = f1_ref[...]
    f2 = f2_ref[...]
    f3 = f3_ref[...]

    # ---- FP2: f2 <- convs(cat(f2, interp(p2 <- p3, f3)))  (concat done as split matmuls)
    w23 = _three_nn_weights(p2, p3t_ref[...])                     # (N2, N3)
    up2 = jnp.dot(w23, f3, preferred_element_type=f32)            # (N2, C3)
    x2 = (jnp.dot(f2, w2s_ref[...], preferred_element_type=f32)
          + jnp.dot(up2, w2i_ref[...], preferred_element_type=f32)
          + b2a_ref[...])
    f2 = jnp.dot(x2, w2b_ref[...], preferred_element_type=f32) + b2b_ref[...]    # (N2, C2)

    # ---- shared p2 -> p1 interpolation of the UPDATED f2 (used by both FP1 and FP0)
    w12 = _three_nn_weights(p1, p2t_ref[...])                     # (N1, N2)
    up1 = jnp.dot(w12, f2, preferred_element_type=f32)            # (N1, C2)

    # ---- FP1: f1 <- convs(cat(f1, up1))
    x1 = (jnp.dot(f1, w1s_ref[...], preferred_element_type=f32)
          + jnp.dot(up1, w1i_ref[...], preferred_element_type=f32)
          + b1a_ref[...])
    f1 = jnp.dot(x1, w1b_ref[...], preferred_element_type=f32) + b1b_ref[...]    # (N1, C1)

    # ---- FP0: f0 <- convs(cat(f1 + cls, up1))   (cls broadcast over points)
    x0 = (jnp.dot(f1 + cls_vec, w0s_ref[...], preferred_element_type=f32)
          + jnp.dot(up1, w0i_ref[...], preferred_element_type=f32)
          + b0a_ref[...])
    f0 = jnp.dot(x0, w0b_ref[...], preferred_element_type=f32) + b0b_ref[...]    # (N1, C0)

    # write directly in PyTorch NCW layout (deletes the wrapper-side transpose).
    out_ref[...] = jnp.transpose(f0).astype(out_ref.dtype)


# ----------------------------- parameters -----------------------------

def init_params(key, enc_channels=(32, 32, 32, 64), num_classes=16):
    C0, C1, C2, C3 = enc_channels
    keys = iter(jax.random.split(key, 64))

    def conv_w(cin, cout):
        return 0.1 * jax.random.normal(next(keys), (cin, cout), jnp.float32)

    def bn(c, eps=1e-5):
        gamma = 1.0 + 0.1 * jax.random.normal(next(keys), (c,), jnp.float32)
        beta = 0.05 * jax.random.normal(next(keys), (c,), jnp.float32)
        mean = 0.01 * jax.random.normal(next(keys), (c,), jnp.float32)
        var = 1.0 + 0.05 * jnp.abs(jax.random.normal(next(keys), (c,), jnp.float32))
        scale = gamma / jnp.sqrt(var + eps)
        bias = beta - mean * scale
        return scale, bias

    def conv_bn_folded(cin, cout):
        # eval-mode BatchNorm folded into the conv weight; only a bias add remains.
        w = conv_w(cin, cout)
        scale, bias = bn(cout)
        return w * scale[None, :], bias.reshape(1, cout)

    def fp(c_skip, c_int, cout):
        # FeaturePropogation (upsample branch): 2x (conv1x1 + BN), no activation.
        # First weight is pre-split so the kernel avoids the concat.
        wa, ba = conv_bn_folded(c_skip + c_int, cout)
        wb, bb = conv_bn_folded(cout, cout)
        return (wa[:c_skip], wa[c_skip:], ba, wb, bb)

    wc1, bc1 = conv_bn_folded(num_classes, 64)   # Conv1d(16,64,bias=False)+BN (+GELU in kernel)
    wc2 = conv_w(64, C0)                          # Conv1d(64,C0,bias=False), no BN, no act

    return {
        "wc1": wc1, "bc1": bc1, "wc2": wc2,
        # decoder[2]: mlp=[C2+C3,C2,C2]; decoder[1]: [C1+C2,C1,C1]; decoder[0]: [C0+C1,C0,C0]
        "fp2": fp(C2, C3, C2),
        "fp1": fp(C1, C2, C1),
        "fp0": fp(C1, C2, C0),   # skip input is f[1]+cls (C1 == C0 required by the reference)
    }


# ----------------------------- forward wrapper -----------------------------

def denet_part_decoder_forward(p, f, cls_label, params, num_classes=16):
    """p: list of (B,Ni,3); f: list of (B,Ni,Ci) channels-last; cls_label: (B,1) int.

    Returns the decoded feature in PyTorch NCW layout: (B, C0, N1).
    (p[0]/f[0] are accepted for signature fidelity; f[0] is fully overwritten by the
    decoder and the reference requires N0 == N1.)
    """
    B, N1 = p[1].shape[:2]
    N2, C2 = f[2].shape[1:]
    N3, C3 = f[3].shape[1:]
    C1 = f[1].shape[2]
    C0 = params["wc2"].shape[1]

    one_hot = jax.nn.one_hot(cls_label[:, 0], num_classes, dtype=jnp.float32)[:, None, :]  # (B,1,16)
    p2t = jnp.transpose(p[2], (0, 2, 1))   # (B, 3, N2) glue transpose (tiny)
    p3t = jnp.transpose(p[3], (0, 2, 1))   # (B, 3, N3)

    def batch_spec(*shape):
        nd = len(shape)
        return pl.BlockSpec((None,) + shape, lambda b: (b,) + (0,) * nd)

    def shared_spec(arr):
        nd = arr.ndim
        return pl.BlockSpec(arr.shape, lambda b: (0,) * nd)

    weights = (params["wc1"], params["bc1"], params["wc2"],
               *params["fp2"], *params["fp1"], *params["fp0"])

    in_specs = ([batch_spec(1, num_classes),
                 batch_spec(N1, 3), batch_spec(N2, 3),
                 batch_spec(3, N2), batch_spec(3, N3),
                 batch_spec(N1, C1), batch_spec(N2, C2), batch_spec(N3, C3)]
                + [shared_spec(w) for w in weights])

    return pl.pallas_call(
        _decoder_fused_kernel,
        out_shape=jax.ShapeDtypeStruct((B, C0, N1), jnp.float32),
        grid=(B,),
        in_specs=in_specs,
        out_specs=pl.BlockSpec((None, C0, N1), lambda b: (b, 0, 0)),
        compiler_params=pltpu.CompilerParams(dimension_semantics=("parallel",)),
    )(one_hot, p[1], p[2], p2t, p3t, f[1], f[2], f[3], *weights)


# ----------------------------- demo -----------------------------

if __name__ == "__main__":
    key = jax.random.PRNGKey(0)
    k_pts, k_feat, k_cls, k_par = jax.random.split(key, 4)

    B = 2
    C0, C1, C2, C3 = 32, 32, 32, 64
    # N0 == N1 (stride-1 first encoder stage), as required by the reference
    # forward's `f[1] + cls_one_hot`.
    N0, N1, N2, N3 = 64, 64, 16, 8

    pk = jax.random.split(k_pts, 4)
    p = [jax.random.uniform(pk[i], (B, n, 3), jnp.float32)
         for i, n in enumerate((N0, N1, N2, N3))]
    fk = jax.random.split(k_feat, 4)
    f = [jax.random.normal(fk[i], (B, n, c), jnp.float32)
         for i, (n, c) in enumerate(((N0, C0), (N1, C1), (N2, C2), (N3, C3)))]
    cls_label = jax.random.randint(k_cls, (B, 1), 0, 16)

    params = init_params(k_par, (C0, C1, C2, C3))

    out = denet_part_decoder_forward(p, f, cls_label, params)   # (B, C0, N1) PyTorch layout
    jax.block_until_ready(out)
    assert out.shape == (B, C0, N1)
    print("KERNEL_OK")
</pallas_src>

<mosaic_0001>
module attributes {stable_mosaic.version = 11 : i64} {
  func.func @_decoder_fused_kernel(%arg0: i32, %arg1: memref<1x1x16xf32, #tpu.memory_space<vmem>>, %arg2: memref<1x64x3xf32, #tpu.memory_space<vmem>>, %arg3: memref<1x16x3xf32, #tpu.memory_space<vmem>>, %arg4: memref<1x3x16xf32, #tpu.memory_space<vmem>>, %arg5: memref<1x3x8xf32, #tpu.memory_space<vmem>>, %arg6: memref<1x64x32xf32, #tpu.memory_space<vmem>>, %arg7: memref<1x16x32xf32, #tpu.memory_space<vmem>>, %arg8: memref<1x8x64xf32, #tpu.memory_space<vmem>>, %arg9: memref<16x64xf32, #tpu.memory_space<vmem>>, %arg10: memref<1x64xf32, #tpu.memory_space<vmem>>, %arg11: memref<64x32xf32, #tpu.memory_space<vmem>>, %arg12: memref<32x32xf32, #tpu.memory_space<vmem>>, %arg13: memref<64x32xf32, #tpu.memory_space<vmem>>, %arg14: memref<1x32xf32, #tpu.memory_space<vmem>>, %arg15: memref<32x32xf32, #tpu.memory_space<vmem>>, %arg16: memref<1x32xf32, #tpu.memory_space<vmem>>, %arg17: memref<32x32xf32, #tpu.memory_space<vmem>>, %arg18: memref<32x32xf32, #tpu.memory_space<vmem>>, %arg19: memref<1x32xf32, #tpu.memory_space<vmem>>, %arg20: memref<32x32xf32, #tpu.memory_space<vmem>>, %arg21: memref<1x32xf32, #tpu.memory_space<vmem>>, %arg22: memref<32x32xf32, #tpu.memory_space<vmem>>, %arg23: memref<32x32xf32, #tpu.memory_space<vmem>>, %arg24: memref<1x32xf32, #tpu.memory_space<vmem>>, %arg25: memref<32x32xf32, #tpu.memory_space<vmem>>, %arg26: memref<1x32xf32, #tpu.memory_space<vmem>>, %arg27: memref<1x32x64xf32, #tpu.memory_space<vmem>>) attributes {dimension_semantics = [#tpu.dimension_semantics<parallel>], iteration_bounds = array<i64: 2>, scalar_prefetch = 0 : i64, scratch_operands = 0 : i64, tpu.core_type = #tpu.core_type<tc>, window_params = [{transform_indices = @transform_0, window_bounds = array<i64: 1, 1, 16>}, {transform_indices = @transform_1, window_bounds = array<i64: 1, 64, 3>}, {transform_indices = @transform_2, window_bounds = array<i64: 1, 16, 3>}, {transform_indices = @transform_3, window_bounds = array<i64: 1, 3, 16>}, {transform_indices = @transform_4, window_bounds = array<i64: 1, 3, 8>}, {transform_indices = @transform_5, window_bounds = array<i64: 1, 64, 32>}, {transform_indices = @transform_6, window_bounds = array<i64: 1, 16, 32>}, {transform_indices = @transform_7, window_bounds = array<i64: 1, 8, 64>}, {pipeline_mode = #tpu.pipeline_mode<synchronous>, transform_indices = @transform_8, window_bounds = array<i64: 16, 64>}, {pipeline_mode = #tpu.pipeline_mode<synchronous>, transform_indices = @transform_9, window_bounds = array<i64: 1, 64>}, {pipeline_mode = #tpu.pipeline_mode<synchronous>, transform_indices = @transform_10, window_bounds = array<i64: 64, 32>}, {pipeline_mode = #tpu.pipeline_mode<synchronous>, transform_indices = @transform_11, window_bounds = array<i64: 32, 32>}, {pipeline_mode = #tpu.pipeline_mode<synchronous>, transform_indices = @transform_12, window_bounds = array<i64: 64, 32>}, {pipeline_mode = #tpu.pipeline_mode<synchronous>, transform_indices = @transform_13, window_bounds = array<i64: 1, 32>}, {pipeline_mode = #tpu.pipeline_mode<synchronous>, transform_indices = @transform_14, window_bounds = array<i64: 32, 32>}, {pipeline_mode = #tpu.pipeline_mode<synchronous>, transform_indices = @transform_15, window_bounds = array<i64: 1, 32>}, {pipeline_mode = #tpu.pipeline_mode<synchronous>, transform_indices = @transform_16, window_bounds = array<i64: 32, 32>}, {pipeline_mode = #tpu.pipeline_mode<synchronous>, transform_indices = @transform_17, window_bounds = array<i64: 32, 32>}, {pipeline_mode = #tpu.pipeline_mode<synchronous>, transform_indices = @transform_18, window_bounds = array<i64: 1, 32>}, {pipeline_mode = #tpu.pipeline_mode<synchronous>, transform_indices = @transform_19, window_bounds = array<i64: 32, 32>}, {pipeline_mode = #tpu.pipeline_mode<synchronous>, transform_indices = @transform_20, window_bounds = array<i64: 1, 32>}, {pipeline_mode = #tpu.pipeline_mode<synchronous>, transform_indices = @transform_21, window_bounds = array<i64: 32, 32>}, {pipeline_mode = #tpu.pipeline_mode<synchronous>, transform_indices = @transform_22, window_bounds = array<i64: 32, 32>}, {pipeline_mode = #tpu.pipeline_mode<synchronous>, transform_indices = @transform_23, window_bounds = array<i64: 1, 32>}, {pipeline_mode = #tpu.pipeline_mode<synchronous>, transform_indices = @transform_24, window_bounds = array<i64: 32, 32>}, {pipeline_mode = #tpu.pipeline_mode<synchronous>, transform_indices = @transform_25, window_bounds = array<i64: 1, 32>}, {transform_indices = @transform_26, window_bounds = array<i64: 1, 32, 64>}]} {
    %c0 = arith.constant 0 : index
    %c0_0 = arith.constant 0 : index
    %c0_1 = arith.constant 0 : index
    %0 = vector.load %arg1[%c0, %c0_0, %c0_1] : memref<1x1x16xf32, #tpu.memory_space<vmem>>, vector<1x1x16xf32>
    %1 = vector.shape_cast %0 : vector<1x1x16xf32> to vector<1x16xf32>
    %c0_2 = arith.constant 0 : index
    %c0_3 = arith.constant 0 : index
    %2 = vector.load %arg9[%c0_2, %c0_3] : memref<16x64xf32, #tpu.memory_space<vmem>>, vector<16x64xf32>
    %cst = arith.constant dense<0.000000e+00> : vector<1x64xf32>
    %3 = tpu.matmul %1, %2, %cst {dimension_numbers = #tpu.dot_dimension_numbers<[1], [0], [0], [1], [0, 0, 1, 1], [], []>} : vector<1x16xf32>, vector<16x64xf32>, vector<1x64xf32> -> vector<1x64xf32>
    %c0_4 = arith.constant 0 : index
    %c0_5 = arith.constant 0 : index
    %4 = vector.load %arg10[%c0_4, %c0_5] : memref<1x64xf32, #tpu.memory_space<vmem>>, vector<1x64xf32>
    %5 = arith.addf %3, %4 : vector<1x64xf32>
    %cst_6 = arith.constant 5.000000e-01 : f32
    %6 = vector.broadcast %cst_6 : f32 to vector<1x64xf32>
    %7 = arith.mulf %6, %5 : vector<1x64xf32>
    %cst_7 = arith.constant 4.471500e-02 : f32
    %8 = vector.broadcast %cst_7 : f32 to vector<1x64xf32>
    %9 = arith.mulf %8, %5 : vector<1x64xf32>
    %10 = arith.mulf %9, %5 : vector<1x64xf32>
    %11 = arith.mulf %10, %5 : vector<1x64xf32>
    %12 = arith.addf %5, %11 : vector<1x64xf32>
    %cst_8 = arith.constant 0.797884583 : f32
    %13 = vector.broadcast %cst_8 : f32 to vector<1x64xf32>
    %14 = arith.mulf %13, %12 : vector<1x64xf32>
    %15 = math.tanh %14 : vector<1x64xf32>
    %cst_9 = arith.constant 1.000000e+00 : f32
    %16 = vector.broadcast %cst_9 : f32 to vector<1x64xf32>
    %17 = arith.addf %16, %15 : vector<1x64xf32>
    %18 = arith.mulf %7, %17 : vector<1x64xf32>
    %c0_10 = arith.constant 0 : index
    %c0_11 = arith.constant 0 : index
    %19 = vector.load %arg11[%c0_10, %c0_11] : memref<64x32xf32, #tpu.memory_space<vmem>>, vector<64x32xf32>
    %cst_12 = arith.constant dense<0.000000e+00> : vector<1x32xf32>
    %20 = tpu.matmul %18, %19, %cst_12 {dimension_numbers = #tpu.dot_dimension_numbers<[1], [0], [0], [1], [0, 0, 1, 1], [], []>} : vector<1x64xf32>, vector<64x32xf32>, vector<1x32xf32> -> vector<1x32xf32>
    %c0_13 = arith.constant 0 : index
    %c0_14 = arith.constant 0 : index
    %c0_15 = arith.constant 0 : index
    %21 = vector.load %arg2[%c0_13, %c0_14, %c0_15] : memref<1x64x3xf32, #tpu.memory_space<vmem>>, vector<1x64x3xf32>
    %22 = vector.shape_cast %21 : vector<1x64x3xf32> to vector<64x3xf32>
    %c0_16 = arith.constant 0 : index
    %c0_17 = arith.constant 0 : index
    %c0_18 = arith.constant 0 : index
    %23 = vector.load %arg3[%c0_16, %c0_17, %c0_18] : memref<1x16x3xf32, #tpu.memory_space<vmem>>, vector<1x16x3xf32>
    %24 = vector.shape_cast %23 : vector<1x16x3xf32> to vector<16x3xf32>
    %c0_19 = arith.constant 0 : index
    %c0_20 = arith.constant 0 : index
    %c0_21 = arith.constant 0 : index
    %25 = vector.load %arg6[%c0_19, %c0_20, %c0_21] : memref<1x64x32xf32, #tpu.memory_space<vmem>>, vector<1x64x32xf32>
    %26 = vector.shape_cast %25 : vector<1x64x32xf32> to vector<64x32xf32>
    %c0_22 = arith.constant 0 : index
    %c0_23 = arith.constant 0 : index
    %c0_24 = arith.constant 0 : index
    %27 = vector.load %arg7[%c0_22, %c0_23, %c0_24] : memref<1x16x32xf32, #tpu.memory_space<vmem>>, vector<1x16x32xf32>
    %28 = vector.shape_cast %27 : vector<1x16x32xf32> to vector<16x32xf32>
    %c0_25 = arith.constant 0 : index
    %c0_26 = arith.constant 0 : index
    %c0_27 = arith.constant 0 : index
    %29 = vector.load %arg8[%c0_25, %c0_26, %c0_27] : memref<1x8x64xf32, #tpu.memory_space<vmem>>, vector<1x8x64xf32>
    %30 = vector.shape_cast %29 : vector<1x8x64xf32> to vector<8x64xf32>
    %c0_28 = arith.constant 0 : index
    %c0_29 = arith.constant 0 : index
    %c0_30 = arith.constant 0 : index
    %31 = vector.load %arg5[%c0_28, %c0_29, %c0_30] : memref<1x3x8xf32, #tpu.memory_space<vmem>>, vector<1x3x8xf32>
    %32 = vector.shape_cast %31 : vector<1x3x8xf32> to vector<3x8xf32>
    %33 = vector.extract_strided_slice %24 {offsets = [0, 0], sizes = [16, 1], strides = [1, 1]} : vector<16x3xf32> to vector<16x1xf32>
    %34 = vector.extract_strided_slice %24 {offsets = [0, 0], sizes = [16, 1], strides = [1, 1]} : vector<16x3xf32> to vector<16x1xf32>
    %35 = arith.mulf %33, %34 : vector<16x1xf32>
    %36 = vector.extract_strided_slice %24 {offsets = [0, 1], sizes = [16, 1], strides = [1, 1]} : vector<16x3xf32> to vector<16x1xf32>
    %37 = vector.extract_strided_slice %24 {offsets = [0, 1], sizes = [16, 1], strides = [1, 1]} : vector<16x3xf32> to vector<16x1xf32>
    %38 = arith.mulf %36, %37 : vector<16x1xf32>
    %39 = arith.addf %35, %38 : vector<16x1xf32>
    %40 = vector.extract_strided_slice %24 {offsets = [0, 2], sizes = [16, 1], strides = [1, 1]} : vector<16x3xf32> to vector<16x1xf32>
    %41 = vector.extract_strided_slice %24 {offsets = [0, 2], sizes = [16, 1], strides = [1, 1]} : vector<16x3xf32> to vector<16x1xf32>
    %42 = arith.mulf %40, %41 : vector<16x1xf32>
    %43 = arith.addf %39, %42 : vector<16x1xf32>
    %44 = vector.extract_strided_slice %32 {offsets = [0, 0], sizes = [1, 8], strides = [1, 1]} : vector<3x8xf32> to vector<1x8xf32>
    %45 = vector.extract_strided_slice %32 {offsets = [0, 0], sizes = [1, 8], strides = [1, 1]} : vector<3x8xf32> to vector<1x8xf32>
    %46 = arith.mulf %44, %45 : vector<1x8xf32>
    %47 = vector.extract_strided_slice %32 {offsets = [1, 0], sizes = [1, 8], strides = [1, 1]} : vector<3x8xf32> to vector<1x8xf32>
    %48 = vector.extract_strided_slice %32 {offsets = [1, 0], sizes = [1, 8], strides = [1, 1]} : vector<3x8xf32> to vector<1x8xf32>
    %49 = arith.mulf %47, %48 : vector<1x8xf32>
    %50 = arith.addf %46, %49 : vector<1x8xf32>
    %51 = vector.extract_strided_slice %32 {offsets = [2, 0], sizes = [1, 8], strides = [1, 1]} : vector<3x8xf32> to vector<1x8xf32>
    %52 = vector.extract_strided_slice %32 {offsets = [2, 0], sizes = [1, 8], strides = [1, 1]} : vector<3x8xf32> to vector<1x8xf32>
    %53 = arith.mulf %51, %52 : vector<1x8xf32>
    %54 = arith.addf %50, %53 : vector<1x8xf32>
    %55 = vector.broadcast %43 : vector<16x1xf32> to vector<16x8xf32>
    %56 = vector.broadcast %54 : vector<1x8xf32> to vector<16x8xf32>
    %57 = arith.addf %55, %56 : vector<16x8xf32>
    %cst_31 = arith.constant dense<0.000000e+00> : vector<16x8xf32>
    %58 = tpu.matmul %24, %32, %cst_31 {dimension_numbers = #tpu.dot_dimension_numbers<[1], [0], [0], [1], [0, 0, 1, 1], [], []>} : vector<16x3xf32>, vector<3x8xf32>, vector<16x8xf32> -> vector<16x8xf32>
    %cst_32 = arith.constant 2.000000e+00 : f32
    %59 = vector.broadcast %cst_32 : f32 to vector<16x8xf32>
    %60 = arith.mulf %59, %58 : vector<16x8xf32>
    %61 = arith.subf %57, %60 : vector<16x8xf32>
    %cst_33 = arith.constant 0.000000e+00 : f32
    %62 = vector.broadcast %cst_33 : f32 to vector<16x8xf32>
    %63 = arith.maximumf %61, %62 : vector<16x8xf32>
    %cst_34 = arith.constant 9.99999993E-9 : f32
    %64 = vector.broadcast %cst_34 : f32 to vector<16x8xf32>
    %65 = arith.addf %63, %64 : vector<16x8xf32>
    %cst_35 = arith.constant 1.000000e+00 : f32
    %66 = vector.broadcast %cst_35 : f32 to vector<16x8xf32>
    %67 = arith.divf %66, %65 : vector<16x8xf32>
    %68 = tpu.iota {dimensions = array<i32: 1>} : vector<16x8xi32>
    %cst_36 = arith.constant 0.000000e+00 : f32
    %69 = vector.broadcast %cst_36 : f32 to vector<16x8xf32>
    %cst_37 = arith.constant dense<0x7F800000> : vector<16xf32>
    %70 = vector.multi_reduction <minimumf>, %63, %cst_37 [1] : vector<16x8xf32> to vector<16xf32>
    %71 = vector.shape_cast %70 : vector<16xf32> to vector<16x1xf32>
    %72 = vector.broadcast %71 : vector<16x1xf32> to vector<16x8xf32>
    %73 = arith.cmpf ole, %63, %72 : vector<16x8xf32>
    %c8_i32 = arith.constant 8 : i32
    %74 = vector.broadcast %c8_i32 : i32 to vector<16x8xi32>
    %75 = arith.select %73, %68, %74 : vector<16x8xi1>, vector<16x8xi32>
    %cst_38 = arith.constant dense<2147483647> : vector<16xi32>
    %76 = vector.multi_reduction <minsi>, %75, %cst_38 [1] : vector<16x8xi32> to vector<16xi32>
    %77 = vector.shape_cast %76 : vector<16xi32> to vector<16x1xi32>
    %78 = vector.broadcast %77 : vector<16x1xi32> to vector<16x8xi32>
    %79 = arith.cmpi eq, %68, %78 : vector<16x8xi32>
    %80 = arith.select %79, %67, %69 : vector<16x8xi1>, vector<16x8xf32>
    %cst_39 = arith.constant 0x7F800000 : f32
    %81 = vector.broadcast %cst_39 : f32 to vector<16x8xf32>
    %82 = arith.select %79, %81, %63 : vector<16x8xi1>, vector<16x8xf32>
    %cst_40 = arith.constant dense<0x7F800000> : vector<16xf32>
    %83 = vector.multi_reduction <minimumf>, %82, %cst_40 [1] : vector<16x8xf32> to vector<16xf32>
    %84 = vector.shape_cast %83 : vector<16xf32> to vector<16x1xf32>
    %85 = vector.broadcast %84 : vector<16x1xf32> to vector<16x8xf32>
    %86 = arith.cmpf ole, %82, %85 : vector<16x8xf32>
    %c8_i32_41 = arith.constant 8 : i32
    %87 = vector.broadcast %c8_i32_41 : i32 to vector<16x8xi32>
    %88 = arith.select %86, %68, %87 : vector<16x8xi1>, vector<16x8xi32>
    %cst_42 = arith.constant dense<2147483647> : vector<16xi32>
    %89 = vector.multi_reduction <minsi>, %88, %cst_42 [1] : vector<16x8xi32> to vector<16xi32>
    %90 = vector.shape_cast %89 : vector<16xi32> to vector<16x1xi32>
    %91 = vector.broadcast %90 : vector<16x1xi32> to vector<16x8xi32>
    %92 = arith.cmpi eq, %68, %91 : vector<16x8xi32>
    %93 = arith.select %92, %67, %80 : vector<16x8xi1>, vector<16x8xf32>
    %cst_43 = arith.constant 0x7F800000 : f32
    %94 = vector.broadcast %cst_43 : f32 to vector<16x8xf32>
    %95 = arith.select %92, %94, %82 : vector<16x8xi1>, vector<16x8xf32>
    %cst_44 = arith.constant dense<0x7F800000> : vector<16xf32>
    %96 = vector.multi_reduction <minimumf>, %95, %cst_44 [1] : vector<16x8xf32> to vector<16xf32>
    %97 = vector.shape_cast %96 : vector<16xf32> to vector<16x1xf32>
    %98 = vector.broadcast %97 : vector<16x1xf32> to vector<16x8xf32>
    %99 = arith.cmpf ole, %95, %98 : vector<16x8xf32>
    %c8_i32_45 = arith.constant 8 : i32
    %100 = vector.broadcast %c8_i32_45 : i32 to vector<16x8xi32>
    %101 = arith.select %99, %68, %100 : vector<16x8xi1>, vector<16x8xi32>
    %cst_46 = arith.constant dense<2147483647> : vector<16xi32>
    %102 = vector.multi_reduction <minsi>, %101, %cst_46 [1] : vector<16x8xi32> to vector<16xi32>
    %103 = vector.shape_cast %102 : vector<16xi32> to vector<16x1xi32>
    %104 = vector.broadcast %103 : vector<16x1xi32> to vector<16x8xi32>
    %105 = arith.cmpi eq, %68, %104 : vector<16x8xi32>
    %106 = arith.select %105, %67, %93 : vector<16x8xi1>, vector<16x8xf32>
    %cst_47 = arith.constant dense<0.000000e+00> : vector<16xf32>
    %107 = vector.multi_reduction <add>, %106, %cst_47 [1] : vector<16x8xf32> to vector<16xf32>
    %108 = vector.shape_cast %107 : vector<16xf32> to vector<16x1xf32>
    %109 = vector.broadcast %108 : vector<16x1xf32> to vector<16x8xf32>
    %110 = arith.divf %106, %109 : vector<16x8xf32>
    %cst_48 = arith.constant dense<0.000000e+00> : vector<16x64xf32>
    %111 = tpu.matmul %110, %30, %cst_48 {dimension_numbers = #tpu.dot_dimension_numbers<[1], [0], [0], [1], [0, 0, 1, 1], [], []>} : vector<16x8xf32>, vector<8x64xf32>, vector<16x64xf32> -> vector<16x64xf32>
    %c0_49 = arith.constant 0 : index
    %c0_50 = arith.constant 0 : index
    %112 = vector.load %arg12[%c0_49, %c0_50] : memref<32x32xf32, #tpu.memory_space<vmem>>, vector<32x32xf32>
    %cst_51 = arith.constant dense<0.000000e+00> : vector<16x32xf32>
    %113 = tpu.matmul %28, %112, %cst_51 {dimension_numbers = #tpu.dot_dimension_numbers<[1], [0], [0], [1], [0, 0, 1, 1], [], []>} : vector<16x32xf32>, vector<32x32xf32>, vector<16x32xf32> -> vector<16x32xf32>
    %c0_52 = arith.constant 0 : index
    %c0_53 = arith.constant 0 : index
    %114 = vector.load %arg13[%c0_52, %c0_53] : memref<64x32xf32, #tpu.memory_space<vmem>>, vector<64x32xf32>
    %cst_54 = arith.constant dense<0.000000e+00> : vector<16x32xf32>
    %115 = tpu.matmul %111, %114, %cst_54 {dimension_numbers = #tpu.dot_dimension_numbers<[1], [0], [0], [1], [0, 0, 1, 1], [], []>} : vector<16x64xf32>, vector<64x32xf32>, vector<16x32xf32> -> vector<16x32xf32>
    %116 = arith.addf %113, %115 : vector<16x32xf32>
    %c0_55 = arith.constant 0 : index
    %c0_56 = arith.constant 0 : index
    %117 = vector.load %arg14[%c0_55, %c0_56] : memref<1x32xf32, #tpu.memory_space<vmem>>, vector<1x32xf32>
    %118 = vector.broadcast %117 : vector<1x32xf32> to vector<16x32xf32>
    %119 = arith.addf %116, %118 : vector<16x32xf32>
    %c0_57 = arith.constant 0 : index
    %c0_58 = arith.constant 0 : index
    %120 = vector.load %arg15[%c0_57, %c0_58] : memref<32x32xf32, #tpu.memory_space<vmem>>, vector<32x32xf32>
    %cst_59 = arith.constant dense<0.000000e+00> : vector<16x32xf32>
    %121 = tpu.matmul %119, %120, %cst_59 {dimension_numbers = #tpu.dot_dimension_numbers<[1], [0], [0], [1], [0, 0, 1, 1], [], []>} : vector<16x32xf32>, vector<32x32xf32>, vector<16x32xf32> -> vector<16x32xf32>
    %c0_60 = arith.constant 0 : index
    %c0_61 = arith.constant 0 : index
    %122 = vector.load %arg16[%c0_60, %c0_61] : memref<1x32xf32, #tpu.memory_space<vmem>>, vector<1x32xf32>
    %123 = vector.broadcast %122 : vector<1x32xf32> to vector<16x32xf32>
    %124 = arith.addf %121, %123 : vector<16x32xf32>
    %c0_62 = arith.constant 0 : index
    %c0_63 = arith.constant 0 : index
    %c0_64 = arith.constant 0 : index
    %125 = vector.load %arg4[%c0_62, %c0_63, %c0_64] : memref<1x3x16xf32, #tpu.memory_space<vmem>>, vector<1x3x16xf32>
    %126 = vector.shape_cast %125 : vector<1x3x16xf32> to vector<3x16xf32>
    %127 = vector.extract_strided_slice %22 {offsets = [0, 0], sizes = [64, 1], strides = [1, 1]} : vector<64x3xf32> to vector<64x1xf32>
    %128 = vector.extract_strided_slice %22 {offsets = [0, 0], sizes = [64, 1], strides = [1, 1]} : vector<64x3xf32> to vector<64x1xf32>
    %129 = arith.mulf %127, %128 : vector<64x1xf32>
    %130 = vector.extract_strided_slice %22 {offsets = [0, 1], sizes = [64, 1], strides = [1, 1]} : vector<64x3xf32> to vector<64x1xf32>
    %131 = vector.extract_strided_slice %22 {offsets = [0, 1], sizes = [64, 1], strides = [1, 1]} : vector<64x3xf32> to vector<64x1xf32>
    %132 = arith.mulf %130, %131 : vector<64x1xf32>
    %133 = arith.addf %129, %132 : vector<64x1xf32>
    %134 = vector.extract_strided_slice %22 {offsets = [0, 2], sizes = [64, 1], strides = [1, 1]} : vector<64x3xf32> to vector<64x1xf32>
    %135 = vector.extract_strided_slice %22 {offsets = [0, 2], sizes = [64, 1], strides = [1, 1]} : vector<64x3xf32> to vector<64x1xf32>
    %136 = arith.mulf %134, %135 : vector<64x1xf32>
    %137 = arith.addf %133, %136 : vector<64x1xf32>
    %138 = vector.extract_strided_slice %126 {offsets = [0, 0], sizes = [1, 16], strides = [1, 1]} : vector<3x16xf32> to vector<1x16xf32>
    %139 = vector.extract_strided_slice %126 {offsets = [0, 0], sizes = [1, 16], strides = [1, 1]} : vector<3x16xf32> to vector<1x16xf32>
    %140 = arith.mulf %138, %139 : vector<1x16xf32>
    %141 = vector.extract_strided_slice %126 {offsets = [1, 0], sizes = [1, 16], strides = [1, 1]} : vector<3x16xf32> to vector<1x16xf32>
    %142 = vector.extract_strided_slice %126 {offsets = [1, 0], sizes = [1, 16], strides = [1, 1]} : vector<3x16xf32> to vector<1x16xf32>
    %143 = arith.mulf %141, %142 : vector<1x16xf32>
    %144 = arith.addf %140, %143 : vector<1x16xf32>
    %145 = vector.extract_strided_slice %126 {offsets = [2, 0], sizes = [1, 16], strides = [1, 1]} : vector<3x16xf32> to vector<1x16xf32>
    %146 = vector.extract_strided_slice %126 {offsets = [2, 0], sizes = [1, 16], strides = [1, 1]} : vector<3x16xf32> to vector<1x16xf32>
    %147 = arith.mulf %145, %146 : vector<1x16xf32>
    %148 = arith.addf %144, %147 : vector<1x16xf32>
    %149 = vector.broadcast %137 : vector<64x1xf32> to vector<64x16xf32>
    %150 = vector.broadcast %148 : vector<1x16xf32> to vector<64x16xf32>
    %151 = arith.addf %149, %150 : vector<64x16xf32>
    %cst_65 = arith.constant dense<0.000000e+00> : vector<64x16xf32>
    %152 = tpu.matmul %22, %126, %cst_65 {dimension_numbers = #tpu.dot_dimension_numbers<[1], [0], [0], [1], [0, 0, 1, 1], [], []>} : vector<64x3xf32>, vector<3x16xf32>, vector<64x16xf32> -> vector<64x16xf32>
    %cst_66 = arith.constant 2.000000e+00 : f32
    %153 = vector.broadcast %cst_66 : f32 to vector<64x16xf32>
    %154 = arith.mulf %153, %152 : vector<64x16xf32>
    %155 = arith.subf %151, %154 : vector<64x16xf32>
    %cst_67 = arith.constant 0.000000e+00 : f32
    %156 = vector.broadcast %cst_67 : f32 to vector<64x16xf32>
    %157 = arith.maximumf %155, %156 : vector<64x16xf32>
    %cst_68 = arith.constant 9.99999993E-9 : f32
    %158 = vector.broadcast %cst_68 : f32 to vector<64x16xf32>
    %159 = arith.addf %157, %158 : vector<64x16xf32>
    %cst_69 = arith.constant 1.000000e+00 : f32
    %160 = vector.broadcast %cst_69 : f32 to vector<64x16xf32>
    %161 = arith.divf %160, %159 : vector<64x16xf32>
    %162 = tpu.iota {dimensions = array<i32: 1>} : vector<64x16xi32>
    %cst_70 = arith.constant 0.000000e+00 : f32
    %163 = vector.broadcast %cst_70 : f32 to vector<64x16xf32>
    %cst_71 = arith.constant dense<0x7F800000> : vector<64xf32>
    %164 = vector.multi_reduction <minimumf>, %157, %cst_71 [1] : vector<64x16xf32> to vector<64xf32>
    %165 = vector.shape_cast %164 : vector<64xf32> to vector<64x1xf32>
    %166 = vector.broadcast %165 : vector<64x1xf32> to vector<64x16xf32>
    %167 = arith.cmpf ole, %157, %166 : vector<64x16xf32>
    %c16_i32 = arith.constant 16 : i32
    %168 = vector.broadcast %c16_i32 : i32 to vector<64x16xi32>
    %169 = arith.select %167, %162, %168 : vector<64x16xi1>, vector<64x16xi32>
    %cst_72 = arith.constant dense<2147483647> : vector<64xi32>
    %170 = vector.multi_reduction <minsi>, %169, %cst_72 [1] : vector<64x16xi32> to vector<64xi32>
    %171 = vector.shape_cast %170 : vector<64xi32> to vector<64x1xi32>
    %172 = vector.broadcast %171 : vector<64x1xi32> to vector<64x16xi32>
    %173 = arith.cmpi eq, %162, %172 : vector<64x16xi32>
    %174 = arith.select %173, %161, %163 : vector<64x16xi1>, vector<64x16xf32>
    %cst_73 = arith.constant 0x7F800000 : f32
    %175 = vector.broadcast %cst_73 : f32 to vector<64x16xf32>
    %176 = arith.select %173, %175, %157 : vector<64x16xi1>, vector<64x16xf32>
    %cst_74 = arith.constant dense<0x7F800000> : vector<64xf32>
    %177 = vector.multi_reduction <minimumf>, %176, %cst_74 [1] : vector<64x16xf32> to vector<64xf32>
    %178 = vector.shape_cast %177 : vector<64xf32> to vector<64x1xf32>
    %179 = vector.broadcast %178 : vector<64x1xf32> to vector<64x16xf32>
    %180 = arith.cmpf ole, %176, %179 : vector<64x16xf32>
    %c16_i32_75 = arith.constant 16 : i32
    %181 = vector.broadcast %c16_i32_75 : i32 to vector<64x16xi32>
    %182 = arith.select %180, %162, %181 : vector<64x16xi1>, vector<64x16xi32>
    %cst_76 = arith.constant dense<2147483647> : vector<64xi32>
    %183 = vector.multi_reduction <minsi>, %182, %cst_76 [1] : vector<64x16xi32> to vector<64xi32>
    %184 = vector.shape_cast %183 : vector<64xi32> to vector<64x1xi32>
    %185 = vector.broadcast %184 : vector<64x1xi32> to vector<64x16xi32>
    %186 = arith.cmpi eq, %162, %185 : vector<64x16xi32>
    %187 = arith.select %186, %161, %174 : vector<64x16xi1>, vector<64x16xf32>
    %cst_77 = arith.constant 0x7F800000 : f32
    %188 = vector.broadcast %cst_77 : f32 to vector<64x16xf32>
    %189 = arith.select %186, %188, %176 : vector<64x16xi1>, vector<64x16xf32>
    %cst_78 = arith.constant dense<0x7F800000> : vector<64xf32>
    %190 = vector.multi_reduction <minimumf>, %189, %cst_78 [1] : vector<64x16xf32> to vector<64xf32>
    %191 = vector.shape_cast %190 : vector<64xf32> to vector<64x1xf32>
    %192 = vector.broadcast %191 : vector<64x1xf32> to vector<64x16xf32>
    %193 = arith.cmpf ole, %189, %192 : vector<64x16xf32>
    %c16_i32_79 = arith.constant 16 : i32
    %194 = vector.broadcast %c16_i32_79 : i32 to vector<64x16xi32>
    %195 = arith.select %193, %162, %194 : vector<64x16xi1>, vector<64x16xi32>
    %cst_80 = arith.constant dense<2147483647> : vector<64xi32>
    %196 = vector.multi_reduction <minsi>, %195, %cst_80 [1] : vector<64x16xi32> to vector<64xi32>
    %197 = vector.shape_cast %196 : vector<64xi32> to vector<64x1xi32>
    %198 = vector.broadcast %197 : vector<64x1xi32> to vector<64x16xi32>
    %199 = arith.cmpi eq, %162, %198 : vector<64x16xi32>
    %200 = arith.select %199, %161, %187 : vector<64x16xi1>, vector<64x16xf32>
    %cst_81 = arith.constant dense<0.000000e+00> : vector<64xf32>
    %201 = vector.multi_reduction <add>, %200, %cst_81 [1] : vector<64x16xf32> to vector<64xf32>
    %202 = vector.shape_cast %201 : vector<64xf32> to vector<64x1xf32>
    %203 = vector.broadcast %202 : vector<64x1xf32> to vector<64x16xf32>
    %204 = arith.divf %200, %203 : vector<64x16xf32>
    %cst_82 = arith.constant dense<0.000000e+00> : vector<64x32xf32>
    %205 = tpu.matmul %204, %124, %cst_82 {dimension_numbers = #tpu.dot_dimension_numbers<[1], [0], [0], [1], [0, 0, 1, 1], [], []>} : vector<64x16xf32>, vector<16x32xf32>, vector<64x32xf32> -> vector<64x32xf32>
    %c0_83 = arith.constant 0 : index
    %c0_84 = arith.constant 0 : index
    %206 = vector.load %arg17[%c0_83, %c0_84] : memref<32x32xf32, #tpu.memory_space<vmem>>, vector<32x32xf32>
    %cst_85 = arith.constant dense<0.000000e+00> : vector<64x32xf32>
    %207 = tpu.matmul %26, %206, %cst_85 {dimension_numbers = #tpu.dot_dimension_numbers<[1], [0], [0], [1], [0, 0, 1, 1], [], []>} : vector<64x32xf32>, vector<32x32xf32>, vector<64x32xf32> -> vector<64x32xf32>
    %c0_86 = arith.constant 0 : index
    %c0_87 = arith.constant 0 : index
    %208 = vector.load %arg18[%c0_86, %c0_87] : memref<32x32xf32, #tpu.memory_space<vmem>>, vector<32x32xf32>
    %cst_88 = arith.constant dense<0.000000e+00> : vector<64x32xf32>
    %209 = tpu.matmul %205, %208, %cst_88 {dimension_numbers = #tpu.dot_dimension_numbers<[1], [0], [0], [1], [0, 0, 1, 1], [], []>} : vector<64x32xf32>, vector<32x32xf32>, vector<64x32xf32> -> vector<64x32xf32>
    %210 = arith.addf %207, %209 : vector<64x32xf32>
    %c0_89 = arith.constant 0 : index
    %c0_90 = arith.constant 0 : index
    %211 = vector.load %arg19[%c0_89, %c0_90] : memref<1x32xf32, #tpu.memory_space<vmem>>, vector<1x32xf32>
    %212 = vector.broadcast %211 : vector<1x32xf32> to vector<64x32xf32>
    %213 = arith.addf %210, %212 : vector<64x32xf32>
    %c0_91 = arith.constant 0 : index
    %c0_92 = arith.constant 0 : index
    %214 = vector.load %arg20[%c0_91, %c0_92] : memref<32x32xf32, #tpu.memory_space<vmem>>, vector<32x32xf32>
    %cst_93 = arith.constant dense<0.000000e+00> : vector<64x32xf32>
    %215 = tpu.matmul %213, %214, %cst_93 {dimension_numbers = #tpu.dot_dimension_numbers<[1], [0], [0], [1], [0, 0, 1, 1], [], []>} : vector<64x32xf32>, vector<32x32xf32>, vector<64x32xf32> -> vector<64x32xf32>
    %c0_94 = arith.constant 0 : index
    %c0_95 = arith.constant 0 : index
    %216 = vector.load %arg21[%c0_94, %c0_95] : memref<1x32xf32, #tpu.memory_space<vmem>>, vector<1x32xf32>
    %217 = vector.broadcast %216 : vector<1x32xf32> to vector<64x32xf32>
    %218 = arith.addf %215, %217 : vector<64x32xf32>
    %219 = vector.broadcast %20 : vector<1x32xf32> to vector<64x32xf32>
    %220 = arith.addf %218, %219 : vector<64x32xf32>
    %c0_96 = arith.constant 0 : index
    %c0_97 = arith.constant 0 : index
    %221 = vector.load %arg22[%c0_96, %c0_97] : memref<32x32xf32, #tpu.memory_space<vmem>>, vector<32x32xf32>
    %cst_98 = arith.constant dense<0.000000e+00> : vector<64x32xf32>
    %222 = tpu.matmul %220, %221, %cst_98 {dimension_numbers = #tpu.dot_dimension_numbers<[1], [0], [0], [1], [0, 0, 1, 1], [], []>} : vector<64x32xf32>, vector<32x32xf32>, vector<64x32xf32> -> vector<64x32xf32>
    %c0_99 = arith.constant 0 : index
    %c0_100 = arith.constant 0 : index
    %223 = vector.load %arg23[%c0_99, %c0_100] : memref<32x32xf32, #tpu.memory_space<vmem>>, vector<32x32xf32>
    %cst_101 = arith.constant dense<0.000000e+00> : vector<64x32xf32>
    %224 = tpu.matmul %205, %223, %cst_101 {dimension_numbers = #tpu.dot_dimension_numbers<[1], [0], [0], [1], [0, 0, 1, 1], [], []>} : vector<64x32xf32>, vector<32x32xf32>, vector<64x32xf32> -> vector<64x32xf32>
    %225 = arith.addf %222, %224 : vector<64x32xf32>
    %c0_102 = arith.constant 0 : index
    %c0_103 = arith.constant 0 : index
    %226 = vector.load %arg24[%c0_102, %c0_103] : memref<1x32xf32, #tpu.memory_space<vmem>>, vector<1x32xf32>
    %227 = vector.broadcast %226 : vector<1x32xf32> to vector<64x32xf32>
    %228 = arith.addf %225, %227 : vector<64x32xf32>
    %c0_104 = arith.constant 0 : index
    %c0_105 = arith.constant 0 : index
    %229 = vector.load %arg25[%c0_104, %c0_105] : memref<32x32xf32, #tpu.memory_space<vmem>>, vector<32x32xf32>
    %cst_106 = arith.constant dense<0.000000e+00> : vector<64x32xf32>
    %230 = tpu.matmul %228, %229, %cst_106 {dimension_numbers = #tpu.dot_dimension_numbers<[1], [0], [0], [1], [0, 0, 1, 1], [], []>} : vector<64x32xf32>, vector<32x32xf32>, vector<64x32xf32> -> vector<64x32xf32>
    %c0_107 = arith.constant 0 : index
    %c0_108 = arith.constant 0 : index
    %231 = vector.load %arg26[%c0_107, %c0_108] : memref<1x32xf32, #tpu.memory_space<vmem>>, vector<1x32xf32>
    %232 = vector.broadcast %231 : vector<1x32xf32> to vector<64x32xf32>
    %233 = arith.addf %230, %232 : vector<64x32xf32>
    %234 = tpu.transpose %233, [1, 0] : vector<64x32xf32> -> vector<32x64xf32>
    %c0_109 = arith.constant 0 : index
    %c0_110 = arith.constant 0 : index
    %c0_111 = arith.constant 0 : index
    %235 = vector.load %arg27[%c0_109, %c0_110, %c0_111] : memref<1x32x64xf32, #tpu.memory_space<vmem>>, vector<1x32x64xf32>
    %236 = vector.shape_cast %235 : vector<1x32x64xf32> to vector<32x64xf32>
    %237 = vector.shape_cast %234 : vector<32x64xf32> to vector<1x32x64xf32>
    tpu.vector_store %arg27[%c0_109, %c0_110, %c0_111], %237 {strides = array<i32>} : memref<1x32x64xf32, #tpu.memory_space<vmem>>, vector<1x32x64xf32>,
    return
  }
  func.func @transform_0(%arg0: i32) -> (i32, i32, i32) {
    %c0_i32 = arith.constant 0 : i32
    %c0_i32_0 = arith.constant 0 : i32
    %c0_i32_1 = arith.constant 0 : i32
    return %arg0, %c0_i32, %c0_i32_0 : i32, i32, i32
  }
  func.func @transform_1(%arg0: i32) -> (i32, i32, i32) {
    %c0_i32 = arith.constant 0 : i32
    %c0_i32_0 = arith.constant 0 : i32
    %c0_i32_1 = arith.constant 0 : i32
    return %arg0, %c0_i32, %c0_i32_0 : i32, i32, i32
  }
  func.func @transform_2(%arg0: i32) -> (i32, i32, i32) {
    %c0_i32 = arith.constant 0 : i32
    %c0_i32_0 = arith.constant 0 : i32
    %c0_i32_1 = arith.constant 0 : i32
    return %arg0, %c0_i32, %c0_i32_0 : i32, i32, i32
  }
  func.func @transform_3(%arg0: i32) -> (i32, i32, i32) {
    %c0_i32 = arith.constant 0 : i32
    %c0_i32_0 = arith.constant 0 : i32
    %c0_i32_1 = arith.constant 0 : i32
    return %arg0, %c0_i32, %c0_i32_0 : i32, i32, i32
  }
  func.func @transform_4(%arg0: i32) -> (i32, i32, i32) {
    %c0_i32 = arith.constant 0 : i32
    %c0_i32_0 = arith.constant 0 : i32
    %c0_i32_1 = arith.constant 0 : i32
    return %arg0, %c0_i32, %c0_i32_0 : i32, i32, i32
  }
  func.func @transform_5(%arg0: i32) -> (i32, i32, i32) {
    %c0_i32 = arith.constant 0 : i32
    %c0_i32_0 = arith.constant 0 : i32
    %c0_i32_1 = arith.constant 0 : i32
    return %arg0, %c0_i32, %c0_i32_0 : i32, i32, i32
  }
  func.func @transform_6(%arg0: i32) -> (i32, i32, i32) {
    %c0_i32 = arith.constant 0 : i32
    %c0_i32_0 = arith.constant 0 : i32
    %c0_i32_1 = arith.constant 0 : i32
    return %arg0, %c0_i32, %c0_i32_0 : i32, i32, i32
  }
  func.func @transform_7(%arg0: i32) -> (i32, i32, i32) {
    %c0_i32 = arith.constant 0 : i32
    %c0_i32_0 = arith.constant 0 : i32
    %c0_i32_1 = arith.constant 0 : i32
    return %arg0, %c0_i32, %c0_i32_0 : i32, i32, i32
  }
  func.func @transform_8(%arg0: i32) -> (i32, i32) {
    %c0_i32 = arith.constant 0 : i32
    %c0_i32_0 = arith.constant 0 : i32
    %c0_i32_1 = arith.constant 0 : i32
    return %c0_i32, %c0_i32_0 : i32, i32
  }
  func.func @transform_9(%arg0: i32) -> (i32, i32) {
    %c0_i32 = arith.constant 0 : i32
    %c0_i32_0 = arith.constant 0 : i32
    %c0_i32_1 = arith.constant 0 : i32
    return %c0_i32, %c0_i32_0 : i32, i32
  }
  func.func @transform_10(%arg0: i32) -> (i32, i32) {
    %c0_i32 = arith.constant 0 : i32
    %c0_i32_0 = arith.constant 0 : i32
    %c0_i32_1 = arith.constant 0 : i32
    return %c0_i32, %c0_i32_0 : i32, i32
  }
  func.func @transform_11(%arg0: i32) -> (i32, i32) {
    %c0_i32 = arith.constant 0 : i32
    %c0_i32_0 = arith.constant 0 : i32
    %c0_i32_1 = arith.constant 0 : i32
    return %c0_i32, %c0_i32_0 : i32, i32
  }
  func.func @transform_12(%arg0: i32) -> (i32, i32) {
    %c0_i32 = arith.constant 0 : i32
    %c0_i32_0 = arith.constant 0 : i32
    %c0_i32_1 = arith.constant 0 : i32
    return %c0_i32, %c0_i32_0 : i32, i32
  }
  func.func @transform_13(%arg0: i32) -> (i32, i32) {
    %c0_i32 = arith.constant 0 : i32
    %c0_i32_0 = arith.constant 0 : i32
    %c0_i32_1 = arith.constant 0 : i32
    return %c0_i32, %c0_i32_0 : i32, i32
  }
  func.func @transform_14(%arg0: i32) -> (i32, i32) {
    %c0_i32 = arith.constant 0 : i32
    %c0_i32_0 = arith.constant 0 : i32
    %c0_i32_1 = arith.constant 0 : i32
    return %c0_i32, %c0_i32_0 : i32, i32
  }
  func.func @transform_15(%arg0: i32) -> (i32, i32) {
    %c0_i32 = arith.constant 0 : i32
    %c0_i32_0 = arith.constant 0 : i32
    %c0_i32_1 = arith.constant 0 : i32
    return %c0_i32, %c0_i32_0 : i32, i32
  }
  func.func @transform_16(%arg0: i32) -> (i32, i32) {
    %c0_i32 = arith.constant 0 : i32
    %c0_i32_0 = arith.constant 0 : i32
    %c0_i32_1 = arith.constant 0 : i32
    return %c0_i32, %c0_i32_0 : i32, i32
  }
  func.func @transform_17(%arg0: i32) -> (i32, i32) {
    %c0_i32 = arith.constant 0 : i32
    %c0_i32_0 = arith.constant 0 : i32
    %c0_i32_1 = arith.constant 0 : i32
    return %c0_i32, %c0_i32_0 : i32, i32
  }
  func.func @transform_18(%arg0: i32) -> (i32, i32) {
    %c0_i32 = arith.constant 0 : i32
    %c0_i32_0 = arith.constant 0 : i32
    %c0_i32_1 = arith.constant 0 : i32
    return %c0_i32, %c0_i32_0 : i32, i32
  }
  func.func @transform_19(%arg0: i32) -> (i32, i32) {
    %c0_i32 = arith.constant 0 : i32
    %c0_i32_0 = arith.constant 0 : i32
    %c0_i32_1 = arith.constant 0 : i32
    return %c0_i32, %c0_i32_0 : i32, i32
  }
  func.func @transform_20(%arg0: i32) -> (i32, i32) {
    %c0_i32 = arith.constant 0 : i32
    %c0_i32_0 = arith.constant 0 : i32
    %c0_i32_1 = arith.constant 0 : i32
    return %c0_i32, %c0_i32_0 : i32, i32
  }
  func.func @transform_21(%arg0: i32) -> (i32, i32) {
    %c0_i32 = arith.constant 0 : i32
    %c0_i32_0 = arith.constant 0 : i32
    %c0_i32_1 = arith.constant 0 : i32
    return %c0_i32, %c0_i32_0 : i32, i32
  }
  func.func @transform_22(%arg0: i32) -> (i32, i32) {
    %c0_i32 = arith.constant 0 : i32
    %c0_i32_0 = arith.constant 0 : i32
    %c0_i32_1 = arith.constant 0 : i32
    return %c0_i32, %c0_i32_0 : i32, i32
  }
  func.func @transform_23(%arg0: i32) -> (i32, i32) {
    %c0_i32 = arith.constant 0 : i32
    %c0_i32_0 = arith.constant 0 : i32
    %c0_i32_1 = arith.constant 0 : i32
    return %c0_i32, %c0_i32_0 : i32, i32
  }
  func.func @transform_24(%arg0: i32) -> (i32, i32) {
    %c0_i32 = arith.constant 0 : i32
    %c0_i32_0 = arith.constant 0 : i32
    %c0_i32_1 = arith.constant 0 : i32
    return %c0_i32, %c0_i32_0 : i32, i32
  }
  func.func @transform_25(%arg0: i32) -> (i32, i32) {
    %c0_i32 = arith.constant 0 : i32
    %c0_i32_0 = arith.constant 0 : i32
    %c0_i32_1 = arith.constant 0 : i32
    return %c0_i32, %c0_i32_0 : i32, i32
  }
  func.func @transform_26(%arg0: i32) -> (i32, i32, i32) {
    %c0_i32 = arith.constant 0 : i32
    %c0_i32_0 = arith.constant 0 : i32
    %c0_i32_1 = arith.constant 0 : i32
    return %arg0, %c0_i32, %c0_i32_0 : i32, i32, i32
  }
}

</mosaic_0001>

<llo_original>
// kernel: tpu_custom_call.1
$region0: #{tpu_custom_call.1}
  #allocation0 [shape = 'u32[]', space=smem, size = 0x4, offset = 0x4, fixed_abs, tag = 'smem constant byte address 0x4 - core index']
  #allocation1 [shape = 'u32[144,128]{1,0:T(1,128)}', space=vmem, size = 0x12000, scoped, tag = 'internal scratch']
  %s0 = inlined_call_operand.vmem [shape: f32[2,1,16], index: 0, kind: input, shape index: {}]
  %s1 = inlined_call_operand.vmem [shape: f32[2,64,3], index: 1, kind: input, shape index: {}]
  %s2 = inlined_call_operand.vmem [shape: f32[2,16,3], index: 2, kind: input, shape index: {}]
  %s3 = inlined_call_operand.vmem [shape: f32[2,3,16], index: 3, kind: input, shape index: {}]
  %s4 = inlined_call_operand.vmem [shape: f32[2,3,8], index: 4, kind: input, shape index: {}]
  %s5 = inlined_call_operand.vmem [shape: f32[2,64,32], index: 5, kind: input, shape index: {}]
  %s6 = inlined_call_operand.vmem [shape: f32[2,16,32], index: 6, kind: input, shape index: {}]
  %s7 = inlined_call_operand.vmem [shape: f32[2,8,64], index: 7, kind: input, shape index: {}]
  %s8 = inlined_call_operand.vmem [shape: f32[16,64], index: 8, kind: input, shape index: {}]
  %s9 = inlined_call_operand.vmem [shape: f32[1,64], index: 9, kind: input, shape index: {}]
  %s10 = inlined_call_operand.vmem [shape: f32[64,32], index: 10, kind: input, shape index: {}]
  %s11 = inlined_call_operand.vmem [shape: f32[32,32], index: 11, kind: input, shape index: {}]
  %s12 = inlined_call_operand.vmem [shape: f32[64,32], index: 12, kind: input, shape index: {}]
  %s13 = inlined_call_operand.vmem [shape: f32[1,32], index: 13, kind: input, shape index: {}]
  %s14 = inlined_call_operand.vmem [shape: f32[32,32], index: 14, kind: input, shape index: {}]
  %s15 = inlined_call_operand.vmem [shape: f32[1,32], index: 15, kind: input, shape index: {}]
  %s16 = inlined_call_operand.vmem [shape: f32[32,32], index: 16, kind: input, shape index: {}]
  %s17 = inlined_call_operand.vmem [shape: f32[32,32], index: 17, kind: input, shape index: {}]
  %s18 = inlined_call_operand.vmem [shape: f32[1,32], index: 18, kind: input, shape index: {}]
  %s19 = inlined_call_operand.vmem [shape: f32[32,32], index: 19, kind: input, shape index: {}]
  %s20 = inlined_call_operand.vmem [shape: f32[1,32], index: 20, kind: input, shape index: {}]
  %s21 = inlined_call_operand.vmem [shape: f32[32,32], index: 21, kind: input, shape index: {}]
  %s22 = inlined_call_operand.vmem [shape: f32[32,32], index: 22, kind: input, shape index: {}]
  %s23 = inlined_call_operand.vmem [shape: f32[1,32], index: 23, kind: input, shape index: {}]
  %s24 = inlined_call_operand.vmem [shape: f32[32,32], index: 24, kind: input, shape index: {}]
  %s25 = inlined_call_operand.vmem [shape: f32[1,32], index: 25, kind: input, shape index: {}]
  %s26 = inlined_call_operand.hbm [shape: f32[2,32,64], index: 26, kind: output, shape index: {}]
  %s27 = sld [smem:[#allocation0]]
  $region137: #{tpu_custom_call.1} parent=0
    _
  %s29 = ssub.s32 1, %s27
  %s30 = scalar_select 0, %s29, %s27
  $region1: #{tpu_custom_call.1} parent=0
    #allocation2 [shape = 'u8[32768]{0}', space=vmem, size = 0x8000, scoped, tag = 'output window, operand 0']
    #allocation3 [shape = 's32[2]{0}', space=sflag, size = 0x8, scoped, tag = 'scoped memory for tpu_custom_call.1']
    %31 = vsyncpa [#allocation3], 0
    %s32 = scalar_lea.sflag [#allocation3], 1
    %33 = vsyncpa %s32, 0
    loop: start=0, step=1, limit=4
    $region2: #{tpu_custom_call.1} parent=1 // loop_pre_header
      _
    $region3: #{tpu_custom_call.1} parent=1 // loop_header
      %s35 = sphi 0, %s39
      %p36 = scmp.ge.s32.totalorder %s35, 4
      %s45 = sphi 0, %s47
      %s48 = sphi 0, %s45
      %s49 = sphi 0, %s48
      %s65 = sphi 0, %s49
      %s71 = sphi 0, %s73
      %s74 = sphi 0, %s71
      %s75 = sphi 0, %s74
      %s91 = sphi 0, %s75
      %s97 = sphi 0, %s99
      %s100 = sphi 0, %s97
      %s101 = sphi 0, %s100
      %s117 = sphi 0, %s101
      %s123 = sphi 0, %s125
      %s126 = sphi 0, %s123
      %s127 = sphi 0, %s126
      %s143 = sphi 0, %s127
      %s149 = sphi 0, %s151
      %s152 = sphi 0, %s149
      %s153 = sphi 0, %s152
      %s169 = sphi 0, %s153
      %s175 = sphi 0, %s177
      %s178 = sphi 0, %s175
      %s179 = sphi 0, %s178
      %s195 = sphi 0, %s179
      %s201 = sphi 0, %s203
      %s204 = sphi 0, %s201
      %s205 = sphi 0, %s204
      %s221 = sphi 0, %s205
      %s227 = sphi 0, %s229
      %s230 = sphi 0, %s227
      %s231 = sphi 0, %s230
      %s247 = sphi 0, %s231
      %s251 = sphi 0, %s251
      %s253 = sphi 0, %s251
      %s254 = sphi 0, %s253
      %s268 = sphi 0, %s254
      %s272 = sphi 0, %s272
      %s274 = sphi 0, %s272
      %s275 = sphi 0, %s274
      %s289 = sphi 0, %s275
      %s293 = sphi 0, %s293
      %s295 = sphi 0, %s293
      %s296 = sphi 0, %s295
      %s310 = sphi 0, %s296
      %s314 = sphi 0, %s314
      %s316 = sphi 0, %s314
      %s317 = sphi 0, %s316
      %s331 = sphi 0, %s317
      %s335 = sphi 0, %s335
      %s337 = sphi 0, %s335
      %s338 = sphi 0, %s337
      %s352 = sphi 0, %s338
      %s356 = sphi 0, %s356
      %s358 = sphi 0, %s356
      %s359 = sphi 0, %s358
      %s373 = sphi 0, %s359
      %s377 = sphi 0, %s377
      %s379 = sphi 0, %s377
      %s380 = sphi 0, %s379
      %s394 = sphi 0, %s380
      %s398 = sphi 0, %s398
      %s400 = sphi 0, %s398
      %s401 = sphi 0, %s400
      %s415 = sphi 0, %s401
      %s419 = sphi 0, %s419
      %s421 = sphi 0, %s419
      %s422 = sphi 0, %s421
      %s436 = sphi 0, %s422
      %s440 = sphi 0, %s440
      %s442 = sphi 0, %s440
      %s443 = sphi 0, %s442
      %s457 = sphi 0, %s443
      %s461 = sphi 0, %s461
      %s463 = sphi 0, %s461
      %s464 = sphi 0, %s463
      %s478 = sphi 0, %s464
      %s482 = sphi 0, %s482
      %s484 = sphi 0, %s482
      %s485 = sphi 0, %s484
      %s499 = sphi 0, %s485
      %s503 = sphi 0, %s503
      %s505 = sphi 0, %s503
      %s506 = sphi 0, %s505
      %s520 = sphi 0, %s506
      %s524 = sphi 0, %s524
      %s526 = sphi 0, %s524
      %s527 = sphi 0, %s526
      %s541 = sphi 0, %s527
      %s545 = sphi 0, %s545
      %s547 = sphi 0, %s545
      %s548 = sphi 0, %s547
      %s562 = sphi 0, %s548
      %s566 = sphi 0, %s566
      %s568 = sphi 0, %s566
      %s569 = sphi 0, %s568
      %s583 = sphi 0, %s569
      %s587 = sphi 0, %s587
      %s589 = sphi 0, %s587
      %s590 = sphi 0, %s589
      %s604 = sphi 0, %s590
      %s608 = sphi 0, %s608
      %s610 = sphi 0, %s608
      %s611 = sphi 0, %s610
      %s625 = sphi 0, %s611
      %s631 = sphi 0, %s633
      %s634 = sphi 0, %s631
      %s635 = sphi 0, %s634
      %s651 = sphi 0, %s635
    $region4: #{tpu_custom_call.1} parent=1 // loop_header_branch
      %38 = sbr.rel (%p36) target = $region8
    $region5: #{tpu_custom_call.1} parent=1 // loop_body
      %s40 = ssub.s32 %s35, 1
      %s41 = ssub.s32 %s35, 2
      %s42 = sadd.s32 %s35, 1
      %s43 = ssub.s32 %s35, %s42
      %p44 = scmp.eq.s32.totalorder %s43, 0
      %s46 = sadd.s32 %s45, 1
      %s47 = scalar_select %p44, %s45, %s46
      %p50 = pneg %p44
      %p51 = scmp.eq.s32.totalorder %s35, 1
      %p52 = por %p50, %p51
      %p53 = scmp.ne.s32.totalorder %s45, %s48
      %p54 = scmp.eq.s32.totalorder %s35, 0
      %p55 = por %p53, %p54
      %p56 = scmp.ne.s32.totalorder %s45, %s48
      %p57 = scmp.eq.s32.totalorder %s40, 1
      %p58 = por %p56, %p57
      %p59 = scmp.ne.s32.totalorder %s48, %s49
      %p60 = scmp.eq.s32.totalorder %s40, 0
      %p61 = por %p59, %p60
      %p62 = scmp.ne.s32.totalorder %s48, %s49
      %p63 = scmp.eq.s32.totalorder %s41, 1
      %p64 = por %p62, %p63
      %p66 = scmp.ne.s32.totalorder %s49, %s65
      %p67 = scmp.eq.s32.totalorder %s41, 0
      %p68 = por %p66, %p67
      %s69 = ssub.s32 %s35, %s42
      %p70 = scmp.eq.s32.totalorder %s69, 0
      %s72 = sadd.s32 %s71, 1
      %s73 = scalar_select %p70, %s71, %s72
      %p76 = pneg %p70
      %p77 = scmp.eq.s32.totalorder %s35, 1
      %p78 = por %p76, %p77
      %p79 = scmp.ne.s32.totalorder %s71, %s74
      %p80 = scmp.eq.s32.totalorder %s35, 0
      %p81 = por %p79, %p80
      %p82 = scmp.ne.s32.totalorder %s71, %s74
      %p83 = scmp.eq.s32.totalorder %s40, 1
      %p84 = por %p82, %p83
      %p85 = scmp.ne.s32.totalorder %s74, %s75
      %p86 = scmp.eq.s32.totalorder %s40, 0
      %p87 = por %p85, %p86
      %p88 = scmp.ne.s32.totalorder %s74, %s75
      %p89 = scmp.eq.s32.totalorder %s41, 1
      %p90 = por %p88, %p89
      %p92 = scmp.ne.s32.totalorder %s75, %s91
      %p93 = scmp.eq.s32.totalorder %s41, 0
      %p94 = por %p92, %p93
      %s95 = ssub.s32 %s35, %s42
      %p96 = scmp.eq.s32.totalorder %s95, 0
      %s98 = sadd.s32 %s97, 1
      %s99 = scalar_select %p96, %s97, %s98
      %p102 = pneg %p96
      %p103 = scmp.eq.s32.totalorder %s35, 1
      %p104 = por %p102, %p103
      %p105 = scmp.ne.s32.totalorder %s97, %s100
      %p106 = scmp.eq.s32.totalorder %s35, 0
      %p107 = por %p105, %p106
      %p108 = scmp.ne.s32.totalorder %s97, %s100
      %p109 = scmp.eq.s32.totalorder %s40, 1
      %p110 = por %p108, %p109
      %p111 = scmp.ne.s32.totalorder %s100, %s101
      %p112 = scmp.eq.s32.totalorder %s40, 0
      %p113 = por %p111, %p112
      %p114 = scmp.ne.s32.totalorder %s100, %s101
      %p115 = scmp.eq.s32.totalorder %s41, 1
      %p116 = por %p114, %p115
      %p118 = scmp.ne.s32.totalorder %s101, %s117
      %p119 = scmp.eq.s32.totalorder %s41, 0
      %p120 = por %p118, %p119
      %s121 = ssub.s32 %s35, %s42
      %p122 = scmp.eq.s32.totalorder %s121, 0
      %s124 = sadd.s32 %s123, 1
      %s125 = scalar_select %p122, %s123, %s124
      %p128 = pneg %p122
      %p129 = scmp.eq.s32.totalorder %s35, 1
      %p130 = por %p128, %p129
      %p131 = scmp.ne.s32.totalorder %s123, %s126
      %p132 = scmp.eq.s32.totalorder %s35, 0
      %p133 = por %p131, %p132
      %p134 = scmp.ne.s32.totalorder %s123, %s126
      %p135 = scmp.eq.s32.totalorder %s40, 1
      %p136 = por %p134, %p135
      %p137 = scmp.ne.s32.totalorder %s126, %s127
      %p138 = scmp.eq.s32.totalorder %s40, 0
      %p139 = por %p137, %p138
      %p140 = scmp.ne.s32.totalorder %s126, %s127
      %p141 = scmp.eq.s32.totalorder %s41, 1
      %p142 = por %p140, %p141
      %p144 = scmp.ne.s32.totalorder %s127, %s143
      %p145 = scmp.eq.s32.totalorder %s41, 0
      %p146 = por %p144, %p145
      %s147 = ssub.s32 %s35, %s42
      %p148 = scmp.eq.s32.totalorder %s147, 0
      %s150 = sadd.s32 %s149, 1
      %s151 = scalar_select %p148, %s149, %s150
      %p154 = pneg %p148
      %p155 = scmp.eq.s32.totalorder %s35, 1
      %p156 = por %p154, %p155
      %p157 = scmp.ne.s32.totalorder %s149, %s152
      %p158 = scmp.eq.s32.totalorder %s35, 0
      %p159 = por %p157, %p158
      %p160 = scmp.ne.s32.totalorder %s149, %s152
      %p161 = scmp.eq.s32.totalorder %s40, 1
      %p162 = por %p160, %p161
      %p163 = scmp.ne.s32.totalorder %s152, %s153
      %p164 = scmp.eq.s32.totalorder %s40, 0
      %p165 = por %p163, %p164
      %p166 = scmp.ne.s32.totalorder %s152, %s153
      %p167 = scmp.eq.s32.totalorder %s41, 1
      %p168 = por %p166, %p167
      %p170 = scmp.ne.s32.totalorder %s153, %s169
      %p171 = scmp.eq.s32.totalorder %s41, 0
      %p172 = por %p170, %p171
      %s173 = ssub.s32 %s35, %s42
      %p174 = scmp.eq.s32.totalorder %s173, 0
      %s176 = sadd.s32 %s175, 1
      %s177 = scalar_select %p174, %s175, %s176
      %p180 = pneg %p174
      %p181 = scmp.eq.s32.totalorder %s35, 1
      %p182 = por %p180, %p181
      %p183 = scmp.ne.s32.totalorder %s175, %s178
      %p184 = scmp.eq.s32.totalorder %s35, 0
      %p185 = por %p183, %p184
      %p186 = scmp.ne.s32.totalorder %s175, %s178
      %p187 = scmp.eq.s32.totalorder %s40, 1
      %p188 = por %p186, %p187
      %p189 = scmp.ne.s32.totalorder %s178, %s179
      %p190 = scmp.eq.s32.totalorder %s40, 0
      %p191 = por %p189, %p190
      %p192 = scmp.ne.s32.totalorder %s178, %s179
      %p193 = scmp.eq.s32.totalorder %s41, 1
      %p194 = por %p192, %p193
      %p196 = scmp.ne.s32.totalorder %s179, %s195
      %p197 = scmp.eq.s32.totalorder %s41, 0
      %p198 = por %p196, %p197
      %s199 = ssub.s32 %s35, %s42
      %p200 = scmp.eq.s32.totalorder %s199, 0
      %s202 = sadd.s32 %s201, 1
      %s203 = scalar_select %p200, %s201, %s202
      %p206 = pneg %p200
      %p207 = scmp.eq.s32.totalorder %s35, 1
      %p208 = por %p206, %p207
      %p209 = scmp.ne.s32.totalorder %s201, %s204
      %p210 = scmp.eq.s32.totalorder %s35, 0
      %p211 = por %p209, %p210
      %p212 = scmp.ne.s32.totalorder %s201, %s204
      %p213 = scmp.eq.s32.totalorder %s40, 1
      %p214 = por %p212, %p213
      %p215 = scmp.ne.s32.totalorder %s204, %s205
      %p216 = scmp.eq.s32.totalorder %s40, 0
      %p217 = por %p215, %p216
      %p218 = scmp.ne.s32.totalorder %s204, %s205
      %p219 = scmp.eq.s32.totalorder %s41, 1
      %p220 = por %p218, %p219
      %p222 = scmp.ne.s32.totalorder %s205, %s221
      %p223 = scmp.eq.s32.totalorder %s41, 0
      %p224 = por %p222, %p223
      %s225 = ssub.s32 %s35, %s42
      %p226 = scmp.eq.s32.totalorder %s225, 0
      %s228 = sadd.s32 %s227, 1
      %s229 = scalar_select %p226, %s227, %s228
      %p232 = pneg %p226
      %p233 = scmp.eq.s32.totalorder %s35, 1
      %p234 = por %p232, %p233
      %p235 = scmp.ne.s32.totalorder %s227, %s230
      %p236 = scmp.eq.s32.totalorder %s35, 0
      %p237 = por %p235, %p236
      %p238 = scmp.ne.s32.totalorder %s227, %s230
      %p239 = scmp.eq.s32.totalorder %s40, 1
      %p240 = por %p238, %p239
      %p241 = scmp.ne.s32.totalorder %s230, %s231
      %p242 = scmp.eq.s32.totalorder %s40, 0
      %p243 = por %p241, %p242
      %p244 = scmp.ne.s32.totalorder %s230, %s231
      %p245 = scmp.eq.s32.totalorder %s41, 1
      %p246 = por %p244, %p245
      %p248 = scmp.ne.s32.totalorder %s231, %s247
      %p249 = scmp.eq.s32.totalorder %s41, 0
      %p250 = por %p248, %p249
      %s252 = sadd.s32 %s251, 1
      %p255 = scmp.eq.s32.totalorder %s35, 1
      %p256 = scmp.ne.s32.totalorder %s251, %s253
      %p257 = scmp.eq.s32.totalorder %s35, 0
      %p258 = por %p256, %p257
      %p259 = scmp.ne.s32.totalorder %s251, %s253
      %p260 = scmp.eq.s32.totalorder %s40, 1
      %p261 = por %p259, %p260
      %p262 = scmp.ne.s32.totalorder %s253, %s254
      %p263 = scmp.eq.s32.totalorder %s40, 0
      %p264 = por %p262, %p263
      %p265 = scmp.ne.s32.totalorder %s253, %s254
      %p266 = scmp.eq.s32.totalorder %s41, 1
      %p267 = por %p265, %p266
      %p269 = scmp.ne.s32.totalorder %s254, %s268
      %p270 = scmp.eq.s32.totalorder %s41, 0
      %p271 = por %p269, %p270
      %s273 = sadd.s32 %s272, 1
      %p276 = scmp.eq.s32.totalorder %s35, 1
      %p277 = scmp.ne.s32.totalorder %s272, %s274
      %p278 = scmp.eq.s32.totalorder %s35, 0
      %p279 = por %p277, %p278
      %p280 = scmp.ne.s32.totalorder %s272, %s274
      %p281 = scmp.eq.s32.totalorder %s40, 1
      %p282 = por %p280, %p281
      %p283 = scmp.ne.s32.totalorder %s274, %s275
      %p284 = scmp.eq.s32.totalorder %s40, 0
      %p285 = por %p283, %p284
      %p286 = scmp.ne.s32.totalorder %s274, %s275
      %p287 = scmp.eq.s32.totalorder %s41, 1
      %p288 = por %p286, %p287
      %p290 = scmp.ne.s32.totalorder %s275, %s289
      %p291 = scmp.eq.s32.totalorder %s41, 0
      %p292 = por %p290, %p291
      %s294 = sadd.s32 %s293, 1
      %p297 = scmp.eq.s32.totalorder %s35, 1
      %p298 = scmp.ne.s32.totalorder %s293, %s295
      %p299 = scmp.eq.s32.totalorder %s35, 0
      %p300 = por %p298, %p299
      %p301 = scmp.ne.s32.totalorder %s293, %s295
      %p302 = scmp.eq.s32.totalorder %s40, 1
      %p303 = por %p301, %p302
      %p304 = scmp.ne.s32.totalorder %s295, %s296
      %p305 = scmp.eq.s32.totalorder %s40, 0
      %p306 = por %p304, %p305
      %p307 = scmp.ne.s32.totalorder %s295, %s296
      %p308 = scmp.eq.s32.totalorder %s41, 1
      %p309 = por %p307, %p308
      %p311 = scmp.ne.s32.totalorder %s296, %s310
      %p312 = scmp.eq.s32.totalorder %s41, 0
      %p313 = por %p311, %p312
      %s315 = sadd.s32 %s314, 1
      %p318 = scmp.eq.s32.totalorder %s35, 1
      %p319 = scmp.ne.s32.totalorder %s314, %s316
      %p320 = scmp.eq.s32.totalorder %s35, 0
      %p321 = por %p319, %p320
      %p322 = scmp.ne.s32.totalorder %s314, %s316
      %p323 = scmp.eq.s32.totalorder %s40, 1
      %p324 = por %p322, %p323
      %p325 = scmp.ne.s32.totalorder %s316, %s317
      %p326 = scmp.eq.s32.totalorder %s40, 0
      %p327 = por %p325, %p326
      %p328 = scmp.ne.s32.totalorder %s316, %s317
      %p329 = scmp.eq.s32.totalorder %s41, 1
      %p330 = por %p328, %p329
      %p332 = scmp.ne.s32.totalorder %s317, %s331
      %p333 = scmp.eq.s32.totalorder %s41, 0
      %p334 = por %p332, %p333
      %s336 = sadd.s32 %s335, 1
      %p339 = scmp.eq.s32.totalorder %s35, 1
      %p340 = scmp.ne.s32.totalorder %s335, %s337
      %p341 = scmp.eq.s32.totalorder %s35, 0
      %p342 = por %p340, %p341
      %p343 = scmp.ne.s32.totalorder %s335, %s337
      %p344 = scmp.eq.s32.totalorder %s40, 1
      %p345 = por %p343, %p344
      %p346 = scmp.ne.s32.totalorder %s337, %s338
      %p347 = scmp.eq.s32.totalorder %s40, 0
      %p348 = por %p346, %p347
      %p349 = scmp.ne.s32.totalorder %s337, %s338
      %p350 = scmp.eq.s32.totalorder %s41, 1
      %p351 = por %p349, %p350
      %p353 = scmp.ne.s32.totalorder %s338, %s352
      %p354 = scmp.eq.s32.totalorder %s41, 0
      %p355 = por %p353, %p354
      %s357 = sadd.s32 %s356, 1
      %p360 = scmp.eq.s32.totalorder %s35, 1
      %p361 = scmp.ne.s32.totalorder %s356, %s358
      %p362 = scmp.eq.s32.totalorder %s35, 0
      %p363 = por %p361, %p362
      %p364 = scmp.ne.s32.totalorder %s356, %s358
      %p365 = scmp.eq.s32.totalorder %s40, 1
      %p366 = por %p364, %p365
      %p367 = scmp.ne.s32.totalorder %s358, %s359
      %p368 = scmp.eq.s32.totalorder %s40, 0
      %p369 = por %p367, %p368
      %p370 = scmp.ne.s32.totalorder %s358, %s359
      %p371 = scmp.eq.s32.totalorder %s41, 1
      %p372 = por %p370, %p371
      %p374 = scmp.ne.s32.totalorder %s359, %s373
      %p375 = scmp.eq.s32.totalorder %s41, 0
      %p376 = por %p374, %p375
      %s378 = sadd.s32 %s377, 1
      %p381 = scmp.eq.s32.totalorder %s35, 1
      %p382 = scmp.ne.s32.totalorder %s377, %s379
      %p383 = scmp.eq.s32.totalorder %s35, 0
      %p384 = por %p382, %p383
      %p385 = scmp.ne.s32.totalorder %s377, %s379
      %p386 = scmp.eq.s32.totalorder %s40, 1
      %p387 = por %p385, %p386
      %p388 = scmp.ne.s32.totalorder %s379, %s380
      %p389 = scmp.eq.s32.totalorder %s40, 0
      %p390 = por %p388, %p389
      %p391 = scmp.ne.s32.totalorder %s379, %s380
      %p392 = scmp.eq.s32.totalorder %s41, 1
      %p393 = por %p391, %p392
      %p395 = scmp.ne.s32.totalorder %s380, %s394
      %p396 = scmp.eq.s32.totalorder %s41, 0
      %p397 = por %p395, %p396
      %s399 = sadd.s32 %s398, 1
      %p402 = scmp.eq.s32.totalorder %s35, 1
      %p403 = scmp.ne.s32.totalorder %s398, %s400
      %p404 = scmp.eq.s32.totalorder %s35, 0
      %p405 = por %p403, %p404
      %p406 = scmp.ne.s32.totalorder %s398, %s400
      %p407 = scmp.eq.s32.totalorder %s40, 1
      %p408 = por %p406, %p407
      %p409 = scmp.ne.s32.totalorder %s400, %s401
      %p410 = scmp.eq.s32.totalorder %s40, 0
      %p411 = por %p409, %p410
      %p412 = scmp.ne.s32.totalorder %s400, %s401
      %p413 = scmp.eq.s32.totalorder %s41, 1
      %p414 = por %p412, %p413
      %p416 = scmp.ne.s32.totalorder %s401, %s415
      %p417 = scmp.eq.s32.totalorder %s41, 0
      %p418 = por %p416, %p417
      %s420 = sadd.s32 %s419, 1
      %p423 = scmp.eq.s32.totalorder %s35, 1
      %p424 = scmp.ne.s32.totalorder %s419, %s421
      %p425 = scmp.eq.s32.totalorder %s35, 0
      %p426 = por %p424, %p425
      %p427 = scmp.ne.s32.totalorder %s419, %s421
      %p428 = scmp.eq.s32.totalorder %s40, 1
      %p429 = por %p427, %p428
      %p430 = scmp.ne.s32.totalorder %s421, %s422
      %p431 = scmp.eq.s32.totalorder %s40, 0
      %p432 = por %p430, %p431
      %p433 = scmp.ne.s32.totalorder %s421, %s422
      %p434 = scmp.eq.s32.totalorder %s41, 1
      %p435 = por %p433, %p434
      %p437 = scmp.ne.s32.totalorder %s422, %s436
      %p438 = scmp.eq.s32.totalorder %s41, 0
      %p439 = por %p437, %p438
      %s441 = sadd.s32 %s440, 1
      %p444 = scmp.eq.s32.totalorder %s35, 1
      %p445 = scmp.ne.s32.totalorder %s440, %s442
      %p446 = scmp.eq.s32.totalorder %s35, 0
      %p447 = por %p445, %p446
      %p448 = scmp.ne.s32.totalorder %s440, %s442
      %p449 = scmp.eq.s32.totalorder %s40, 1
      %p450 = por %p448, %p449
      %p451 = scmp.ne.s32.totalorder %s442, %s443
      %p452 = scmp.eq.s32.totalorder %s40, 0
      %p453 = por %p451, %p452
      %p454 = scmp.ne.s32.totalorder %s442, %s443
      %p455 = scmp.eq.s32.totalorder %s41, 1
      %p456 = por %p454, %p455
      %p458 = scmp.ne.s32.totalorder %s443, %s457
      %p459 = scmp.eq.s32.totalorder %s41, 0
      %p460 = por %p458, %p459
      %s462 = sadd.s32 %s461, 1
      %p465 = scmp.eq.s32.totalorder %s35, 1
      %p466 = scmp.ne.s32.totalorder %s461, %s463
      %p467 = scmp.eq.s32.totalorder %s35, 0
      %p468 = por %p466, %p467
      %p469 = scmp.ne.s32.totalorder %s461, %s463
      %p470 = scmp.eq.s32.totalorder %s40, 1
      %p471 = por %p469, %p470
      %p472 = scmp.ne.s32.totalorder %s463, %s464
      %p473 = scmp.eq.s32.totalorder %s40, 0
      %p474 = por %p472, %p473
      %p475 = scmp.ne.s32.totalorder %s463, %s464
      %p476 = scmp.eq.s32.totalorder %s41, 1
      %p477 = por %p475, %p476
      %p479 = scmp.ne.s32.totalorder %s464, %s478
      %p480 = scmp.eq.s32.totalorder %s41, 0
      %p481 = por %p479, %p480
      %s483 = sadd.s32 %s482, 1
      %p486 = scmp.eq.s32.totalorder %s35, 1
      %p487 = scmp.ne.s32.totalorder %s482, %s484
      %p488 = scmp.eq.s32.totalorder %s35, 0
      %p489 = por %p487, %p488
      %p490 = scmp.ne.s32.totalorder %s482, %s484
      %p491 = scmp.eq.s32.totalorder %s40, 1
      %p492 = por %p490, %p491
      %p493 = scmp.ne.s32.totalorder %s484, %s485
      %p494 = scmp.eq.s32.totalorder %s40, 0
      %p495 = por %p493, %p494
      %p496 = scmp.ne.s32.totalorder %s484, %s485
      %p497 = scmp.eq.s32.totalorder %s41, 1
      %p498 = por %p496, %p497
      %p500 = scmp.ne.s32.totalorder %s485, %s499
      %p501 = scmp.eq.s32.totalorder %s41, 0
      %p502 = por %p500, %p501
      %s504 = sadd.s32 %s503, 1
      %p507 = scmp.eq.s32.totalorder %s35, 1
      %p508 = scmp.ne.s32.totalorder %s503, %s505
      %p509 = scmp.eq.s32.totalorder %s35, 0
      %p510 = por %p508, %p509
      %p511 = scmp.ne.s32.totalorder %s503, %s505
      %p512 = scmp.eq.s32.totalorder %s40, 1
      %p513 = por %p511, %p512
      %p514 = scmp.ne.s32.totalorder %s505, %s506
      %p515 = scmp.eq.s32.totalorder %s40, 0
      %p516 = por %p514, %p515
      %p517 = scmp.ne.s32.totalorder %s505, %s506
      %p518 = scmp.eq.s32.totalorder %s41, 1
      %p519 = por %p517, %p518
      %p521 = scmp.ne.s32.totalorder %s506, %s520
      %p522 = scmp.eq.s32.totalorder %s41, 0
      %p523 = por %p521, %p522
      %s525 = sadd.s32 %s524, 1
      %p528 = scmp.eq.s32.totalorder %s35, 1
      %p529 = scmp.ne.s32.totalorder %s524, %s526
      %p530 = scmp.eq.s32.totalorder %s35, 0
      %p531 = por %p529, %p530
      %p532 = scmp.ne.s32.totalorder %s524, %s526
      %p533 = scmp.eq.s32.totalorder %s40, 1
      %p534 = por %p532, %p533
      %p535 = scmp.ne.s32.totalorder %s526, %s527
      %p536 = scmp.eq.s32.totalorder %s40, 0
      %p537 = por %p535, %p536
      %p538 = scmp.ne.s32.totalorder %s526, %s527
      %p539 = scmp.eq.s32.totalorder %s41, 1
      %p540 = por %p538, %p539
      %p542 = scmp.ne.s32.totalorder %s527, %s541
      %p543 = scmp.eq.s32.totalorder %s41, 0
      %p544 = por %p542, %p543
      %s546 = sadd.s32 %s545, 1
      %p549 = scmp.eq.s32.totalorder %s35, 1
      %p550 = scmp.ne.s32.totalorder %s545, %s547
      %p551 = scmp.eq.s32.totalorder %s35, 0
      %p552 = por %p550, %p551
      %p553 = scmp.ne.s32.totalorder %s545, %s547
      %p554 = scmp.eq.s32.totalorder %s40, 1
      %p555 = por %p553, %p554
      %p556 = scmp.ne.s32.totalorder %s547, %s548
      %p557 = scmp.eq.s32.totalorder %s40, 0
      %p558 = por %p556, %p557
      %p559 = scmp.ne.s32.totalorder %s547, %s548
      %p560 = scmp.eq.s32.totalorder %s41, 1
      %p561 = por %p559, %p560
      %p563 = scmp.ne.s32.totalorder %s548, %s562
      %p564 = scmp.eq.s32.totalorder %s41, 0
      %p565 = por %p563, %p564
      %s567 = sadd.s32 %s566, 1
      %p570 = scmp.eq.s32.totalorder %s35, 1
      %p571 = scmp.ne.s32.totalorder %s566, %s568
      %p572 = scmp.eq.s32.totalorder %s35, 0
      %p573 = por %p571, %p572
      %p574 = scmp.ne.s32.totalorder %s566, %s568
      %p575 = scmp.eq.s32.totalorder %s40, 1
      %p576 = por %p574, %p575
      %p577 = scmp.ne.s32.totalorder %s568, %s569
      %p578 = scmp.eq.s32.totalorder %s40, 0
      %p579 = por %p577, %p578
      %p580 = scmp.ne.s32.totalorder %s568, %s569
      %p581 = scmp.eq.s32.totalorder %s41, 1
      %p582 = por %p580, %p581
      %p584 = scmp.ne.s32.totalorder %s569, %s583
      %p585 = scmp.eq.s32.totalorder %s41, 0
      %p586 = por %p584, %p585
      %s588 = sadd.s32 %s587, 1
      %p591 = scmp.eq.s32.totalorder %s35, 1
      %p592 = scmp.ne.s32.totalorder %s587, %s589
      %p593 = scmp.eq.s32.totalorder %s35, 0
      %p594 = por %p592, %p593
      %p595 = scmp.ne.s32.totalorder %s587, %s589
      %p596 = scmp.eq.s32.totalorder %s40, 1
      %p597 = por %p595, %p596
      %p598 = scmp.ne.s32.totalorder %s589, %s590
      %p599 = scmp.eq.s32.totalorder %s40, 0
      %p600 = por %p598, %p599
      %p601 = scmp.ne.s32.totalorder %s589, %s590
      %p602 = scmp.eq.s32.totalorder %s41, 1
      %p603 = por %p601, %p602
      %p605 = scmp.ne.s32.totalorder %s590, %s604
      %p606 = scmp.eq.s32.totalorder %s41, 0
      %p607 = por %p605, %p606
      %s609 = sadd.s32 %s608, 1
      %p612 = scmp.eq.s32.totalorder %s35, 1
      %p613 = scmp.ne.s32.totalorder %s608, %s610
      %p614 = scmp.eq.s32.totalorder %s35, 0
      %p615 = por %p613, %p614
      %p616 = scmp.ne.s32.totalorder %s608, %s610
      %p617 = scmp.eq.s32.totalorder %s40, 1
      %p618 = por %p616, %p617
      %p619 = scmp.ne.s32.totalorder %s610, %s611
      %p620 = scmp.eq.s32.totalorder %s40, 0
      %p621 = por %p619, %p620
      %p622 = scmp.ne.s32.totalorder %s610, %s611
      %p623 = scmp.eq.s32.totalorder %s41, 1
      %p624 = por %p622, %p623
      %p626 = scmp.ne.s32.totalorder %s611, %s625
      %p627 = scmp.eq.s32.totalorder %s41, 0
      %p628 = por %p626, %p627
      %s629 = ssub.s32 %s35, %s42
      %p630 = scmp.eq.s32.totalorder %s629, 0
      %s632 = sadd.s32 %s631, 1
      %s633 = scalar_select %p630, %s631, %s632
      %p636 = pneg %p630
      %p637 = scmp.eq.s32.totalorder %s35, 1
      %p638 = por %p636, %p637
      %p639 = scmp.ne.s32.totalorder %s631, %s634
      %p640 = scmp.eq.s32.totalorder %s35, 0
      %p641 = por %p639, %p640
      %p642 = scmp.ne.s32.totalorder %s631, %s634
      %p643 = scmp.eq.s32.totalorder %s40, 1
      %p644 = por %p642, %p643
      %p645 = scmp.ne.s32.totalorder %s634, %s635
      %p646 = scmp.eq.s32.totalorder %s40, 0
      %p647 = por %p645, %p646
      %p648 = scmp.ne.s32.totalorder %s634, %s635
      %p649 = scmp.eq.s32.totalorder %s41, 1
      %p650 = por %p648, %p649
      %p652 = scmp.ne.s32.totalorder %s635, %s651
      %p653 = scmp.eq.s32.totalorder %s41, 0
      %p654 = por %p652, %p653
      %p655 = scmp.le.s32.totalorder 1, %s35
      %p656 = scmp.lt.s32.totalorder %s35, 3
      %p657 = pnand %p655, %p656
      %p658 = pneg %p657
      // Predicated region
      $region9: #{tpu_custom_call.1} parent=5 // pred_check
        _
      $region10: #{tpu_custom_call.1} parent=5 // pred_check_branch
        %660 = sbr.rel (%p657) target = $region12
      $region11: #{tpu_custom_call.1} parent=5 // pred_region
        %s661 = ssub.s32 %s35, 1
        // Predicated region
        $region13: #{tpu_custom_call.1} parent=11 // pred_check
          %p662 = pneg %p264
        $region14: #{tpu_custom_call.1} parent=11 // pred_check_branch
          %664 = sbr.rel (%p662) target = $region16
        $region15: #{tpu_custom_call.1} parent=11 // pred_region
          _
        $region16: #{tpu_custom_call.1} parent=11 // pred_fallthru
          _
        // Predicated region
        $region17: #{tpu_custom_call.1} parent=11 // pred_check
          %p665 = pneg %p285
        $region18: #{tpu_custom_call.1} parent=11 // pred_check_branch
          %667 = sbr.rel (%p665) target = $region20
        $region19: #{tpu_custom_call.1} parent=11 // pred_region
          _
        $region20: #{tpu_custom_call.1} parent=11 // pred_fallthru
          _
        // Predicated region
        $region21: #{tpu_custom_call.1} parent=11 // pred_check
          %p668 = pneg %p306
        $region22: #{tpu_custom_call.1} parent=11 // pred_check_branch
          %670 = sbr.rel (%p668) target = $region24
        $region23: #{tpu_custom_call.1} parent=11 // pred_region
          _
        $region24: #{tpu_custom_call.1} parent=11 // pred_fallthru
          _
        // Predicated region
        $region25: #{tpu_custom_call.1} parent=11 // pred_check
          %p671 = pneg %p327
        $region26: #{tpu_custom_call.1} parent=11 // pred_check_branch
          %673 = sbr.rel (%p671) target = $region28
        $region27: #{tpu_custom_call.1} parent=11 // pred_region
          _
        $region28: #{tpu_custom_call.1} parent=11 // pred_fallthru
          _
        // Predicated region
        $region29: #{tpu_custom_call.1} parent=11 // pred_check
          %p674 = pneg %p348
        $region30: #{tpu_custom_call.1} parent=11 // pred_check_branch
          %676 = sbr.rel (%p674) target = $region32
        $region31: #{tpu_custom_call.1} parent=11 // pred_region
          _
        $region32: #{tpu_custom_call.1} parent=11 // pred_fallthru
          _
        // Predicated region
        $region33: #{tpu_custom_call.1} parent=11 // pred_check
          %p677 = pneg %p369
        $region34: #{tpu_custom_call.1} parent=11 // pred_check_branch
          %679 = sbr.rel (%p677) target = $region36
        $region35: #{tpu_custom_call.1} parent=11 // pred_region
          _
        $region36: #{tpu_custom_call.1} parent=11 // pred_fallthru
          _
        // Predicated region
        $region37: #{tpu_custom_call.1} parent=11 // pred_check
          %p680 = pneg %p390
        $region38: #{tpu_custom_call.1} parent=11 // pred_check_branch
          %682 = sbr.rel (%p680) target = $region40
        $region39: #{tpu_custom_call.1} parent=11 // pred_region
          _
        $region40: #{tpu_custom_call.1} parent=11 // pred_fallthru
          _
        // Predicated region
        $region41: #{tpu_custom_call.1} parent=11 // pred_check
          %p683 = pneg %p411
        $region42: #{tpu_custom_call.1} parent=11 // pred_check_branch
          %685 = sbr.rel (%p683) target = $region44
        $region43: #{tpu_custom_call.1} parent=11 // pred_region
          _
        $region44: #{tpu_custom_call.1} parent=11 // pred_fallthru
          _
        // Predicated region
        $region45: #{tpu_custom_call.1} parent=11 // pred_check
          %p686 = pneg %p432
        $region46: #{tpu_custom_call.1} parent=11 // pred_check_branch
          %688 = sbr.rel (%p686) target = $region48
        $region47: #{tpu_custom_call.1} parent=11 // pred_region
          _
        $region48: #{tpu_custom_call.1} parent=11 // pred_fallthru
          _
        // Predicated region
        $region49: #{tpu_custom_call.1} parent=11 // pred_check
          %p689 = pneg %p453
        $region50: #{tpu_custom_call.1} parent=11 // pred_check_branch
          %691 = sbr.rel (%p689) target = $region52
        $region51: #{tpu_custom_call.1} parent=11 // pred_region
          _
        $region52: #{tpu_custom_call.1} parent=11 // pred_fallthru
          _
        // Predicated region
        $region53: #{tpu_custom_call.1} parent=11 // pred_check
          %p692 = pneg %p474
        $region54: #{tpu_custom_call.1} parent=11 // pred_check_branch
          %694 = sbr.rel (%p692) target = $region56
        $region55: #{tpu_custom_call.1} parent=11 // pred_region
          _
        $region56: #{tpu_custom_call.1} parent=11 // pred_fallthru
          _
        // Predicated region
        $region57: #{tpu_custom_call.1} parent=11 // pred_check
          %p695 = pneg %p495
        $region58: #{tpu_custom_call.1} parent=11 // pred_check_branch
          %697 = sbr.rel (%p695) target = $region60
        $region59: #{tpu_custom_call.1} parent=11 // pred_region
          _
        $region60: #{tpu_custom_call.1} parent=11 // pred_fallthru
          _
        // Predicated region
        $region61: #{tpu_custom_call.1} parent=11 // pred_check
          %p698 = pneg %p516
        $region62: #{tpu_custom_call.1} parent=11 // pred_check_branch
          %700 = sbr.rel (%p698) target = $region64
        $region63: #{tpu_custom_call.1} parent=11 // pred_region
          _
        $region64: #{tpu_custom_call.1} parent=11 // pred_fallthru
          _
        // Predicated region
        $region65: #{tpu_custom_call.1} parent=11 // pred_check
          %p701 = pneg %p537
        $region66: #{tpu_custom_call.1} parent=11 // pred_check_branch
          %703 = sbr.rel (%p701) target = $region68
        $region67: #{tpu_custom_call.1} parent=11 // pred_region
          _
        $region68: #{tpu_custom_call.1} parent=11 // pred_fallthru
          _
        // Predicated region
        $region69: #{tpu_custom_call.1} parent=11 // pred_check
          %p704 = pneg %p558
        $region70: #{tpu_custom_call.1} parent=11 // pred_check_branch
          %706 = sbr.rel (%p704) target = $region72
        $region71: #{tpu_custom_call.1} parent=11 // pred_region
          _
        $region72: #{tpu_custom_call.1} parent=11 // pred_fallthru
          _
        // Predicated region
        $region73: #{tpu_custom_call.1} parent=11 // pred_check
          %p707 = pneg %p579
        $region74: #{tpu_custom_call.1} parent=11 // pred_check_branch
          %709 = sbr.rel (%p707) target = $region76
        $region75: #{tpu_custom_call.1} parent=11 // pred_region
          _
        $region76: #{tpu_custom_call.1} parent=11 // pred_fallthru
          _
        // Predicated region
        $region77: #{tpu_custom_call.1} parent=11 // pred_check
          %p710 = pneg %p600
        $region78: #{tpu_custom_call.1} parent=11 // pred_check_branch
          %712 = sbr.rel (%p710) target = $region80
        $region79: #{tpu_custom_call.1} parent=11 // pred_region
          _
        $region80: #{tpu_custom_call.1} parent=11 // pred_fallthru
          _
        // Predicated region
        $region81: #{tpu_custom_call.1} parent=11 // pred_check
          %p713 = pneg %p621
        $region82: #{tpu_custom_call.1} parent=11 // pred_check_branch
          %715 = sbr.rel (%p713) target = $region84
        $region83: #{tpu_custom_call.1} parent=11 // pred_region
          _
        $region84: #{tpu_custom_call.1} parent=11 // pred_fallthru
          _
      $region12: #{tpu_custom_call.1} parent=5 // pred_fallthru
        _
      %p716 = scmp.lt.s32.totalorder %s35, 2
      // Predicated region
      $region85: #{tpu_custom_call.1} parent=5 // pred_check
        %p717 = pneg %p716
      $region86: #{tpu_custom_call.1} parent=5 // pred_check_branch
        %719 = sbr.rel (%p717) target = $region88
      $region87: #{tpu_custom_call.1} parent=5 // pred_region
        // Predicated region
        $region89: #{tpu_custom_call.1} parent=87 // pred_check
          %p720 = pneg %p55
        $region90: #{tpu_custom_call.1} parent=87 // pred_check_branch
          %722 = sbr.rel (%p720) target = $region92
        $region91: #{tpu_custom_call.1} parent=87 // pred_region
          %p723 = scmp.lt.s32.totalorder %s35, 1
          %s724 = scalar_select %p723, %s35, 1
          %s725 = scalar_lea.vmem %s0, %s724
        $region92: #{tpu_custom_call.1} parent=87 // pred_fallthru
          _
        // Predicated region
        $region93: #{tpu_custom_call.1} parent=87 // pred_check
          %p726 = pneg %p81
        $region94: #{tpu_custom_call.1} parent=87 // pred_check_branch
          %728 = sbr.rel (%p726) target = $region96
        $region95: #{tpu_custom_call.1} parent=87 // pred_region
          %p729 = scmp.lt.s32.totalorder %s35, 1
          %s730 = scalar_select %p729, %s35, 1
          %s731 = smul.addr %s730, 8
          %s732 = smul.addr %s731, 8
          %s733 = scalar_lea.vmem %s1, %s732
        $region96: #{tpu_custom_call.1} parent=87 // pred_fallthru
          _
        // Predicated region
        $region97: #{tpu_custom_call.1} parent=87 // pred_check
          %p734 = pneg %p107
        $region98: #{tpu_custom_call.1} parent=87 // pred_check_branch
          %736 = sbr.rel (%p734) target = $region100
        $region99: #{tpu_custom_call.1} parent=87 // pred_region
          %p737 = scmp.lt.s32.totalorder %s35, 1
          %s738 = scalar_select %p737, %s35, 1
          %s739 = smul.addr %s738, 2
          %s740 = smul.addr %s739, 8
          %s741 = scalar_lea.vmem %s2, %s740
        $region100: #{tpu_custom_call.1} parent=87 // pred_fallthru
          _
        // Predicated region
        $region101: #{tpu_custom_call.1} parent=87 // pred_check
          %p742 = pneg %p133
        $region102: #{tpu_custom_call.1} parent=87 // pred_check_branch
          %744 = sbr.rel (%p742) target = $region104
        $region103: #{tpu_custom_call.1} parent=87 // pred_region
          %p745 = scmp.lt.s32.totalorder %s35, 1
          %s746 = scalar_select %p745, %s35, 1
          %s747 = smul.addr %s746, 4
          %s748 = scalar_lea.vmem %s3, %s747
        $region104: #{tpu_custom_call.1} parent=87 // pred_fallthru
          _
        // Predicated region
        $region105: #{tpu_custom_call.1} parent=87 // pred_check
          %p749 = pneg %p159
        $region106: #{tpu_custom_call.1} parent=87 // pred_check_branch
          %751 = sbr.rel (%p749) target = $region108
        $region107: #{tpu_custom_call.1} parent=87 // pred_region
          %p752 = scmp.lt.s32.totalorder %s35, 1
          %s753 = scalar_select %p752, %s35, 1
          %s754 = smul.addr %s753, 4
          %s755 = scalar_lea.vmem %s4, %s754
        $region108: #{tpu_custom_call.1} parent=87 // pred_fallthru
          _
        // Predicated region
        $region109: #{tpu_custom_call.1} parent=87 // pred_check
          %p756 = pneg %p185
        $region110: #{tpu_custom_call.1} parent=87 // pred_check_branch
          %758 = sbr.rel (%p756) target = $region112
        $region111: #{tpu_custom_call.1} parent=87 // pred_region
          %p759 = scmp.lt.s32.totalorder %s35, 1
          %s760 = scalar_select %p759, %s35, 1
          %s761 = smul.addr %s760, 8
          %s762 = smul.addr %s761, 8
          %s763 = scalar_lea.vmem %s5, %s762
        $region112: #{tpu_custom_call.1} parent=87 // pred_fallthru
          _
        // Predicated region
        $region113: #{tpu_custom_call.1} parent=87 // pred_check
          %p764 = pneg %p211
        $region114: #{tpu_custom_call.1} parent=87 // pred_check_branch
          %766 = sbr.rel (%p764) target = $region116
        $region115: #{tpu_custom_call.1} parent=87 // pred_region
          %p767 = scmp.lt.s32.totalorder %s35, 1
          %s768 = scalar_select %p767, %s35, 1
          %s769 = smul.addr %s768, 2
          %s770 = smul.addr %s769, 8
          %s771 = scalar_lea.vmem %s6, %s770
        $region116: #{tpu_custom_call.1} parent=87 // pred_fallthru
          _
        // Predicated region
        $region117: #{tpu_custom_call.1} parent=87 // pred_check
          %p772 = pneg %p237
        $region118: #{tpu_custom_call.1} parent=87 // pred_check_branch
          %774 = sbr.rel (%p772) target = $region120
        $region119: #{tpu_custom_call.1} parent=87 // pred_region
          %p775 = scmp.lt.s32.totalorder %s35, 1
          %s776 = scalar_select %p775, %s35, 1
          %s777 = smul.addr %s776, 8
          %s778 = scalar_lea.vmem %s7, %s777
        $region120: #{tpu_custom_call.1} parent=87 // pred_fallthru
          _
      $region88: #{tpu_custom_call.1} parent=5 // pred_fallthru
        _
      %p779 = scmp.le.s32.totalorder 1, %s35
      %p780 = scmp.lt.s32.totalorder %s35, 3
      %p781 = pnand %p779, %p780
      %p782 = pneg %p781
      // Predicated region
      $region121: #{tpu_custom_call.1} parent=5 // pred_check
        _
      $region122: #{tpu_custom_call.1} parent=5 // pred_check_branch
        %784 = sbr.rel (%p781) target = $region124
      $region123: #{tpu_custom_call.1} parent=5 // pred_region
        %s785 = ssub.s32 %s35, 1
        %p786 = scmp.lt.s32.totalorder %s40, 1
        %s787 = scalar_select %p786, %s40, 1
        %s788 = scalar_lea.vmem %s0, %s787
        %p789 = pneg %p61
        %p790 = pneg %p58
        %p791 = scmp.lt.s32.totalorder %s40, 1
        %s792 = scalar_select %p791, %s40, 1
        %s793 = smul.addr %s792, 8
        %s794 = smul.addr %s793, 8
        %s795 = scalar_lea.vmem %s1, %s794
        %p796 = pneg %p87
        %p797 = pneg %p84
        %p798 = scmp.lt.s32.totalorder %s40, 1
        %s799 = scalar_select %p798, %s40, 1
        %s800 = smul.addr %s799, 2
        %s801 = smul.addr %s800, 8
        %s802 = scalar_lea.vmem %s2, %s801
        %p803 = pneg %p113
        %p804 = pneg %p110
        %p805 = scmp.lt.s32.totalorder %s40, 1
        %s806 = scalar_select %p805, %s40, 1
        %s807 = smul.addr %s806, 4
        %s808 = scalar_lea.vmem %s3, %s807
        %p809 = pneg %p139
        %p810 = pneg %p136
        %p811 = scmp.lt.s32.totalorder %s40, 1
        %s812 = scalar_select %p811, %s40, 1
        %s813 = smul.addr %s812, 4
        %s814 = scalar_lea.vmem %s4, %s813
        %p815 = pneg %p165
        %p816 = pneg %p162
        %p817 = scmp.lt.s32.totalorder %s40, 1
        %s818 = scalar_select %p817, %s40, 1
        %s819 = smul.addr %s818, 8
        %s820 = smul.addr %s819, 8
        %s821 = scalar_lea.vmem %s5, %s820
        %p822 = pneg %p191
        %p823 = pneg %p188
        %p824 = scmp.lt.s32.totalorder %s40, 1
        %s825 = scalar_select %p824, %s40, 1
        %s826 = smul.addr %s825, 2
        %s827 = smul.addr %s826, 8
        %s828 = scalar_lea.vmem %s6, %s827
        %p829 = pneg %p217
        %p830 = pneg %p214
        %p831 = scmp.lt.s32.totalorder %s40, 1
        %s832 = scalar_select %p831, %s40, 1
        %s833 = smul.addr %s832, 8
        %s834 = scalar_lea.vmem %s7, %s833
        %p835 = pneg %p243
        %p836 = pneg %p240
        %p837 = pneg %p264
        %p838 = pneg %p261
        %p839 = pneg %p285
        %p840 = pneg %p282
        %p841 = pneg %p306
        %p842 = pneg %p303
        %p843 = pneg %p327
        %p844 = pneg %p324
        %p845 = pneg %p348
        %p846 = pneg %p345
        %p847 = pneg %p369
        %p848 = pneg %p366
        %p849 = pneg %p390
        %p850 = pneg %p387
        %p851 = pneg %p411
        %p852 = pneg %p408
        %p853 = pneg %p432
        %p854 = pneg %p429
        %p855 = pneg %p453
        %p856 = pneg %p450
        %p857 = pneg %p474
        %p858 = pneg %p471
        %p859 = pneg %p495
        %p860 = pneg %p492
        %p861 = pneg %p516
        %p862 = pneg %p513
        %p863 = pneg %p537
        %p864 = pneg %p534
        %p865 = pneg %p558
        %p866 = pneg %p555
        %p867 = pneg %p579
        %p868 = pneg %p576
        %p869 = pneg %p600
        %p870 = pneg %p597
        %p871 = pneg %p621
        %p872 = pneg %p618
        %p873 = pneg %p647
        %p874 = pneg %p644
        %s875 = sand.u32 %s634, 1
        %s876 = scalar_lea.sflag [#allocation3], %s875
        %s877 = sand.u32 %s634, 1
        %s878 = smul.addr %s877, 32
        %s879 = scalar_lea.vmem [#allocation2], %s878
        %p880 = scmp.lt.s32.totalorder %s40, 1
        %s881 = scalar_select %p880, %s40, 1
        %s882 = scalar_lea.vmem %s0, %s881
        %p883 = scmp.lt.s32.totalorder %s40, 1
        %s884 = scalar_select %p883, %s40, 1
        %s885 = smul.addr %s884, 8
        %s886 = smul.addr %s885, 8
        %s887 = scalar_lea.vmem %s1, %s886
        %p888 = scmp.lt.s32.totalorder %s40, 1
        %s889 = scalar_select %p888, %s40, 1
        %s890 = smul.addr %s889, 2
        %s891 = smul.addr %s890, 8
        %s892 = scalar_lea.vmem %s2, %s891
        %p893 = scmp.lt.s32.totalorder %s40, 1
        %s894 = scalar_select %p893, %s40, 1
        %s895 = smul.addr %s894, 4
        %s896 = scalar_lea.vmem %s3, %s895
        %p897 = scmp.lt.s32.totalorder %s40, 1
        %s898 = scalar_select %p897, %s40, 1
        %s899 = smul.addr %s898, 4
        %s900 = scalar_lea.vmem %s4, %s899
        %p901 = scmp.lt.s32.totalorder %s40, 1
        %s902 = scalar_select %p901, %s40, 1
        %s903 = smul.addr %s902, 8
        %s904 = smul.addr %s903, 8
        %s905 = scalar_lea.vmem %s5, %s904
        %p906 = scmp.lt.s32.totalorder %s40, 1
        %s907 = scalar_select %p906, %s40, 1
        %s908 = smul.addr %s907, 2
        %s909 = smul.addr %s908, 8
        %s910 = scalar_lea.vmem %s6, %s909
        %p911 = scmp.lt.s32.totalorder %s40, 1
        %s912 = scalar_select %p911, %s40, 1
        %s913 = smul.addr %s912, 8
        %s914 = scalar_lea.vmem %s7, %s913
        %v915 = vld [vmem:[%s882] sm:$0x1]
        %v916 = vld [vmem:[%s8] sm:$0xff]
        %v917 = vld [vmem:[%s8 + $0x8] sm:$0xff]
        %v918 = vld [vmem:[%s9] sm:$0x1]
        %vm919 = vcmask 130048
        %v921 = vsel %vm919, %v915, 0
        %923 = vmatprep.subr.mxu0 0.0
        %924 = vmatpush1.msra.mxu0 %v916
        %925 = vmatprep.subr.mxu0 0.0
        %926 = vmatpush1.msra.mxu0 %v917
        %927 = vmatprep.subr.mxu0 0.0
        %928 = vmatpush1.msra.mxu0 0.0
        %929 = vmatprep.subr.mxu0 0.0
        %930 = vmatpush1.msra.mxu0 0.0
        %931 = vmatprep.subr.mxu0 0.0
        %932 = vmatpush1.msra.mxu0 0.0
        %933 = vmatprep.subr.mxu0 0.0
        %934 = vmatpush1.msra.mxu0 0.0
        %935 = vmatprep.subr.mxu0 0.0
        %936 = vmatpush1.msra.mxu0 0.0
        %937 = vmatprep.subr.mxu0 0.0
        %938 = vmatpush1.msra.mxu0 0.0
        %939 = vmatprep.subr.mxu0 0.0
        %940 = vmatpush1.msra.mxu0 0.0
        %941 = vmatprep.subr.mxu0 0.0
        %942 = vmatpush1.msra.mxu0 0.0
        %943 = vmatprep.subr.mxu0 0.0
        %944 = vmatpush1.msra.mxu0 0.0
        %945 = vmatprep.subr.mxu0 0.0
        %946 = vmatpush1.msra.mxu0 0.0
        %947 = vmatprep.subr.mxu0 0.0
        %948 = vmatpush1.msra.mxu0 0.0
        %949 = vmatprep.subr.mxu0 0.0
        %950 = vmatpush1.msra.mxu0 0.0
        %951 = vmatprep.subr.mxu0 0.0
        %952 = vmatpush1.msra.mxu0 0.0
        %953 = vmatprep.subr.mxu0 0.0
        %954 = vmatpush1.msra.mxu0 0.0
        %955 = vmatprep.subr.mxu0 0.0
        %956 = vmatpush1.msra.mxu0 0.0
        %957 = vmatprep.subr.mxu0 0.0
        %958 = vmatpush1.msra.mxu0 0.0
        %959 = vmatprep.subr.mxu0 0.0
        %960 = vmatpush1.msra.mxu0 0.0
        %961 = vmatprep.subr.mxu0 0.0
        %962 = vmatpush1.msra.mxu0 0.0
        %963 = vmatprep.subr.mxu0 0.0
        %964 = vmatpush1.msra.mxu0 0.0
        %965 = vmatprep.subr.mxu0 0.0
        %966 = vmatpush1.msra.mxu0 0.0
        %967 = vmatprep.subr.mxu0 0.0
        %968 = vmatpush1.msra.mxu0 0.0
        %969 = vmatprep.subr.mxu0 0.0
        %970 = vmatpush1.msra.mxu0 0.0
        %971 = vmatprep.subr.mxu0 0.0
        %972 = vmatpush1.msra.mxu0 0.0
        %973 = vmatprep.subr.mxu0 0.0
        %974 = vmatpush1.msra.mxu0 0.0
        %975 = vmatprep.subr.mxu0 0.0
        %976 = vmatpush1.msra.mxu0 0.0
        %977 = vmatprep.subr.mxu0 0.0
        %978 = vmatpush1.msra.mxu0 0.0
        %979 = vmatprep.subr.mxu0 0.0
        %980 = vmatpush1.msra.mxu0 0.0
        %981 = vmatprep.subr.mxu0 0.0
        %982 = vmatpush1.msra.mxu0 0.0
        %983 = vmatprep.subr.mxu0 0.0
        %984 = vmatpush1.msra.mxu0 0.0
        %985 = vmatprep.subr.mxu0 0.0
        %986 = vmatpush1.msra.mxu0 0.0
        %987 = vmatprep.mubr.f32.mxu0 0.0
        %988 = vmatmul.mubr.f32.gmra.mrb[0].mxu0 %v921
        %v989 = vpop.f32.mrb[0].mxu0
        %v990 = vadd.f32 %v918, %v989
        %v991 = vpop.f32.mrb[0].mxu0
        %992 = vdwg.mxu0
        %v993 = vmul.f32 %v990, 0.5
        %v994 = vmul.f32 %v990, 0.044715
        %v995 = vmul.f32 %v994, %v990
        %v996 = vmul.f32 %v995, %v990
        %v997 = vadd.f32 %v990, %v996
        %v998 = vmul.f32 %v997, 0.7978846
        %v999 = vtanh.pop %v998
        %v1000 = vadd.f32 %v999, 1.0
        %v1001 = vmul.f32 %v993, %v1000
        %v1002 = vld [vmem:[%s10] sm:$0xff]
        %v1003 = vld [vmem:[%s10 + $0x8] sm:$0xff]
        %v1004 = vld [vmem:[%s10 + $0x10] sm:$0xff]
        %v1005 = vld [vmem:[%s10 + $0x18] sm:$0xff]
        %v1006 = vld [vmem:[%s10 + $0x20] sm:$0xff]
        %v1007 = vld [vmem:[%s10 + $0x28] sm:$0xff]
        %v1008 = vld [vmem:[%s10 + $0x30] sm:$0xff]
        %v1009 = vld [vmem:[%s10 + $0x38] sm:$0xff]
        %vm1010 = vcmask 523264
        %v1012 = vsel %vm1010, %v1001, 0
        %1014 = vmatprep.subr.mxu0 0.0
        %1015 = vmatpush1.msra.mxu0 %v1002
        %1016 = vmatprep.subr.mxu0 0.0
        %1017 = vmatpush1.msra.mxu0 %v1003
        %1018 = vmatprep.subr.mxu0 0.0
        %1019 = vmatpush1.msra.mxu0 %v1004
        %1020 = vmatprep.subr.mxu0 0.0
        %1021 = vmatpush1.msra.mxu0 %v1005
        %1022 = vmatprep.subr.mxu0 0.0
        %1023 = vmatpush1.msra.mxu0 %v1006
        %1024 = vmatprep.subr.mxu0 0.0
        %1025 = vmatpush1.msra.mxu0 %v1007
        %1026 = vmatprep.subr.mxu0 0.0
        %1027 = vmatpush1.msra.mxu0 %v1008
        %1028 = vmatprep.subr.mxu0 0.0
        %1029 = vmatpush1.msra.mxu0 %v1009
        %1030 = vmatprep.subr.mxu0 0.0
        %1031 = vmatpush1.msra.mxu0 0.0
        %1032 = vmatprep.subr.mxu0 0.0
        %1033 = vmatpush1.msra.mxu0 0.0
        %1034 = vmatprep.subr.mxu0 0.0
        %1035 = vmatpush1.msra.mxu0 0.0
        %1036 = vmatprep.subr.mxu0 0.0
        %1037 = vmatpush1.msra.mxu0 0.0
        %1038 = vmatprep.subr.mxu0 0.0
        %1039 = vmatpush1.msra.mxu0 0.0
        %1040 = vmatprep.subr.mxu0 0.0
        %1041 = vmatpush1.msra.mxu0 0.0
        %1042 = vmatprep.subr.mxu0 0.0
        %1043 = vmatpush1.msra.mxu0 0.0
        %1044 = vmatprep.subr.mxu0 0.0
        %1045 = vmatpush1.msra.mxu0 0.0
        %1046 = vmatprep.subr.mxu0 0.0
        %1047 = vmatpush1.msra.mxu0 0.0
        %1048 = vmatprep.subr.mxu0 0.0
        %1049 = vmatpush1.msra.mxu0 0.0
        %1050 = vmatprep.subr.mxu0 0.0
        %1051 = vmatpush1.msra.mxu0 0.0
        %1052 = vmatprep.subr.mxu0 0.0
        %1053 = vmatpush1.msra.mxu0 0.0
        %1054 = vmatprep.subr.mxu0 0.0
        %1055 = vmatpush1.msra.mxu0 0.0
        %1056 = vmatprep.subr.mxu0 0.0
        %1057 = vmatpush1.msra.mxu0 0.0
        %1058 = vmatprep.subr.mxu0 0.0
        %1059 = vmatpush1.msra.mxu0 0.0
        %1060 = vmatprep.subr.mxu0 0.0
        %1061 = vmatpush1.msra.mxu0 0.0
        %1062 = vmatprep.subr.mxu0 0.0
        %1063 = vmatpush1.msra.mxu0 0.0
        %1064 = vmatprep.subr.mxu0 0.0
        %1065 = vmatpush1.msra.mxu0 0.0
        %1066 = vmatprep.subr.mxu0 0.0
        %1067 = vmatpush1.msra.mxu0 0.0
        %1068 = vmatprep.subr.mxu0 0.0
        %1069 = vmatpush1.msra.mxu0 0.0
        %1070 = vmatprep.subr.mxu0 0.0
        %1071 = vmatpush1.msra.mxu0 0.0
        %1072 = vmatprep.subr.mxu0 0.0
        %1073 = vmatpush1.msra.mxu0 0.0
        %1074 = vmatprep.subr.mxu0 0.0
        %1075 = vmatpush1.msra.mxu0 0.0
        %1076 = vmatprep.subr.mxu0 0.0
        %1077 = vmatpush1.msra.mxu0 0.0
        %1078 = vmatprep.mubr.f32.mxu0 0.0
        %1079 = vmatmul.mubr.f32.gmra.mrb[0].mxu0 %v1012
        %v1080 = vpop.f32.mrb[0].mxu0
        %v1081 = vadd.f32 0.0, %v1080
        %v1082 = vpop.f32.mrb[0].mxu0
        %1083 = vdwg.mxu0
        %v1084 = vld [vmem:[%s887] sm:$0xff]
        %v1085 = vld [vmem:[%s887 + $0x8] sm:$0xff]
        %v1086 = vld [vmem:[%s887 + $0x10] sm:$0xff]
        %v1087 = vld [vmem:[%s887 + $0x18] sm:$0xff]
        %v1088 = vld [vmem:[%s887 + $0x20] sm:$0xff]
        %v1089 = vld [vmem:[%s887 + $0x28] sm:$0xff]
        %v1090 = vld [vmem:[%s887 + $0x30] sm:$0xff]
        %v1091 = vld [vmem:[%s887 + $0x38] sm:$0xff]
        %v1092 = vld [vmem:[%s892] sm:$0xff]
        %v1093 = vld [vmem:[%s892 + $0x8] sm:$0xff]
        %v1094 = vld [vmem:[%s905] sm:$0xff]
        %v1095 = vld [vmem:[%s905 + $0x8] sm:$0xff]
        %v1096 = vld [vmem:[%s905 + $0x10] sm:$0xff]
        %v1097 = vld [vmem:[%s905 + $0x18] sm:$0xff]
        %v1098 = vld [vmem:[%s905 + $0x20] sm:$0xff]
        %v1099 = vld [vmem:[%s905 + $0x28] sm:$0xff]
        %v1100 = vld [vmem:[%s905 + $0x30] sm:$0xff]
        %v1101 = vld [vmem:[%s905 + $0x38] sm:$0xff]
        %v1102 = vld [vmem:[%s910] sm:$0xff]
        %v1103 = vld [vmem:[%s910 + $0x8] sm:$0xff]
        %v1104 = vld [vmem:[%s914] sm:$0xff]
        %v1105 = vld [vmem:[%s900] sm:$0x7]
        %v1106 = vmul.f32 %v1092, %v1092
        %v1107 = vmul.f32 %v1093, %v1093
        %1110 = vrot.lane.b32.xlu0 %v1106, 127
        %v1111 = vpop.permute.xlu0 %1110
        %1112 = vrot.lane.b32.xlu0 %v1107, 127
        %v1113 = vpop.permute.xlu0 %1112
        %v1116 = vadd.f32 %v1106, %v1111
        %v1117 = vadd.f32 %v1107, %v1113
        %1118 = vrot.lane.b32.xlu0 %v1106, 126
        %v1119 = vpop.permute.xlu0 %1118
        %1120 = vrot.lane.b32.xlu0 %v1107, 126
        %v1121 = vpop.permute.xlu0 %1120
        %v1124 = vadd.f32 %v1116, %v1119
        %v1125 = vadd.f32 %v1117, %v1121
        %v1126 = vmul.f32 %v1105, %v1105
        %v1128 = vrot.slane %v1126, 1
        %v1130 = vadd.f32 %v1126, %v1128
        %v1131 = vrot.slane %v1126, 2
        %v1133 = vadd.f32 %v1130, %v1131
        %1135 = vset.pattern.permute.xlu0 0
        %1136 = vperm.xlu0 %1135, %v1124
        %v1137 = vpop.permute.xlu0 %1136
        %1140 = vset.pattern.permute.xlu0 0
        %1141 = vperm.xlu0 %1140, %v1125
        %v1142 = vpop.permute.xlu0 %1141
        %v1144 = vlaneseq
        %v1145 = vshrl.u32 %v1144, 7
        %v1146 = vsub.s32 0, %v1145
        %v1147 = vrot.slane %v1133, %v1146
        %v1148 = vadd.f32 %v1137, %v1147
        %v1149 = vadd.f32 %v1142, %v1147
        %vm1150 = vcmask 23552
        %v1152 = vsel %vm1150, %v1092, 0
        %v1155 = vsel %vm1150, %v1093, 0
        %vm1157 = vcmask 1042432
        %v1159 = vsel %vm1157, %v1105, 0
        %1161 = vmatprep.subr.mxu0 0.0
        %1162 = vmatpush1.msra.mxu0 %v1159
        %1163 = vmatprep.subr.mxu0 0.0
        %1164 = vmatpush1.msra.mxu0 0.0
        %1165 = vmatprep.subr.mxu0 0.0
        %1166 = vmatpush1.msra.mxu0 0.0
        %1167 = vmatprep.subr.mxu0 0.0
        %1168 = vmatpush1.msra.mxu0 0.0
        %1169 = vmatprep.subr.mxu0 0.0
        %1170 = vmatpush1.msra.mxu0 0.0
        %1171 = vmatprep.subr.mxu0 0.0
        %1172 = vmatpush1.msra.mxu0 0.0
        %1173 = vmatprep.subr.mxu0 0.0
        %1174 = vmatpush1.msra.mxu0 0.0
        %1175 = vmatprep.subr.mxu0 0.0
        %1176 = vmatpush1.msra.mxu0 0.0
        %1177 = vmatprep.subr.mxu0 0.0
        %1178 = vmatpush1.msra.mxu0 0.0
        %1179 = vmatprep.subr.mxu0 0.0
        %1180 = vmatpush1.msra.mxu0 0.0
        %1181 = vmatprep.subr.mxu0 0.0
        %1182 = vmatpush1.msra.mxu0 0.0
        %1183 = vmatprep.subr.mxu0 0.0
        %1184 = vmatpush1.msra.mxu0 0.0
        %1185 = vmatprep.subr.mxu0 0.0
        %1186 = vmatpush1.msra.mxu0 0.0
        %1187 = vmatprep.subr.mxu0 0.0
        %1188 = vmatpush1.msra.mxu0 0.0
        %1189 = vmatprep.subr.mxu0 0.0
        %1190 = vmatpush1.msra.mxu0 0.0
        %1191 = vmatprep.subr.mxu0 0.0
        %1192 = vmatpush1.msra.mxu0 0.0
        %1193 = vmatprep.subr.mxu0 0.0
        %1194 = vmatpush1.msra.mxu0 0.0
        %1195 = vmatprep.subr.mxu0 0.0
        %1196 = vmatpush1.msra.mxu0 0.0
        %1197 = vmatprep.subr.mxu0 0.0
        %1198 = vmatpush1.msra.mxu0 0.0
        %1199 = vmatprep.subr.mxu0 0.0
        %1200 = vmatpush1.msra.mxu0 0.0
        %1201 = vmatprep.subr.mxu0 0.0
        %1202 = vmatpush1.msra.mxu0 0.0
        %1203 = vmatprep.subr.mxu0 0.0
        %1204 = vmatpush1.msra.mxu0 0.0
        %1205 = vmatprep.subr.mxu0 0.0
        %1206 = vmatpush1.msra.mxu0 0.0
        %1207 = vmatprep.subr.mxu0 0.0
        %1208 = vmatpush1.msra.mxu0 0.0
        %1209 = vmatprep.subr.mxu0 0.0
        %1210 = vmatpush1.msra.mxu0 0.0
        %1211 = vmatprep.subr.mxu0 0.0
        %1212 = vmatpush1.msra.mxu0 0.0
        %1213 = vmatprep.subr.mxu0 0.0
        %1214 = vmatpush1.msra.mxu0 0.0
        %1215 = vmatprep.subr.mxu0 0.0
        %1216 = vmatpush1.msra.mxu0 0.0
        %1217 = vmatprep.subr.mxu0 0.0
        %1218 = vmatpush1.msra.mxu0 0.0
        %1219 = vmatprep.subr.mxu0 0.0
        %1220 = vmatpush1.msra.mxu0 0.0
        %1221 = vmatprep.subr.mxu0 0.0
        %1222 = vmatpush1.msra.mxu0 0.0
        %1223 = vmatprep.subr.mxu0 0.0
        %1224 = vmatpush1.msra.mxu0 0.0
        %1225 = vmatprep.mubr.f32.mxu0 0.0
        %1226 = vmatmul.mubr.f32.gmra.mrb[0].mxu0 %v1152
        %v1227 = vpop.f32.mrb[0].mxu0
        %v1228 = vadd.f32 0.0, %v1227
        %v1229 = vpop.f32.mrb[0].mxu0
        %1230 = vmatprep.mubr.f32.mxu0 0.0
        %1231 = vmatmul.mubr.f32.gmra.mrb[0].mxu0 %v1155
        %v1232 = vpop.f32.mrb[0].mxu0
        %v1233 = vadd.f32 0.0, %v1232
        %v1234 = vpop.f32.mrb[0].mxu0
        %1235 = vdwg.mxu0
        %v1236 = vmul.f32 %v1228, 2.0
        %v1237 = vmul.f32 %v1233, 2.0
        %v1238 = vsub.f32 %v1148, %v1236
        %v1239 = vsub.f32 %v1149, %v1237
        %v1240 = vmax.f32 %v1238, 0.0
        %v1241 = vmax.f32 %v1239, 0.0
        %v1242 = vadd.f32 %v1240, 1e-08
        %v1243 = vadd.f32 %v1241, 1e-08
        %v1244 = vrcp.pop %v1242
        %v1245 = vmul.f32 1.0, %v1244
        %v1246 = vrcp.pop %v1243
        %v1247 = vmul.f32 1.0, %v1246
        %v1248 = vlaneseq
        %v1249 = vand.u32 %v1248, 127
        %vm1250 = vcmask 64512
        %v1251 = vsel %vm1250, %v1240, inf
        %1252 = vmin.xlane.f32.xlu0 %v1251
        %v1253 = vpop.xlane.xlu0 %1252
        %v1254 = vsel %vm1250, %v1241, inf
        %1255 = vmin.xlane.f32.xlu0 %v1254
        %v1256 = vpop.xlane.xlu0 %1255
        %vm1257 = vcmp.le.f32.partialorder %v1240, %v1253
        %vm1258 = vcmp.le.f32.partialorder %v1241, %v1256
        %v1259 = vsel %vm1257, %v1249, 8
        %v1260 = vsel %vm1258, %v1249, 8
        %v1261 = vsel %vm1250, %v1259, 2147483647
        %v1262 = vand.u32 %v1261, 65535
        %v1263 = vshra.s32 %v1261, 16
        %v1264 = vcvt.s32.f32 %v1262
        %v1265 = vcvt.s32.f32 %v1263
        %1266 = vmin.xlane.f32.xlu0 %v1265
        %v1267 = vpop.xlane.xlu0 %1266
        %vm1268 = vcmp.eq.f32.partialorder %v1265, %v1267
        %v1269 = vsel %vm1268, %v1264, inf
        %1270 = vmin.xlane.f32.xlu0 %v1269
        %v1271 = vpop.xlane.xlu0 %1270
        %v1272 = vcvt.f32.s32 %v1271
        %v1273 = vcvt.f32.s32 %v1267
        %v1274 = vshll.u32 %v1273, 16
        %v1275 = vadd.s32 %v1274, %v1272
        %v1276 = vsel %vm1250, %v1260, 2147483647
        %v1277 = vand.u32 %v1276, 65535
        %v1278 = vshra.s32 %v1276, 16
        %v1279 = vcvt.s32.f32 %v1277
        %v1280 = vcvt.s32.f32 %v1278
        %1281 = vmin.xlane.f32.xlu0 %v1280
        %v1282 = vpop.xlane.xlu0 %1281
        %vm1283 = vcmp.eq.f32.partialorder %v1280, %v1282
        %v1284 = vsel %vm1283, %v1279, inf
        %1285 = vmin.xlane.f32.xlu0 %v1284
        %v1286 = vpop.xlane.xlu0 %1285
        %v1287 = vcvt.f32.s32 %v1286
        %v1288 = vcvt.f32.s32 %v1282
        %v1289 = vshll.u32 %v1288, 16
        %v1290 = vadd.s32 %v1289, %v1287
        %vm1291 = vcmp.eq.s32.totalorder %v1249, %v1275
        %vm1292 = vcmp.eq.s32.totalorder %v1249, %v1290
        %v1293 = vsel %vm1291, %v1245, 0.0
        %v1294 = vsel %vm1292, %v1247, 0.0
        %v1295 = vsel %vm1291, inf, %v1240
        %v1296 = vsel %vm1292, inf, %v1241
        %v1297 = vsel %vm1250, %v1295, inf
        %1298 = vmin.xlane.f32.xlu0 %v1297
        %v1299 = vpop.xlane.xlu0 %1298
        %v1300 = vsel %vm1250, %v1296, inf
        %1301 = vmin.xlane.f32.xlu0 %v1300
        %v1302 = vpop.xlane.xlu0 %1301
        %vm1303 = vcmp.le.f32.partialorder %v1295, %v1299
        %vm1304 = vcmp.le.f32.partialorder %v1296, %v1302
        %v1305 = vsel %vm1303, %v1249, 8
        %v1306 = vsel %vm1304, %v1249, 8
        %v1307 = vsel %vm1250, %v1305, 2147483647
        %v1308 = vand.u32 %v1307, 65535
        %v1309 = vshra.s32 %v1307, 16
        %v1310 = vcvt.s32.f32 %v1308
        %v1311 = vcvt.s32.f32 %v1309
        %1312 = vmin.xlane.f32.xlu0 %v1311
        %v1313 = vpop.xlane.xlu0 %1312
        %vm1314 = vcmp.eq.f32.partialorder %v1311, %v1313
        %v1315 = vsel %vm1314, %v1310, inf
        %1316 = vmin.xlane.f32.xlu0 %v1315
        %v1317 = vpop.xlane.xlu0 %1316
        %v1318 = vcvt.f32.s32 %v1317
        %v1319 = vcvt.f32.s32 %v1313
        %v1320 = vshll.u32 %v1319, 16
        %v1321 = vadd.s32 %v1320, %v1318
        %v1322 = vsel %vm1250, %v1306, 2147483647
        %v1323 = vand.u32 %v1322, 65535
        %v1324 = vshra.s32 %v1322, 16
        %v1325 = vcvt.s32.f32 %v1323
        %v1326 = vcvt.s32.f32 %v1324
        %1327 = vmin.xlane.f32.xlu0 %v1326
        %v1328 = vpop.xlane.xlu0 %1327
        %vm1329 = vcmp.eq.f32.partialorder %v1326, %v1328
        %v1330 = vsel %vm1329, %v1325, inf
        %1331 = vmin.xlane.f32.xlu0 %v1330
        %v1332 = vpop.xlane.xlu0 %1331
        %v1333 = vcvt.f32.s32 %v1332
        %v1334 = vcvt.f32.s32 %v1328
        %v1335 = vshll.u32 %v1334, 16
        %v1336 = vadd.s32 %v1335, %v1333
        %vm1337 = vcmp.eq.s32.totalorder %v1249, %v1321
        %vm1338 = vcmp.eq.s32.totalorder %v1249, %v1336
        %v1339 = vsel %vm1337, %v1245, %v1293
        %v1340 = vsel %vm1338, %v1247, %v1294
        %v1341 = vsel %vm1337, inf, %v1295
        %v1342 = vsel %vm1338, inf, %v1296
        %v1343 = vsel %vm1250, %v1341, inf
        %1344 = vmin.xlane.f32.xlu0 %v1343
        %v1345 = vpop.xlane.xlu0 %1344
        %v1346 = vsel %vm1250, %v1342, inf
        %1347 = vmin.xlane.f32.xlu0 %v1346
        %v1348 = vpop.xlane.xlu0 %1347
        %vm1349 = vcmp.le.f32.partialorder %v1341, %v1345
        %vm1350 = vcmp.le.f32.partialorder %v1342, %v1348
        %v1351 = vsel %vm1349, %v1249, 8
        %v1352 = vsel %vm1350, %v1249, 8
        %v1353 = vsel %vm1250, %v1351, 2147483647
        %v1354 = vand.u32 %v1353, 65535
        %v1355 = vshra.s32 %v1353, 16
        %v1356 = vcvt.s32.f32 %v1354
        %v1357 = vcvt.s32.f32 %v1355
        %1358 = vmin.xlane.f32.xlu0 %v1357
        %v1359 = vpop.xlane.xlu0 %1358
        %vm1360 = vcmp.eq.f32.partialorder %v1357, %v1359
        %v1361 = vsel %vm1360, %v1356, inf
        %1362 = vmin.xlane.f32.xlu0 %v1361
        %v1363 = vpop.xlane.xlu0 %1362
        %v1364 = vcvt.f32.s32 %v1363
        %v1365 = vcvt.f32.s32 %v1359
        %v1366 = vshll.u32 %v1365, 16
        %v1367 = vadd.s32 %v1366, %v1364
        %v1368 = vsel %vm1250, %v1352, 2147483647
        %v1369 = vand.u32 %v1368, 65535
        %v1370 = vshra.s32 %v1368, 16
        %v1371 = vcvt.s32.f32 %v1369
        %v1372 = vcvt.s32.f32 %v1370
        %1373 = vmin.xlane.f32.xlu0 %v1372
        %v1374 = vpop.xlane.xlu0 %1373
        %vm1375 = vcmp.eq.f32.partialorder %v1372, %v1374
        %v1376 = vsel %vm1375, %v1371, inf
        %1377 = vmin.xlane.f32.xlu0 %v1376
        %v1378 = vpop.xlane.xlu0 %1377
        %v1379 = vcvt.f32.s32 %v1378
        %v1380 = vcvt.f32.s32 %v1374
        %v1381 = vshll.u32 %v1380, 16
        %v1382 = vadd.s32 %v1381, %v1379
        %vm1383 = vcmp.eq.s32.totalorder %v1249, %v1367
        %vm1384 = vcmp.eq.s32.totalorder %v1249, %v1382
        %v1385 = vsel %vm1383, %v1245, %v1339
        %v1386 = vsel %vm1384, %v1247, %v1340
        %v1387 = vsel %vm1250, %v1385, 0.0
        %1388 = vadd.xlane.f32.xlu0 %v1387
        %v1389 = vpop.xlane.xlu0 %1388
        %v1390 = vsel %vm1250, %v1386, 0.0
        %1391 = vadd.xlane.f32.xlu0 %v1390
        %v1392 = vpop.xlane.xlu0 %1391
        %v1393 = vrcp.pop %v1389
        %v1394 = vmul.f32 %v1385, %v1393
        %v1395 = vrcp.pop %v1392
        %v1396 = vmul.f32 %v1386, %v1395
        %v1398 = vsel %vm1250, %v1394, 0
        %v1401 = vsel %vm1250, %v1396, 0
        %1403 = vmatprep.subr.mxu0 0.0
        %1404 = vmatpush1.msra.mxu0 %v1104
        %1405 = vmatprep.subr.mxu0 0.0
        %1406 = vmatpush1.msra.mxu0 0.0
        %1407 = vmatprep.subr.mxu0 0.0
        %1408 = vmatpush1.msra.mxu0 0.0
        %1409 = vmatprep.subr.mxu0 0.0
        %1410 = vmatpush1.msra.mxu0 0.0
        %1411 = vmatprep.subr.mxu0 0.0
        %1412 = vmatpush1.msra.mxu0 0.0
        %1413 = vmatprep.subr.mxu0 0.0
        %1414 = vmatpush1.msra.mxu0 0.0
        %1415 = vmatprep.subr.mxu0 0.0
        %1416 = vmatpush1.msra.mxu0 0.0
        %1417 = vmatprep.subr.mxu0 0.0
        %1418 = vmatpush1.msra.mxu0 0.0
        %1419 = vmatprep.subr.mxu0 0.0
        %1420 = vmatpush1.msra.mxu0 0.0
        %1421 = vmatprep.subr.mxu0 0.0
        %1422 = vmatpush1.msra.mxu0 0.0
        %1423 = vmatprep.subr.mxu0 0.0
        %1424 = vmatpush1.msra.mxu0 0.0
        %1425 = vmatprep.subr.mxu0 0.0
        %1426 = vmatpush1.msra.mxu0 0.0
        %1427 = vmatprep.subr.mxu0 0.0
        %1428 = vmatpush1.msra.mxu0 0.0
        %1429 = vmatprep.subr.mxu0 0.0
        %1430 = vmatpush1.msra.mxu0 0.0
        %1431 = vmatprep.subr.mxu0 0.0
        %1432 = vmatpush1.msra.mxu0 0.0
        %1433 = vmatprep.subr.mxu0 0.0
        %1434 = vmatpush1.msra.mxu0 0.0
        %1435 = vmatprep.subr.mxu0 0.0
        %1436 = vmatpush1.msra.mxu0 0.0
        %1437 = vmatprep.subr.mxu0 0.0
        %1438 = vmatpush1.msra.mxu0 0.0
        %1439 = vmatprep.subr.mxu0 0.0
        %1440 = vmatpush1.msra.mxu0 0.0
        %1441 = vmatprep.subr.mxu0 0.0
        %1442 = vmatpush1.msra.mxu0 0.0
        %1443 = vmatprep.subr.mxu0 0.0
        %1444 = vmatpush1.msra.mxu0 0.0
        %1445 = vmatprep.subr.mxu0 0.0
        %1446 = vmatpush1.msra.mxu0 0.0
        %1447 = vmatprep.subr.mxu0 0.0
        %1448 = vmatpush1.msra.mxu0 0.0
        %1449 = vmatprep.subr.mxu0 0.0
        %1450 = vmatpush1.msra.mxu0 0.0
        %1451 = vmatprep.subr.mxu0 0.0
        %1452 = vmatpush1.msra.mxu0 0.0
        %1453 = vmatprep.subr.mxu0 0.0
        %1454 = vmatpush1.msra.mxu0 0.0
        %1455 = vmatprep.subr.mxu0 0.0
        %1456 = vmatpush1.msra.mxu0 0.0
        %1457 = vmatprep.subr.mxu0 0.0
        %1458 = vmatpush1.msra.mxu0 0.0
        %1459 = vmatprep.subr.mxu0 0.0
        %1460 = vmatpush1.msra.mxu0 0.0
        %1461 = vmatprep.subr.mxu0 0.0
        %1462 = vmatpush1.msra.mxu0 0.0
        %1463 = vmatprep.subr.mxu0 0.0
        %1464 = vmatpush1.msra.mxu0 0.0
        %1465 = vmatprep.subr.mxu0 0.0
        %1466 = vmatpush1.msra.mxu0 0.0
        %1467 = vmatprep.mubr.f32.mxu0 0.0
        %1468 = vmatmul.mubr.f32.gmra.mrb[0].mxu0 %v1398
        %v1469 = vpop.f32.mrb[0].mxu0
        %v1470 = vadd.f32 0.0, %v1469
        %v1471 = vpop.f32.mrb[0].mxu0
        %1472 = vmatprep.mubr.f32.mxu0 0.0
        %1473 = vmatmul.mubr.f32.gmra.mrb[0].mxu0 %v1401
        %v1474 = vpop.f32.mrb[0].mxu0
        %v1475 = vadd.f32 0.0, %v1474
        %v1476 = vpop.f32.mrb[0].mxu0
        %1477 = vdwg.mxu0
        %v1478 = vld [vmem:[%s11] sm:$0xff]
        %v1479 = vld [vmem:[%s11 + $0x8] sm:$0xff]
        %v1480 = vld [vmem:[%s11 + $0x10] sm:$0xff]
        %v1481 = vld [vmem:[%s11 + $0x18] sm:$0xff]
        %v1482 = vld [vmem:[%s12] sm:$0xff]
        %v1483 = vld [vmem:[%s12 + $0x8] sm:$0xff]
        %v1484 = vld [vmem:[%s12 + $0x10] sm:$0xff]
        %v1485 = vld [vmem:[%s12 + $0x18] sm:$0xff]
        %v1486 = vld [vmem:[%s12 + $0x20] sm:$0xff]
        %v1487 = vld [vmem:[%s12 + $0x28] sm:$0xff]
        %v1488 = vld [vmem:[%s12 + $0x30] sm:$0xff]
        %v1489 = vld [vmem:[%s12 + $0x38] sm:$0xff]
        %v1491 = vsel %vm1010, %v1470, 0
        %v1494 = vsel %vm1010, %v1475, 0
        %1496 = vmatprep.subr.mxu0 0.0
        %1497 = vmatpush1.msra.mxu0 %v1482
        %1498 = vmatprep.subr.mxu0 0.0
        %1499 = vmatpush1.msra.mxu0 %v1483
        %1500 = vmatprep.subr.mxu0 0.0
        %1501 = vmatpush1.msra.mxu0 %v1484
        %1502 = vmatprep.subr.mxu0 0.0
        %1503 = vmatpush1.msra.mxu0 %v1485
        %1504 = vmatprep.subr.mxu0 0.0
        %1505 = vmatpush1.msra.mxu0 %v1486
        %1506 = vmatprep.subr.mxu0 0.0
        %1507 = vmatpush1.msra.mxu0 %v1487
        %1508 = vmatprep.subr.mxu0 0.0
        %1509 = vmatpush1.msra.mxu0 %v1488
        %1510 = vmatprep.subr.mxu0 0.0
        %1511 = vmatpush1.msra.mxu0 %v1489
        %1512 = vmatprep.subr.mxu0 0.0
        %1513 = vmatpush1.msra.mxu0 0.0
        %1514 = vmatprep.subr.mxu0 0.0
        %1515 = vmatpush1.msra.mxu0 0.0
        %1516 = vmatprep.subr.mxu0 0.0
        %1517 = vmatpush1.msra.mxu0 0.0
        %1518 = vmatprep.subr.mxu0 0.0
        %1519 = vmatpush1.msra.mxu0 0.0
        %1520 = vmatprep.subr.mxu0 0.0
        %1521 = vmatpush1.msra.mxu0 0.0
        %1522 = vmatprep.subr.mxu0 0.0
        %1523 = vmatpush1.msra.mxu0 0.0
        %1524 = vmatprep.subr.mxu0 0.0
        %1525 = vmatpush1.msra.mxu0 0.0
        %1526 = vmatprep.subr.mxu0 0.0
        %1527 = vmatpush1.msra.mxu0 0.0
        %1528 = vmatprep.subr.mxu0 0.0
        %1529 = vmatpush1.msra.mxu0 0.0
        %1530 = vmatprep.subr.mxu0 0.0
        %1531 = vmatpush1.msra.mxu0 0.0
        %1532 = vmatprep.subr.mxu0 0.0
        %1533 = vmatpush1.msra.mxu0 0.0
        %1534 = vmatprep.subr.mxu0 0.0
        %1535 = vmatpush1.msra.mxu0 0.0
        %1536 = vmatprep.subr.mxu0 0.0
        %1537 = vmatpush1.msra.mxu0 0.0
        %1538 = vmatprep.subr.mxu0 0.0
        %1539 = vmatpush1.msra.mxu0 0.0
        %1540 = vmatprep.subr.mxu0 0.0
        %1541 = vmatpush1.msra.mxu0 0.0
        %1542 = vmatprep.subr.mxu0 0.0
        %1543 = vmatpush1.msra.mxu0 0.0
        %1544 = vmatprep.subr.mxu0 0.0
        %1545 = vmatpush1.msra.mxu0 0.0
        %1546 = vmatprep.subr.mxu0 0.0
        %1547 = vmatpush1.msra.mxu0 0.0
        %1548 = vmatprep.subr.mxu0 0.0
        %1549 = vmatpush1.msra.mxu0 0.0
        %1550 = vmatprep.subr.mxu0 0.0
        %1551 = vmatpush1.msra.mxu0 0.0
        %1552 = vmatprep.subr.mxu0 0.0
        %1553 = vmatpush1.msra.mxu0 0.0
        %1554 = vmatprep.subr.mxu0 0.0
        %1555 = vmatpush1.msra.mxu0 0.0
        %1556 = vmatprep.subr.mxu0 0.0
        %1557 = vmatpush1.msra.mxu0 0.0
        %1558 = vmatprep.subr.mxu0 0.0
        %1559 = vmatpush1.msra.mxu0 0.0
        %1560 = vmatprep.mubr.f32.mxu0 0.0
        %1561 = vmatmul.mubr.f32.gmra.mrb[0].mxu0 %v1491
        %v1562 = vpop.f32.mrb[0].mxu0
        %v1563 = vadd.f32 0.0, %v1562
        %v1564 = vpop.f32.mrb[0].mxu0
        %1565 = vmatprep.mubr.f32.mxu0 0.0
        %1566 = vmatmul.mubr.f32.gmra.mrb[0].mxu0 %v1494
        %v1567 = vpop.f32.mrb[0].mxu0
        %v1568 = vadd.f32 0.0, %v1567
        %v1569 = vpop.f32.mrb[0].mxu0
        %1570 = vdwg.mxu0
        %vm1571 = vcmask 261120
        %v1573 = vsel %vm1571, %v1102, 0
        %v1576 = vsel %vm1571, %v1103, 0
        %1578 = vmatprep.subr.mxu0 0.0
        %1579 = vmatpush1.msra.mxu0 %v1478
        %1580 = vmatprep.subr.mxu0 0.0
        %1581 = vmatpush1.msra.mxu0 %v1479
        %1582 = vmatprep.subr.mxu0 0.0
        %1583 = vmatpush1.msra.mxu0 %v1480
        %1584 = vmatprep.subr.mxu0 0.0
        %1585 = vmatpush1.msra.mxu0 %v1481
        %1586 = vmatprep.subr.mxu0 0.0
        %1587 = vmatpush1.msra.mxu0 0.0
        %1588 = vmatprep.subr.mxu0 0.0
        %1589 = vmatpush1.msra.mxu0 0.0
        %1590 = vmatprep.subr.mxu0 0.0
        %1591 = vmatpush1.msra.mxu0 0.0
        %1592 = vmatprep.subr.mxu0 0.0
        %1593 = vmatpush1.msra.mxu0 0.0
        %1594 = vmatprep.subr.mxu0 0.0
        %1595 = vmatpush1.msra.mxu0 0.0
        %1596 = vmatprep.subr.mxu0 0.0
        %1597 = vmatpush1.msra.mxu0 0.0
        %1598 = vmatprep.subr.mxu0 0.0
        %1599 = vmatpush1.msra.mxu0 0.0
        %1600 = vmatprep.subr.mxu0 0.0
        %1601 = vmatpush1.msra.mxu0 0.0
        %1602 = vmatprep.subr.mxu0 0.0
        %1603 = vmatpush1.msra.mxu0 0.0
        %1604 = vmatprep.subr.mxu0 0.0
        %1605 = vmatpush1.msra.mxu0 0.0
        %1606 = vmatprep.subr.mxu0 0.0
        %1607 = vmatpush1.msra.mxu0 0.0
        %1608 = vmatprep.subr.mxu0 0.0
        %1609 = vmatpush1.msra.mxu0 0.0
        %1610 = vmatprep.subr.mxu0 0.0
        %1611 = vmatpush1.msra.mxu0 0.0
        %1612 = vmatprep.subr.mxu0 0.0
        %1613 = vmatpush1.msra.mxu0 0.0
        %1614 = vmatprep.subr.mxu0 0.0
        %1615 = vmatpush1.msra.mxu0 0.0
        %1616 = vmatprep.subr.mxu0 0.0
        %1617 = vmatpush1.msra.mxu0 0.0
        %1618 = vmatprep.subr.mxu0 0.0
        %1619 = vmatpush1.msra.mxu0 0.0
        %1620 = vmatprep.subr.mxu0 0.0
        %1621 = vmatpush1.msra.mxu0 0.0
        %1622 = vmatprep.subr.mxu0 0.0
        %1623 = vmatpush1.msra.mxu0 0.0
        %1624 = vmatprep.subr.mxu0 0.0
        %1625 = vmatpush1.msra.mxu0 0.0
        %1626 = vmatprep.subr.mxu0 0.0
        %1627 = vmatpush1.msra.mxu0 0.0
        %1628 = vmatprep.subr.mxu0 0.0
        %1629 = vmatpush1.msra.mxu0 0.0
        %1630 = vmatprep.subr.mxu0 0.0
        %1631 = vmatpush1.msra.mxu0 0.0
        %1632 = vmatprep.subr.mxu0 0.0
        %1633 = vmatpush1.msra.mxu0 0.0
        %1634 = vmatprep.subr.mxu0 0.0
        %1635 = vmatpush1.msra.mxu0 0.0
        %1636 = vmatprep.subr.mxu0 0.0
        %1637 = vmatpush1.msra.mxu0 0.0
        %1638 = vmatprep.subr.mxu0 0.0
        %1639 = vmatpush1.msra.mxu0 0.0
        %1640 = vmatprep.subr.mxu0 0.0
        %1641 = vmatpush1.msra.mxu0 0.0
        %1642 = vmatprep.mubr.f32.mxu0 0.0
        %1643 = vmatmul.mubr.f32.gmra.mrb[0].mxu0 %v1573
        %v1644 = vpop.f32.mrb[0].mxu0
        %v1645 = vadd.f32 %v1563, %v1644
        %v1646 = vpop.f32.mrb[0].mxu0
        %1647 = vmatprep.mubr.f32.mxu0 0.0
        %1648 = vmatmul.mubr.f32.gmra.mrb[0].mxu0 %v1576
        %v1649 = vpop.f32.mrb[0].mxu0
        %v1650 = vadd.f32 %v1568, %v1649
        %v1651 = vpop.f32.mrb[0].mxu0
        %1652 = vdwg.mxu0
        %v1653 = vld [vmem:[%s13] sm:$0x1]
        %v1655 = vlaneseq
        %v1656 = vshrl.u32 %v1655, 7
        %v1657 = vsub.s32 0, %v1656
        %v1658 = vrot.slane %v1653, %v1657
        %v1660 = vadd.f32 %v1645, %v1658
        %v1661 = vadd.f32 %v1650, %v1658
        %v1662 = vld [vmem:[%s14] sm:$0xff]
        %v1663 = vld [vmem:[%s14 + $0x8] sm:$0xff]
        %v1664 = vld [vmem:[%s14 + $0x10] sm:$0xff]
        %v1665 = vld [vmem:[%s14 + $0x18] sm:$0xff]
        %v1666 = vld [vmem:[%s15] sm:$0x1]
        %v1668 = vlaneseq
        %v1669 = vshrl.u32 %v1668, 7
        %v1670 = vsub.s32 0, %v1669
        %v1671 = vrot.slane %v1666, %v1670
        %v1674 = vsel %vm1571, %v1660, 0
        %v1677 = vsel %vm1571, %v1661, 0
        %1679 = vmatprep.subr.mxu0 0.0
        %1680 = vmatpush1.msra.mxu0 %v1662
        %1681 = vmatprep.subr.mxu0 0.0
        %1682 = vmatpush1.msra.mxu0 %v1663
        %1683 = vmatprep.subr.mxu0 0.0
        %1684 = vmatpush1.msra.mxu0 %v1664
        %1685 = vmatprep.subr.mxu0 0.0
        %1686 = vmatpush1.msra.mxu0 %v1665
        %1687 = vmatprep.subr.mxu0 0.0
        %1688 = vmatpush1.msra.mxu0 0.0
        %1689 = vmatprep.subr.mxu0 0.0
        %1690 = vmatpush1.msra.mxu0 0.0
        %1691 = vmatprep.subr.mxu0 0.0
        %1692 = vmatpush1.msra.mxu0 0.0
        %1693 = vmatprep.subr.mxu0 0.0
        %1694 = vmatpush1.msra.mxu0 0.0
        %1695 = vmatprep.subr.mxu0 0.0
        %1696 = vmatpush1.msra.mxu0 0.0
        %1697 = vmatprep.subr.mxu0 0.0
        %1698 = vmatpush1.msra.mxu0 0.0
        %1699 = vmatprep.subr.mxu0 0.0
        %1700 = vmatpush1.msra.mxu0 0.0
        %1701 = vmatprep.subr.mxu0 0.0
        %1702 = vmatpush1.msra.mxu0 0.0
        %1703 = vmatprep.subr.mxu0 0.0
        %1704 = vmatpush1.msra.mxu0 0.0
        %1705 = vmatprep.subr.mxu0 0.0
        %1706 = vmatpush1.msra.mxu0 0.0
        %1707 = vmatprep.subr.mxu0 0.0
        %1708 = vmatpush1.msra.mxu0 0.0
        %1709 = vmatprep.subr.mxu0 0.0
        %1710 = vmatpush1.msra.mxu0 0.0
        %1711 = vmatprep.subr.mxu0 0.0
        %1712 = vmatpush1.msra.mxu0 0.0
        %1713 = vmatprep.subr.mxu0 0.0
        %1714 = vmatpush1.msra.mxu0 0.0
        %1715 = vmatprep.subr.mxu0 0.0
        %1716 = vmatpush1.msra.mxu0 0.0
        %1717 = vmatprep.subr.mxu0 0.0
        %1718 = vmatpush1.msra.mxu0 0.0
        %1719 = vmatprep.subr.mxu0 0.0
        %1720 = vmatpush1.msra.mxu0 0.0
        %1721 = vmatprep.subr.mxu0 0.0
        %1722 = vmatpush1.msra.mxu0 0.0
        %1723 = vmatprep.subr.mxu0 0.0
        %1724 = vmatpush1.msra.mxu0 0.0
        %1725 = vmatprep.subr.mxu0 0.0
        %1726 = vmatpush1.msra.mxu0 0.0
        %1727 = vmatprep.subr.mxu0 0.0
        %1728 = vmatpush1.msra.mxu0 0.0
        %1729 = vmatprep.subr.mxu0 0.0
        %1730 = vmatpush1.msra.mxu0 0.0
        %1731 = vmatprep.subr.mxu0 0.0
        %1732 = vmatpush1.msra.mxu0 0.0
        %1733 = vmatprep.subr.mxu0 0.0
        %1734 = vmatpush1.msra.mxu0 0.0
        %1735 = vmatprep.subr.mxu0 0.0
        %1736 = vmatpush1.msra.mxu0 0.0
        %1737 = vmatprep.subr.mxu0 0.0
        %1738 = vmatpush1.msra.mxu0 0.0
        %1739 = vmatprep.subr.mxu0 0.0
        %1740 = vmatpush1.msra.mxu0 0.0
        %1741 = vmatprep.subr.mxu0 0.0
        %1742 = vmatpush1.msra.mxu0 0.0
        %1743 = vmatprep.mubr.f32.mxu0 0.0
        %1744 = vmatmul.mubr.f32.gmra.mrb[0].mxu0 %v1674
        %v1745 = vpop.f32.mrb[0].mxu0
        %v1746 = vadd.f32 %v1671, %v1745
        %v1747 = vpop.f32.mrb[0].mxu0
        %1748 = vmatprep.mubr.f32.mxu0 0.0
        %1749 = vmatmul.mubr.f32.gmra.mrb[0].mxu0 %v1677
        %v1750 = vpop.f32.mrb[0].mxu0
        %v1751 = vadd.f32 %v1671, %v1750
        %v1752 = vpop.f32.mrb[0].mxu0
        %1753 = vdwg.mxu0
        %v1754 = vld [vmem:[%s896] sm:$0x7]
        %v1755 = vmul.f32 %v1084, %v1084
        %v1756 = vmul.f32 %v1085, %v1085
        %v1757 = vmul.f32 %v1086, %v1086
        %v1758 = vmul.f32 %v1087, %v1087
        %v1759 = vmul.f32 %v1088, %v1088
        %v1760 = vmul.f32 %v1089, %v1089
        %v1761 = vmul.f32 %v1090, %v1090
        %v1762 = vmul.f32 %v1091, %v1091
        %1771 = vrot.lane.b32.xlu0 %v1755, 127
        %v1772 = vpop.permute.xlu0 %1771
        %1773 = vrot.lane.b32.xlu0 %v1756, 127
        %v1774 = vpop.permute.xlu0 %1773
        %1775 = vrot.lane.b32.xlu0 %v1757, 127
        %v1776 = vpop.permute.xlu0 %1775
        %1777 = vrot.lane.b32.xlu0 %v1758, 127
        %v1778 = vpop.permute.xlu0 %1777
        %1779 = vrot.lane.b32.xlu0 %v1759, 127
        %v1780 = vpop.permute.xlu0 %1779
        %1781 = vrot.lane.b32.xlu0 %v1760, 127
        %v1782 = vpop.permute.xlu0 %1781
        %1783 = vrot.lane.b32.xlu0 %v1761, 127
        %v1784 = vpop.permute.xlu0 %1783
        %1785 = vrot.lane.b32.xlu0 %v1762, 127
        %v1786 = vpop.permute.xlu0 %1785
        %v1795 = vadd.f32 %v1755, %v1772
        %v1796 = vadd.f32 %v1756, %v1774
        %v1797 = vadd.f32 %v1757, %v1776
        %v1798 = vadd.f32 %v1758, %v1778
        %v1799 = vadd.f32 %v1759, %v1780
        %v1800 = vadd.f32 %v1760, %v1782
        %v1801 = vadd.f32 %v1761, %v1784
        %v1802 = vadd.f32 %v1762, %v1786
        %1803 = vrot.lane.b32.xlu0 %v1755, 126
        %v1804 = vpop.permute.xlu0 %1803
        %1805 = vrot.lane.b32.xlu0 %v1756, 126
        %v1806 = vpop.permute.xlu0 %1805
        %1807 = vrot.lane.b32.xlu0 %v1757, 126
        %v1808 = vpop.permute.xlu0 %1807
        %1809 = vrot.lane.b32.xlu0 %v1758, 126
        %v1810 = vpop.permute.xlu0 %1809
        %1811 = vrot.lane.b32.xlu0 %v1759, 126
        %v1812 = vpop.permute.xlu0 %1811
        %1813 = vrot.lane.b32.xlu0 %v1760, 126
        %v1814 = vpop.permute.xlu0 %1813
        %1815 = vrot.lane.b32.xlu0 %v1761, 126
        %v1816 = vpop.permute.xlu0 %1815
        %1817 = vrot.lane.b32.xlu0 %v1762, 126
        %v1818 = vpop.permute.xlu0 %1817
        %v1827 = vadd.f32 %v1795, %v1804
        %v1828 = vadd.f32 %v1796, %v1806
        %v1829 = vadd.f32 %v1797, %v1808
        %v1830 = vadd.f32 %v1798, %v1810
        %v1831 = vadd.f32 %v1799, %v1812
        %v1832 = vadd.f32 %v1800, %v1814
        %v1833 = vadd.f32 %v1801, %v1816
        %v1834 = vadd.f32 %v1802, %v1818
        %v1835 = vmul.f32 %v1754, %v1754
        %v1837 = vrot.slane %v1835, 1
        %v1839 = vadd.f32 %v1835, %v1837
        %v1840 = vrot.slane %v1835, 2
        %v1842 = vadd.f32 %v1839, %v1840
        %1844 = vset.pattern.permute.xlu0 0
        %1845 = vperm.xlu0 %1844, %v1827
        %v1846 = vpop.permute.xlu0 %1845
        %1849 = vset.pattern.permute.xlu0 0
        %1850 = vperm.xlu0 %1849, %v1828
        %v1851 = vpop.permute.xlu0 %1850
        %1854 = vset.pattern.permute.xlu0 0
        %1855 = vperm.xlu0 %1854, %v1829
        %v1856 = vpop.permute.xlu0 %1855
        %1859 = vset.pattern.permute.xlu0 0
        %1860 = vperm.xlu0 %1859, %v1830
        %v1861 = vpop.permute.xlu0 %1860
        %1864 = vset.pattern.permute.xlu0 0
        %1865 = vperm.xlu0 %1864, %v1831
        %v1866 = vpop.permute.xlu0 %1865
        %1869 = vset.pattern.permute.xlu0 0
        %1870 = vperm.xlu0 %1869, %v1832
        %v1871 = vpop.permute.xlu0 %1870
        %1874 = vset.pattern.permute.xlu0 0
        %1875 = vperm.xlu0 %1874, %v1833
        %v1876 = vpop.permute.xlu0 %1875
        %1879 = vset.pattern.permute.xlu0 0
        %1880 = vperm.xlu0 %1879, %v1834
        %v1881 = vpop.permute.xlu0 %1880
        %v1883 = vlaneseq
        %v1884 = vshrl.u32 %v1883, 7
        %v1885 = vsub.s32 0, %v1884
        %v1886 = vrot.slane %v1842, %v1885
        %v1887 = vadd.f32 %v1846, %v1886
        %v1888 = vadd.f32 %v1851, %v1886
        %v1889 = vadd.f32 %v1856, %v1886
        %v1890 = vadd.f32 %v1861, %v1886
        %v1891 = vadd.f32 %v1866, %v1886
        %v1892 = vadd.f32 %v1871, %v1886
        %v1893 = vadd.f32 %v1876, %v1886
        %v1894 = vadd.f32 %v1881, %v1886
        %v1896 = vsel %vm1150, %v1084, 0
        %v1899 = vsel %vm1150, %v1085, 0
        %v1902 = vsel %vm1150, %v1086, 0
        %v1905 = vsel %vm1150, %v1087, 0
        %v1908 = vsel %vm1150, %v1088, 0
        %v1911 = vsel %vm1150, %v1089, 0
        %v1914 = vsel %vm1150, %v1090, 0
        %v1917 = vsel %vm1150, %v1091, 0
        %v1920 = vsel %vm1157, %v1754, 0
        %1922 = vmatprep.subr.mxu0 0.0
        %1923 = vmatpush1.msra.mxu0 %v1920
        %1924 = vmatprep.subr.mxu0 0.0
        %1925 = vmatpush1.msra.mxu0 0.0
        %1926 = vmatprep.subr.mxu0 0.0
        %1927 = vmatpush1.msra.mxu0 0.0
        %1928 = vmatprep.subr.mxu0 0.0
        %1929 = vmatpush1.msra.mxu0 0.0
        %1930 = vmatprep.subr.mxu0 0.0
        %1931 = vmatpush1.msra.mxu0 0.0
        %1932 = vmatprep.subr.mxu0 0.0
        %1933 = vmatpush1.msra.mxu0 0.0
        %1934 = vmatprep.subr.mxu0 0.0
        %1935 = vmatpush1.msra.mxu0 0.0
        %1936 = vmatprep.subr.mxu0 0.0
        %1937 = vmatpush1.msra.mxu0 0.0
        %1938 = vmatprep.subr.mxu0 0.0
        %1939 = vmatpush1.msra.mxu0 0.0
        %1940 = vmatprep.subr.mxu0 0.0
        %1941 = vmatpush1.msra.mxu0 0.0
        %1942 = vmatprep.subr.mxu0 0.0
        %1943 = vmatpush1.msra.mxu0 0.0
        %1944 = vmatprep.subr.mxu0 0.0
        %1945 = vmatpush1.msra.mxu0 0.0
        %1946 = vmatprep.subr.mxu0 0.0
        %1947 = vmatpush1.msra.mxu0 0.0
        %1948 = vmatprep.subr.mxu0 0.0
        %1949 = vmatpush1.msra.mxu0 0.0
        %1950 = vmatprep.subr.mxu0 0.0
        %1951 = vmatpush1.msra.mxu0 0.0
        %1952 = vmatprep.subr.mxu0 0.0
        %1953 = vmatpush1.msra.mxu0 0.0
        %1954 = vmatprep.subr.mxu0 0.0
        %1955 = vmatpush1.msra.mxu0 0.0
        %1956 = vmatprep.subr.mxu0 0.0
        %1957 = vmatpush1.msra.mxu0 0.0
        %1958 = vmatprep.subr.mxu0 0.0
        %1959 = vmatpush1.msra.mxu0 0.0
        %1960 = vmatprep.subr.mxu0 0.0
        %1961 = vmatpush1.msra.mxu0 0.0
        %1962 = vmatprep.subr.mxu0 0.0
        %1963 = vmatpush1.msra.mxu0 0.0
        %1964 = vmatprep.subr.mxu0 0.0
        %1965 = vmatpush1.msra.mxu0 0.0
        %1966 = vmatprep.subr.mxu0 0.0
        %1967 = vmatpush1.msra.mxu0 0.0
        %1968 = vmatprep.subr.mxu0 0.0
        %1969 = vmatpush1.msra.mxu0 0.0
        %1970 = vmatprep.subr.mxu0 0.0
        %1971 = vmatpush1.msra.mxu0 0.0
        %1972 = vmatprep.subr.mxu0 0.0
        %1973 = vmatpush1.msra.mxu0 0.0
        %1974 = vmatprep.subr.mxu0 0.0
        %1975 = vmatpush1.msra.mxu0 0.0
        %1976 = vmatprep.subr.mxu0 0.0
        %1977 = vmatpush1.msra.mxu0 0.0
        %1978 = vmatprep.subr.mxu0 0.0
        %1979 = vmatpush1.msra.mxu0 0.0
        %1980 = vmatprep.subr.mxu0 0.0
        %1981 = vmatpush1.msra.mxu0 0.0
        %1982 = vmatprep.subr.mxu0 0.0
        %1983 = vmatpush1.msra.mxu0 0.0
        %1984 = vmatprep.subr.mxu0 0.0
        %1985 = vmatpush1.msra.mxu0 0.0
        %1986 = vmatprep.mubr.f32.mxu0 0.0
        %1987 = vmatmul.mubr.f32.gmra.mrb[0].mxu0 %v1896
        %v1988 = vpop.f32.mrb[0].mxu0
        %v1989 = vadd.f32 0.0, %v1988
        %v1990 = vpop.f32.mrb[0].mxu0
        %1991 = vmatprep.mubr.f32.mxu0 0.0
        %1992 = vmatmul.mubr.f32.gmra.mrb[0].mxu0 %v1899
        %v1993 = vpop.f32.mrb[0].mxu0
        %v1994 = vadd.f32 0.0, %v1993
        %v1995 = vpop.f32.mrb[0].mxu0
        %1996 = vmatprep.mubr.f32.mxu0 0.0
        %1997 = vmatmul.mubr.f32.gmra.mrb[0].mxu0 %v1902
        %v1998 = vpop.f32.mrb[0].mxu0
        %v1999 = vadd.f32 0.0, %v1998
        %v2000 = vpop.f32.mrb[0].mxu0
        %2001 = vmatprep.mubr.f32.mxu0 0.0
        %2002 = vmatmul.mubr.f32.gmra.mrb[0].mxu0 %v1905
        %v2003 = vpop.f32.mrb[0].mxu0
        %v2004 = vadd.f32 0.0, %v2003
        %v2005 = vpop.f32.mrb[0].mxu0
        %2006 = vmatprep.mubr.f32.mxu0 0.0
        %2007 = vmatmul.mubr.f32.gmra.mrb[0].mxu0 %v1908
        %v2008 = vpop.f32.mrb[0].mxu0
        %v2009 = vadd.f32 0.0, %v2008
        %v2010 = vpop.f32.mrb[0].mxu0
        %2011 = vmatprep.mubr.f32.mxu0 0.0
        %2012 = vmatmul.mubr.f32.gmra.mrb[0].mxu0 %v1911
        %v2013 = vpop.f32.mrb[0].mxu0
        %v2014 = vadd.f32 0.0, %v2013
        %v2015 = vpop.f32.mrb[0].mxu0
        %2016 = vmatprep.mubr.f32.mxu0 0.0
        %2017 = vmatmul.mubr.f32.gmra.mrb[0].mxu0 %v1914
        %v2018 = vpop.f32.mrb[0].mxu0
        %v2019 = vadd.f32 0.0, %v2018
        %v2020 = vpop.f32.mrb[0].mxu0
        %2021 = vmatprep.mubr.f32.mxu0 0.0
        %2022 = vmatmul.mubr.f32.gmra.mrb[0].mxu0 %v1917
        %v2023 = vpop.f32.mrb[0].mxu0
        %v2024 = vadd.f32 0.0, %v2023
        %v2025 = vpop.f32.mrb[0].mxu0
        %2026 = vdwg.mxu0
        %v2027 = vmul.f32 %v1989, 2.0
        %v2028 = vmul.f32 %v1994, 2.0
        %v2029 = vmul.f32 %v1999, 2.0
        %v2030 = vmul.f32 %v2004, 2.0
        %v2031 = vmul.f32 %v2009, 2.0
        %v2032 = vmul.f32 %v2014, 2.0
        %v2033 = vmul.f32 %v2019, 2.0
        %v2034 = vmul.f32 %v2024, 2.0
        %v2035 = vsub.f32 %v1887, %v2027
        %v2036 = vsub.f32 %v1888, %v2028
        %v2037 = vsub.f32 %v1889, %v2029
        %v2038 = vsub.f32 %v1890, %v2030
        %v2039 = vsub.f32 %v1891, %v2031
        %v2040 = vsub.f32 %v1892, %v2032
        %v2041 = vsub.f32 %v1893, %v2033
        %v2042 = vsub.f32 %v1894, %v2034
        %v2043 = vmax.f32 %v2035, 0.0
        %v2044 = vmax.f32 %v2036, 0.0
        %v2045 = vmax.f32 %v2037, 0.0
        %v2046 = vmax.f32 %v2038, 0.0
        %v2047 = vmax.f32 %v2039, 0.0
        %v2048 = vmax.f32 %v2040, 0.0
        %v2049 = vmax.f32 %v2041, 0.0
        %v2050 = vmax.f32 %v2042, 0.0
        %v2051 = vadd.f32 %v2043, 1e-08
        %v2052 = vadd.f32 %v2044, 1e-08
        %v2053 = vadd.f32 %v2045, 1e-08
        %v2054 = vadd.f32 %v2046, 1e-08
        %v2055 = vadd.f32 %v2047, 1e-08
        %v2056 = vadd.f32 %v2048, 1e-08
        %v2057 = vadd.f32 %v2049, 1e-08
        %v2058 = vadd.f32 %v2050, 1e-08
        %v2059 = vrcp.pop %v2051
        %v2060 = vmul.f32 1.0, %v2059
        %v2061 = vrcp.pop %v2052
        %v2062 = vmul.f32 1.0, %v2061
        %v2063 = vrcp.pop %v2053
        %v2064 = vmul.f32 1.0, %v2063
        %v2065 = vrcp.pop %v2054
        %v2066 = vmul.f32 1.0, %v2065
        %v2067 = vrcp.pop %v2055
        %v2068 = vmul.f32 1.0, %v2067
        %v2069 = vrcp.pop %v2056
        %v2070 = vmul.f32 1.0, %v2069
        %v2071 = vrcp.pop %v2057
        %v2072 = vmul.f32 1.0, %v2071
        %v2073 = vrcp.pop %v2058
        %v2074 = vmul.f32 1.0, %v2073
        %v2075 = vsel %vm919, %v2043, inf
        %2076 = vmin.xlane.f32.xlu0 %v2075
        %v2077 = vpop.xlane.xlu0 %2076
        %v2078 = vsel %vm919, %v2044, inf
        %2079 = vmin.xlane.f32.xlu0 %v2078
        %v2080 = vpop.xlane.xlu0 %2079
        %v2081 = vsel %vm919, %v2045, inf
        %2082 = vmin.xlane.f32.xlu0 %v2081
        %v2083 = vpop.xlane.xlu0 %2082
        %v2084 = vsel %vm919, %v2046, inf
        %2085 = vmin.xlane.f32.xlu0 %v2084
        %v2086 = vpop.xlane.xlu0 %2085
        %v2087 = vsel %vm919, %v2047, inf
        %2088 = vmin.xlane.f32.xlu0 %v2087
        %v2089 = vpop.xlane.xlu0 %2088
        %v2090 = vsel %vm919, %v2048, inf
        %2091 = vmin.xlane.f32.xlu0 %v2090
        %v2092 = vpop.xlane.xlu0 %2091
        %v2093 = vsel %vm919, %v2049, inf
        %2094 = vmin.xlane.f32.xlu0 %v2093
        %v2095 = vpop.xlane.xlu0 %2094
        %v2096 = vsel %vm919, %v2050, inf
        %2097 = vmin.xlane.f32.xlu0 %v2096
        %v2098 = vpop.xlane.xlu0 %2097
        %vm2099 = vcmp.le.f32.partialorder %v2043, %v2077
        %vm2100 = vcmp.le.f32.partialorder %v2044, %v2080
        %vm2101 = vcmp.le.f32.partialorder %v2045, %v2083
        %vm2102 = vcmp.le.f32.partialorder %v2046, %v2086
        %vm2103 = vcmp.le.f32.partialorder %v2047, %v2089
        %vm2104 = vcmp.le.f32.partialorder %v2048, %v2092
        %vm2105 = vcmp.le.f32.partialorder %v2049, %v2095
        %vm2106 = vcmp.le.f32.partialorder %v2050, %v2098
        %v2107 = vsel %vm2099, %v1249, 16
        %v2108 = vsel %vm2100, %v1249, 16
        %v2109 = vsel %vm2101, %v1249, 16
        %v2110 = vsel %vm2102, %v1249, 16
        %v2111 = vsel %vm2103, %v1249, 16
        %v2112 = vsel %vm2104, %v1249, 16
        %v2113 = vsel %vm2105, %v1249, 16
        %v2114 = vsel %vm2106, %v1249, 16
        %v2115 = vsel %vm919, %v2107, 2147483647
        %v2116 = vand.u32 %v2115, 65535
        %v2117 = vshra.s32 %v2115, 16
        %v2118 = vcvt.s32.f32 %v2116
        %v2119 = vcvt.s32.f32 %v2117
        %2120 = vmin.xlane.f32.xlu0 %v2119
        %v2121 = vpop.xlane.xlu0 %2120
        %vm2122 = vcmp.eq.f32.partialorder %v2119, %v2121
        %v2123 = vsel %vm2122, %v2118, inf
        %2124 = vmin.xlane.f32.xlu0 %v2123
        %v2125 = vpop.xlane.xlu0 %2124
        %v2126 = vcvt.f32.s32 %v2125
        %v2127 = vcvt.f32.s32 %v2121
        %v2128 = vshll.u32 %v2127, 16
        %v2129 = vadd.s32 %v2128, %v2126
        %v2130 = vsel %vm919, %v2108, 2147483647
        %v2131 = vand.u32 %v2130, 65535
        %v2132 = vshra.s32 %v2130, 16
        %v2133 = vcvt.s32.f32 %v2131
        %v2134 = vcvt.s32.f32 %v2132
        %2135 = vmin.xlane.f32.xlu0 %v2134
        %v2136 = vpop.xlane.xlu0 %2135
        %vm2137 = vcmp.eq.f32.partialorder %v2134, %v2136
        %v2138 = vsel %vm2137, %v2133, inf
        %2139 = vmin.xlane.f32.xlu0 %v2138
        %v2140 = vpop.xlane.xlu0 %2139
        %v2141 = vcvt.f32.s32 %v2140
        %v2142 = vcvt.f32.s32 %v2136
        %v2143 = vshll.u32 %v2142, 16
        %v2144 = vadd.s32 %v2143, %v2141
        %v2145 = vsel %vm919, %v2109, 2147483647
        %v2146 = vand.u32 %v2145, 65535
        %v2147 = vshra.s32 %v2145, 16
        %v2148 = vcvt.s32.f32 %v2146
        %v2149 = vcvt.s32.f32 %v2147
        %2150 = vmin.xlane.f32.xlu0 %v2149
        %v2151 = vpop.xlane.xlu0 %2150
        %vm2152 = vcmp.eq.f32.partialorder %v2149, %v2151
        %v2153 = vsel %vm2152, %v2148, inf
        %2154 = vmin.xlane.f32.xlu0 %v2153
        %v2155 = vpop.xlane.xlu0 %2154
        %v2156 = vcvt.f32.s32 %v2155
        %v2157 = vcvt.f32.s32 %v2151
        %v2158 = vshll.u32 %v2157, 16
        %v2159 = vadd.s32 %v2158, %v2156
        %v2160 = vsel %vm919, %v2110, 2147483647
        %v2161 = vand.u32 %v2160, 65535
        %v2162 = vshra.s32 %v2160, 16
        %v2163 = vcvt.s32.f32 %v2161
        %v2164 = vcvt.s32.f32 %v2162
        %2165 = vmin.xlane.f32.xlu0 %v2164
        %v2166 = vpop.xlane.xlu0 %2165
        %vm2167 = vcmp.eq.f32.partialorder %v2164, %v2166
        %v2168 = vsel %vm2167, %v2163, inf
        %2169 = vmin.xlane.f32.xlu0 %v2168
        %v2170 = vpop.xlane.xlu0 %2169
        %v2171 = vcvt.f32.s32 %v2170
        %v2172 = vcvt.f32.s32 %v2166
        %v2173 = vshll.u32 %v2172, 16
        %v2174 = vadd.s32 %v2173, %v2171
        %v2175 = vsel %vm919, %v2111, 2147483647
        %v2176 = vand.u32 %v2175, 65535
        %v2177 = vshra.s32 %v2175, 16
        %v2178 = vcvt.s32.f32 %v2176
        %v2179 = vcvt.s32.f32 %v2177
        %2180 = vmin.xlane.f32.xlu0 %v2179
        %v2181 = vpop.xlane.xlu0 %2180
        %vm2182 = vcmp.eq.f32.partialorder %v2179, %v2181
        %v2183 = vsel %vm2182, %v2178, inf
        %2184 = vmin.xlane.f32.xlu0 %v2183
        %v2185 = vpop.xlane.xlu0 %2184
        %v2186 = vcvt.f32.s32 %v2185
        %v2187 = vcvt.f32.s32 %v2181
        %v2188 = vshll.u32 %v2187, 16
        %v2189 = vadd.s32 %v2188, %v2186
        %v2190 = vsel %vm919, %v2112, 2147483647
        %v2191 = vand.u32 %v2190, 65535
        %v2192 = vshra.s32 %v2190, 16
        %v2193 = vcvt.s32.f32 %v2191
        %v2194 = vcvt.s32.f32 %v2192
        %2195 = vmin.xlane.f32.xlu0 %v2194
        %v2196 = vpop.xlane.xlu0 %2195
        %vm2197 = vcmp.eq.f32.partialorder %v2194, %v2196
        %v2198 = vsel %vm2197, %v2193, inf
        %2199 = vmin.xlane.f32.xlu0 %v2198
        %v2200 = vpop.xlane.xlu0 %2199
        %v2201 = vcvt.f32.s32 %v2200
        %v2202 = vcvt.f32.s32 %v2196
        %v2203 = vshll.u32 %v2202, 16
        %v2204 = vadd.s32 %v2203, %v2201
        %v2205 = vsel %vm919, %v2113, 2147483647
        %v2206 = vand.u32 %v2205, 65535
        %v2207 = vshra.s32 %v2205, 16
        %v2208 = vcvt.s32.f32 %v2206
        %v2209 = vcvt.s32.f32 %v2207
        %2210 = vmin.xlane.f32.xlu0 %v2209
        %v2211 = vpop.xlane.xlu0 %2210
        %vm2212 = vcmp.eq.f32.partialorder %v2209, %v2211
        %v2213 = vsel %vm2212, %v2208, inf
        %2214 = vmin.xlane.f32.xlu0 %v2213
        %v2215 = vpop.xlane.xlu0 %2214
        %v2216 = vcvt.f32.s32 %v2215
        %v2217 = vcvt.f32.s32 %v2211
        %v2218 = vshll.u32 %v2217, 16
        %v2219 = vadd.s32 %v2218, %v2216
        %v2220 = vsel %vm919, %v2114, 2147483647
        %v2221 = vand.u32 %v2220, 65535
        %v2222 = vshra.s32 %v2220, 16
        %v2223 = vcvt.s32.f32 %v2221
        %v2224 = vcvt.s32.f32 %v2222
        %2225 = vmin.xlane.f32.xlu0 %v2224
        %v2226 = vpop.xlane.xlu0 %2225
        %vm2227 = vcmp.eq.f32.partialorder %v2224, %v2226
        %v2228 = vsel %vm2227, %v2223, inf
        %2229 = vmin.xlane.f32.xlu0 %v2228
        %v2230 = vpop.xlane.xlu0 %2229
        %v2231 = vcvt.f32.s32 %v2230
        %v2232 = vcvt.f32.s32 %v2226
        %v2233 = vshll.u32 %v2232, 16
        %v2234 = vadd.s32 %v2233, %v2231
        %vm2235 = vcmp.eq.s32.totalorder %v1249, %v2129
        %vm2236 = vcmp.eq.s32.totalorder %v1249, %v2144
        %vm2237 = vcmp.eq.s32.totalorder %v1249, %v2159
        %vm2238 = vcmp.eq.s32.totalorder %v1249, %v2174
        %vm2239 = vcmp.eq.s32.totalorder %v1249, %v2189
        %vm2240 = vcmp.eq.s32.totalorder %v1249, %v2204
        %vm2241 = vcmp.eq.s32.totalorder %v1249, %v2219
        %vm2242 = vcmp.eq.s32.totalorder %v1249, %v2234
        %v2243 = vsel %vm2235, %v2060, 0.0
        %v2244 = vsel %vm2236, %v2062, 0.0
        %v2245 = vsel %vm2237, %v2064, 0.0
        %v2246 = vsel %vm2238, %v2066, 0.0
        %v2247 = vsel %vm2239, %v2068, 0.0
        %v2248 = vsel %vm2240, %v2070, 0.0
        %v2249 = vsel %vm2241, %v2072, 0.0
        %v2250 = vsel %vm2242, %v2074, 0.0
        %v2251 = vsel %vm2235, inf, %v2043
        %v2252 = vsel %vm2236, inf, %v2044
        %v2253 = vsel %vm2237, inf, %v2045
        %v2254 = vsel %vm2238, inf, %v2046
        %v2255 = vsel %vm2239, inf, %v2047
        %v2256 = vsel %vm2240, inf, %v2048
        %v2257 = vsel %vm2241, inf, %v2049
        %v2258 = vsel %vm2242, inf, %v2050
        %v2259 = vsel %vm919, %v2251, inf
        %2260 = vmin.xlane.f32.xlu0 %v2259
        %v2261 = vpop.xlane.xlu0 %2260
        %v2262 = vsel %vm919, %v2252, inf
        %2263 = vmin.xlane.f32.xlu0 %v2262
        %v2264 = vpop.xlane.xlu0 %2263
        %v2265 = vsel %vm919, %v2253, inf
        %2266 = vmin.xlane.f32.xlu0 %v2265
        %v2267 = vpop.xlane.xlu0 %2266
        %v2268 = vsel %vm919, %v2254, inf
        %2269 = vmin.xlane.f32.xlu0 %v2268
        %v2270 = vpop.xlane.xlu0 %2269
        %v2271 = vsel %vm919, %v2255, inf
        %2272 = vmin.xlane.f32.xlu0 %v2271
        %v2273 = vpop.xlane.xlu0 %2272
        %v2274 = vsel %vm919, %v2256, inf
        %2275 = vmin.xlane.f32.xlu0 %v2274
        %v2276 = vpop.xlane.xlu0 %2275
        %v2277 = vsel %vm919, %v2257, inf
        %2278 = vmin.xlane.f32.xlu0 %v2277
        %v2279 = vpop.xlane.xlu0 %2278
        %v2280 = vsel %vm919, %v2258, inf
        %2281 = vmin.xlane.f32.xlu0 %v2280
        %v2282 = vpop.xlane.xlu0 %2281
        %vm2283 = vcmp.le.f32.partialorder %v2251, %v2261
        %vm2284 = vcmp.le.f32.partialorder %v2252, %v2264
        %vm2285 = vcmp.le.f32.partialorder %v2253, %v2267
        %vm2286 = vcmp.le.f32.partialorder %v2254, %v2270
        %vm2287 = vcmp.le.f32.partialorder %v2255, %v2273
        %vm2288 = vcmp.le.f32.partialorder %v2256, %v2276
        %vm2289 = vcmp.le.f32.partialorder %v2257, %v2279
        %vm2290 = vcmp.le.f32.partialorder %v2258, %v2282
        %v2291 = vsel %vm2283, %v1249, 16
        %v2292 = vsel %vm2284, %v1249, 16
        %v2293 = vsel %vm2285, %v1249, 16
        %v2294 = vsel %vm2286, %v1249, 16
        %v2295 = vsel %vm2287, %v1249, 16
        %v2296 = vsel %vm2288, %v1249, 16
        %v2297 = vsel %vm2289, %v1249, 16
        %v2298 = vsel %vm2290, %v1249, 16
        %v2299 = vsel %vm919, %v2291, 2147483647
        %v2300 = vand.u32 %v2299, 65535
        %v2301 = vshra.s32 %v2299, 16
        %v2302 = vcvt.s32.f32 %v2300
        %v2303 = vcvt.s32.f32 %v2301
        %2304 = vmin.xlane.f32.xlu0 %v2303
        %v2305 = vpop.xlane.xlu0 %2304
        %vm2306 = vcmp.eq.f32.partialorder %v2303, %v2305
        %v2307 = vsel %vm2306, %v2302, inf
        %2308 = vmin.xlane.f32.xlu0 %v2307
        %v2309 = vpop.xlane.xlu0 %2308
        %v2310 = vcvt.f32.s32 %v2309
        %v2311 = vcvt.f32.s32 %v2305
        %v2312 = vshll.u32 %v2311, 16
        %v2313 = vadd.s32 %v2312, %v2310
        %v2314 = vsel %vm919, %v2292, 2147483647
        %v2315 = vand.u32 %v2314, 65535
        %v2316 = vshra.s32 %v2314, 16
        %v2317 = vcvt.s32.f32 %v2315
        %v2318 = vcvt.s32.f32 %v2316
        %2319 = vmin.xlane.f32.xlu0 %v2318
        %v2320 = vpop.xlane.xlu0 %2319
        %vm2321 = vcmp.eq.f32.partialorder %v2318, %v2320
        %v2322 = vsel %vm2321, %v2317, inf
        %2323 = vmin.xlane.f32.xlu0 %v2322
        %v2324 = vpop.xlane.xlu0 %2323
        %v2325 = vcvt.f32.s32 %v2324
        %v2326 = vcvt.f32.s32 %v2320
        %v2327 = vshll.u32 %v2326, 16
        %v2328 = vadd.s32 %v2327, %v2325
        %v2329 = vsel %vm919, %v2293, 2147483647
        %v2330 = vand.u32 %v2329, 65535
        %v2331 = vshra.s32 %v2329, 16
        %v2332 = vcvt.s32.f32 %v2330
        %v2333 = vcvt.s32.f32 %v2331
        %2334 = vmin.xlane.f32.xlu0 %v2333
        %v2335 = vpop.xlane.xlu0 %2334
        %vm2336 = vcmp.eq.f32.partialorder %v2333, %v2335
        %v2337 = vsel %vm2336, %v2332, inf
        %2338 = vmin.xlane.f32.xlu0 %v2337
        %v2339 = vpop.xlane.xlu0 %2338
        %v2340 = vcvt.f32.s32 %v2339
        %v2341 = vcvt.f32.s32 %v2335
        %v2342 = vshll.u32 %v2341, 16
        %v2343 = vadd.s32 %v2342, %v2340
        %v2344 = vsel %vm919, %v2294, 2147483647
        %v2345 = vand.u32 %v2344, 65535
        %v2346 = vshra.s32 %v2344, 16
        %v2347 = vcvt.s32.f32 %v2345
        %v2348 = vcvt.s32.f32 %v2346
        %2349 = vmin.xlane.f32.xlu0 %v2348
        %v2350 = vpop.xlane.xlu0 %2349
        %vm2351 = vcmp.eq.f32.partialorder %v2348, %v2350
        %v2352 = vsel %vm2351, %v2347, inf
        %2353 = vmin.xlane.f32.xlu0 %v2352
        %v2354 = vpop.xlane.xlu0 %2353
        %v2355 = vcvt.f32.s32 %v2354
        %v2356 = vcvt.f32.s32 %v2350
        %v2357 = vshll.u32 %v2356, 16
        %v2358 = vadd.s32 %v2357, %v2355
        %v2359 = vsel %vm919, %v2295, 2147483647
        %v2360 = vand.u32 %v2359, 65535
        %v2361 = vshra.s32 %v2359, 16
        %v2362 = vcvt.s32.f32 %v2360
        %v2363 = vcvt.s32.f32 %v2361
        %2364 = vmin.xlane.f32.xlu0 %v2363
        %v2365 = vpop.xlane.xlu0 %2364
        %vm2366 = vcmp.eq.f32.partialorder %v2363, %v2365
        %v2367 = vsel %vm2366, %v2362, inf
        %2368 = vmin.xlane.f32.xlu0 %v2367
        %v2369 = vpop.xlane.xlu0 %2368
        %v2370 = vcvt.f32.s32 %v2369
        %v2371 = vcvt.f32.s32 %v2365
        %v2372 = vshll.u32 %v2371, 16
        %v2373 = vadd.s32 %v2372, %v2370
        %v2374 = vsel %vm919, %v2296, 2147483647
        %v2375 = vand.u32 %v2374, 65535
        %v2376 = vshra.s32 %v2374, 16
        %v2377 = vcvt.s32.f32 %v2375
        %v2378 = vcvt.s32.f32 %v2376
        %2379 = vmin.xlane.f32.xlu0 %v2378
        %v2380 = vpop.xlane.xlu0 %2379
        %vm2381 = vcmp.eq.f32.partialorder %v2378, %v2380
        %v2382 = vsel %vm2381, %v2377, inf
        %2383 = vmin.xlane.f32.xlu0 %v2382
        %v2384 = vpop.xlane.xlu0 %2383
        %v2385 = vcvt.f32.s32 %v2384
        %v2386 = vcvt.f32.s32 %v2380
        %v2387 = vshll.u32 %v2386, 16
        %v2388 = vadd.s32 %v2387, %v2385
        %v2389 = vsel %vm919, %v2297, 2147483647
        %v2390 = vand.u32 %v2389, 65535
        %v2391 = vshra.s32 %v2389, 16
        %v2392 = vcvt.s32.f32 %v2390
        %v2393 = vcvt.s32.f32 %v2391
        %2394 = vmin.xlane.f32.xlu0 %v2393
        %v2395 = vpop.xlane.xlu0 %2394
        %vm2396 = vcmp.eq.f32.partialorder %v2393, %v2395
        %v2397 = vsel %vm2396, %v2392, inf
        %2398 = vmin.xlane.f32.xlu0 %v2397
        %v2399 = vpop.xlane.xlu0 %2398
        %v2400 = vcvt.f32.s32 %v2399
        %v2401 = vcvt.f32.s32 %v2395
        %v2402 = vshll.u32 %v2401, 16
        %v2403 = vadd.s32 %v2402, %v2400
        %v2404 = vsel %vm919, %v2298, 2147483647
        %v2405 = vand.u32 %v2404, 65535
        %v2406 = vshra.s32 %v2404, 16
        %v2407 = vcvt.s32.f32 %v2405
        %v2408 = vcvt.s32.f32 %v2406
        %2409 = vmin.xlane.f32.xlu0 %v2408
        %v2410 = vpop.xlane.xlu0 %2409
        %vm2411 = vcmp.eq.f32.partialorder %v2408, %v2410
        %v2412 = vsel %vm2411, %v2407, inf
        %2413 = vmin.xlane.f32.xlu0 %v2412
        %v2414 = vpop.xlane.xlu0 %2413
        %v2415 = vcvt.f32.s32 %v2414
        %v2416 = vcvt.f32.s32 %v2410
        %v2417 = vshll.u32 %v2416, 16
        %v2418 = vadd.s32 %v2417, %v2415
        %vm2419 = vcmp.eq.s32.totalorder %v1249, %v2313
        %vm2420 = vcmp.eq.s32.totalorder %v1249, %v2328
        %vm2421 = vcmp.eq.s32.totalorder %v1249, %v2343
        %vm2422 = vcmp.eq.s32.totalorder %v1249, %v2358
        %vm2423 = vcmp.eq.s32.totalorder %v1249, %v2373
        %vm2424 = vcmp.eq.s32.totalorder %v1249, %v2388
        %vm2425 = vcmp.eq.s32.totalorder %v1249, %v2403
        %vm2426 = vcmp.eq.s32.totalorder %v1249, %v2418
        %v2427 = vsel %vm2419, %v2060, %v2243
        %v2428 = vsel %vm2420, %v2062, %v2244
        %v2429 = vsel %vm2421, %v2064, %v2245
        %v2430 = vsel %vm2422, %v2066, %v2246
        %v2431 = vsel %vm2423, %v2068, %v2247
        %v2432 = vsel %vm2424, %v2070, %v2248
        %v2433 = vsel %vm2425, %v2072, %v2249
        %v2434 = vsel %vm2426, %v2074, %v2250
        %v2435 = vsel %vm2419, inf, %v2251
        %v2436 = vsel %vm2420, inf, %v2252
        %v2437 = vsel %vm2421, inf, %v2253
        %v2438 = vsel %vm2422, inf, %v2254
        %v2439 = vsel %vm2423, inf, %v2255
        %v2440 = vsel %vm2424, inf, %v2256
        %v2441 = vsel %vm2425, inf, %v2257
        %v2442 = vsel %vm2426, inf, %v2258
        %v2443 = vsel %vm919, %v2435, inf
        %2444 = vmin.xlane.f32.xlu0 %v2443
        %v2445 = vpop.xlane.xlu0 %2444
        %v2446 = vsel %vm919, %v2436, inf
        %2447 = vmin.xlane.f32.xlu0 %v2446
        %v2448 = vpop.xlane.xlu0 %2447
        %v2449 = vsel %vm919, %v2437, inf
        %2450 = vmin.xlane.f32.xlu0 %v2449
        %v2451 = vpop.xlane.xlu0 %2450
        %v2452 = vsel %vm919, %v2438, inf
        %2453 = vmin.xlane.f32.xlu0 %v2452
        %v2454 = vpop.xlane.xlu0 %2453
        %v2455 = vsel %vm919, %v2439, inf
        %2456 = vmin.xlane.f32.xlu0 %v2455
        %v2457 = vpop.xlane.xlu0 %2456
        %v2458 = vsel %vm919, %v2440, inf
        %2459 = vmin.xlane.f32.xlu0 %v2458
        %v2460 = vpop.xlane.xlu0 %2459
        %v2461 = vsel %vm919, %v2441, inf
        %2462 = vmin.xlane.f32.xlu0 %v2461
        %v2463 = vpop.xlane.xlu0 %2462
        %v2464 = vsel %vm919, %v2442, inf
        %2465 = vmin.xlane.f32.xlu0 %v2464
        %v2466 = vpop.xlane.xlu0 %2465
        %vm2467 = vcmp.le.f32.partialorder %v2435, %v2445
        %vm2468 = vcmp.le.f32.partialorder %v2436, %v2448
        %vm2469 = vcmp.le.f32.partialorder %v2437, %v2451
        %vm2470 = vcmp.le.f32.partialorder %v2438, %v2454
        %vm2471 = vcmp.le.f32.partialorder %v2439, %v2457
        %vm2472 = vcmp.le.f32.partialorder %v2440, %v2460
        %vm2473 = vcmp.le.f32.partialorder %v2441, %v2463
        %vm2474 = vcmp.le.f32.partialorder %v2442, %v2466
        %v2475 = vsel %vm2467, %v1249, 16
        %v2476 = vsel %vm2468, %v1249, 16
        %v2477 = vsel %vm2469, %v1249, 16
        %v2478 = vsel %vm2470, %v1249, 16
        %v2479 = vsel %vm2471, %v1249, 16
        %v2480 = vsel %vm2472, %v1249, 16
        %v2481 = vsel %vm2473, %v1249, 16
        %v2482 = vsel %vm2474, %v1249, 16
        %v2483 = vsel %vm919, %v2475, 2147483647
        %v2484 = vand.u32 %v2483, 65535
        %v2485 = vshra.s32 %v2483, 16
        %v2486 = vcvt.s32.f32 %v2484
        %v2487 = vcvt.s32.f32 %v2485
        %2488 = vmin.xlane.f32.xlu0 %v2487
        %v2489 = vpop.xlane.xlu0 %2488
        %vm2490 = vcmp.eq.f32.partialorder %v2487, %v2489
        %v2491 = vsel %vm2490, %v2486, inf
        %2492 = vmin.xlane.f32.xlu0 %v2491
        %v2493 = vpop.xlane.xlu0 %2492
        %v2494 = vcvt.f32.s32 %v2493
        %v2495 = vcvt.f32.s32 %v2489
        %v2496 = vshll.u32 %v2495, 16
        %v2497 = vadd.s32 %v2496, %v2494
        %v2498 = vsel %vm919, %v2476, 2147483647
        %v2499 = vand.u32 %v2498, 65535
        %v2500 = vshra.s32 %v2498, 16
        %v2501 = vcvt.s32.f32 %v2499
        %v2502 = vcvt.s32.f32 %v2500
        %2503 = vmin.xlane.f32.xlu0 %v2502
        %v2504 = vpop.xlane.xlu0 %2503
        %vm2505 = vcmp.eq.f32.partialorder %v2502, %v2504
        %v2506 = vsel %vm2505, %v2501, inf
        %2507 = vmin.xlane.f32.xlu0 %v2506
        %v2508 = vpop.xlane.xlu0 %2507
        %v2509 = vcvt.f32.s32 %v2508
        %v2510 = vcvt.f32.s32 %v2504
        %v2511 = vshll.u32 %v2510, 16
        %v2512 = vadd.s32 %v2511, %v2509
        %v2513 = vsel %vm919, %v2477, 2147483647
        %v2514 = vand.u32 %v2513, 65535
        %v2515 = vshra.s32 %v2513, 16
        %v2516 = vcvt.s32.f32 %v2514
        %v2517 = vcvt.s32.f32 %v2515
        %2518 = vmin.xlane.f32.xlu0 %v2517
        %v2519 = vpop.xlane.xlu0 %2518
        %vm2520 = vcmp.eq.f32.partialorder %v2517, %v2519
        %v2521 = vsel %vm2520, %v2516, inf
        %2522 = vmin.xlane.f32.xlu0 %v2521
        %v2523 = vpop.xlane.xlu0 %2522
        %v2524 = vcvt.f32.s32 %v2523
        %v2525 = vcvt.f32.s32 %v2519
        %v2526 = vshll.u32 %v2525, 16
        %v2527 = vadd.s32 %v2526, %v2524
        %v2528 = vsel %vm919, %v2478, 2147483647
        %v2529 = vand.u32 %v2528, 65535
        %v2530 = vshra.s32 %v2528, 16
        %v2531 = vcvt.s32.f32 %v2529
        %v2532 = vcvt.s32.f32 %v2530
        %2533 = vmin.xlane.f32.xlu0 %v2532
        %v2534 = vpop.xlane.xlu0 %2533
        %vm2535 = vcmp.eq.f32.partialorder %v2532, %v2534
        %v2536 = vsel %vm2535, %v2531, inf
        %2537 = vmin.xlane.f32.xlu0 %v2536
        %v2538 = vpop.xlane.xlu0 %2537
        %v2539 = vcvt.f32.s32 %v2538
        %v2540 = vcvt.f32.s32 %v2534
        %v2541 = vshll.u32 %v2540, 16
        %v2542 = vadd.s32 %v2541, %v2539
        %v2543 = vsel %vm919, %v2479, 2147483647
        %v2544 = vand.u32 %v2543, 65535
        %v2545 = vshra.s32 %v2543, 16
        %v2546 = vcvt.s32.f32 %v2544
        %v2547 = vcvt.s32.f32 %v2545
        %2548 = vmin.xlane.f32.xlu0 %v2547
        %v2549 = vpop.xlane.xlu0 %2548
        %vm2550 = vcmp.eq.f32.partialorder %v2547, %v2549
        %v2551 = vsel %vm2550, %v2546, inf
        %2552 = vmin.xlane.f32.xlu0 %v2551
        %v2553 = vpop.xlane.xlu0 %2552
        %v2554 = vcvt.f32.s32 %v2553
        %v2555 = vcvt.f32.s32 %v2549
        %v2556 = vshll.u32 %v2555, 16
        %v2557 = vadd.s32 %v2556, %v2554
        %v2558 = vsel %vm919, %v2480, 2147483647
        %v2559 = vand.u32 %v2558, 65535
        %v2560 = vshra.s32 %v2558, 16
        %v2561 = vcvt.s32.f32 %v2559
        %v2562 = vcvt.s32.f32 %v2560
        %2563 = vmin.xlane.f32.xlu0 %v2562
        %v2564 = vpop.xlane.xlu0 %2563
        %vm2565 = vcmp.eq.f32.partialorder %v2562, %v2564
        %v2566 = vsel %vm2565, %v2561, inf
        %2567 = vmin.xlane.f32.xlu0 %v2566
        %v2568 = vpop.xlane.xlu0 %2567
        %v2569 = vcvt.f32.s32 %v2568
        %v2570 = vcvt.f32.s32 %v2564
        %v2571 = vshll.u32 %v2570, 16
        %v2572 = vadd.s32 %v2571, %v2569
        %v2573 = vsel %vm919, %v2481, 2147483647
        %v2574 = vand.u32 %v2573, 65535
        %v2575 = vshra.s32 %v2573, 16
        %v2576 = vcvt.s32.f32 %v2574
        %v2577 = vcvt.s32.f32 %v2575
        %2578 = vmin.xlane.f32.xlu0 %v2577
        %v2579 = vpop.xlane.xlu0 %2578
        %vm2580 = vcmp.eq.f32.partialorder %v2577, %v2579
        %v2581 = vsel %vm2580, %v2576, inf
        %2582 = vmin.xlane.f32.xlu0 %v2581
        %v2583 = vpop.xlane.xlu0 %2582
        %v2584 = vcvt.f32.s32 %v2583
        %v2585 = vcvt.f32.s32 %v2579
        %v2586 = vshll.u32 %v2585, 16
        %v2587 = vadd.s32 %v2586, %v2584
        %v2588 = vsel %vm919, %v2482, 2147483647
        %v2589 = vand.u32 %v2588, 65535
        %v2590 = vshra.s32 %v2588, 16
        %v2591 = vcvt.s32.f32 %v2589
        %v2592 = vcvt.s32.f32 %v2590
        %2593 = vmin.xlane.f32.xlu0 %v2592
        %v2594 = vpop.xlane.xlu0 %2593
        %vm2595 = vcmp.eq.f32.partialorder %v2592, %v2594
        %v2596 = vsel %vm2595, %v2591, inf
        %2597 = vmin.xlane.f32.xlu0 %v2596
        %v2598 = vpop.xlane.xlu0 %2597
        %v2599 = vcvt.f32.s32 %v2598
        %v2600 = vcvt.f32.s32 %v2594
        %v2601 = vshll.u32 %v2600, 16
        %v2602 = vadd.s32 %v2601, %v2599
        %vm2603 = vcmp.eq.s32.totalorder %v1249, %v2497
        %vm2604 = vcmp.eq.s32.totalorder %v1249, %v2512
        %vm2605 = vcmp.eq.s32.totalorder %v1249, %v2527
        %vm2606 = vcmp.eq.s32.totalorder %v1249, %v2542
        %vm2607 = vcmp.eq.s32.totalorder %v1249, %v2557
        %vm2608 = vcmp.eq.s32.totalorder %v1249, %v2572
        %vm2609 = vcmp.eq.s32.totalorder %v1249, %v2587
        %vm2610 = vcmp.eq.s32.totalorder %v1249, %v2602
        %v2611 = vsel %vm2603, %v2060, %v2427
        %v2612 = vsel %vm2604, %v2062, %v2428
        %v2613 = vsel %vm2605, %v2064, %v2429
        %v2614 = vsel %vm2606, %v2066, %v2430
        %v2615 = vsel %vm2607, %v2068, %v2431
        %v2616 = vsel %vm2608, %v2070, %v2432
        %v2617 = vsel %vm2609, %v2072, %v2433
        %v2618 = vsel %vm2610, %v2074, %v2434
        %v2619 = vsel %vm919, %v2611, 0.0
        %2620 = vadd.xlane.f32.xlu0 %v2619
        %v2621 = vpop.xlane.xlu0 %2620
        %v2622 = vsel %vm919, %v2612, 0.0
        %2623 = vadd.xlane.f32.xlu0 %v2622
        %v2624 = vpop.xlane.xlu0 %2623
        %v2625 = vsel %vm919, %v2613, 0.0
        %2626 = vadd.xlane.f32.xlu0 %v2625
        %v2627 = vpop.xlane.xlu0 %2626
        %v2628 = vsel %vm919, %v2614, 0.0
        %2629 = vadd.xlane.f32.xlu0 %v2628
        %v2630 = vpop.xlane.xlu0 %2629
        %v2631 = vsel %vm919, %v2615, 0.0
        %2632 = vadd.xlane.f32.xlu0 %v2631
        %v2633 = vpop.xlane.xlu0 %2632
        %v2634 = vsel %vm919, %v2616, 0.0
        %2635 = vadd.xlane.f32.xlu0 %v2634
        %v2636 = vpop.xlane.xlu0 %2635
        %v2637 = vsel %vm919, %v2617, 0.0
        %2638 = vadd.xlane.f32.xlu0 %v2637
        %v2639 = vpop.xlane.xlu0 %2638
        %v2640 = vsel %vm919, %v2618, 0.0
        %2641 = vadd.xlane.f32.xlu0 %v2640
        %v2642 = vpop.xlane.xlu0 %2641
        %v2643 = vrcp.pop %v2621
        %v2644 = vmul.f32 %v2611, %v2643
        %v2645 = vrcp.pop %v2624
        %v2646 = vmul.f32 %v2612, %v2645
        %v2647 = vrcp.pop %v2627
        %v2648 = vmul.f32 %v2613, %v2647
        %v2649 = vrcp.pop %v2630
        %v2650 = vmul.f32 %v2614, %v2649
        %v2651 = vrcp.pop %v2633
        %v2652 = vmul.f32 %v2615, %v2651
        %v2653 = vrcp.pop %v2636
        %v2654 = vmul.f32 %v2616, %v2653
        %v2655 = vrcp.pop %v2639
        %v2656 = vmul.f32 %v2617, %v2655
        %v2657 = vrcp.pop %v2642
        %v2658 = vmul.f32 %v2618, %v2657
        %v2660 = vsel %vm919, %v2644, 0
        %v2663 = vsel %vm919, %v2646, 0
        %v2666 = vsel %vm919, %v2648, 0
        %v2669 = vsel %vm919, %v2650, 0
        %v2672 = vsel %vm919, %v2652, 0
        %v2675 = vsel %vm919, %v2654, 0
        %v2678 = vsel %vm919, %v2656, 0
        %v2681 = vsel %vm919, %v2658, 0
        %2683 = vmatprep.subr.mxu0 0.0
        %2684 = vmatpush1.msra.mxu0 %v1746
        %2685 = vmatprep.subr.mxu0 0.0
        %2686 = vmatpush1.msra.mxu0 %v1751
        %2687 = vmatprep.subr.mxu0 0.0
        %2688 = vmatpush1.msra.mxu0 0.0
        %2689 = vmatprep.subr.mxu0 0.0
        %2690 = vmatpush1.msra.mxu0 0.0
        %2691 = vmatprep.subr.mxu0 0.0
        %2692 = vmatpush1.msra.mxu0 0.0
        %2693 = vmatprep.subr.mxu0 0.0
        %2694 = vmatpush1.msra.mxu0 0.0
        %2695 = vmatprep.subr.mxu0 0.0
        %2696 = vmatpush1.msra.mxu0 0.0
        %2697 = vmatprep.subr.mxu0 0.0
        %2698 = vmatpush1.msra.mxu0 0.0
        %2699 = vmatprep.subr.mxu0 0.0
        %2700 = vmatpush1.msra.mxu0 0.0
        %2701 = vmatprep.subr.mxu0 0.0
        %2702 = vmatpush1.msra.mxu0 0.0
        %2703 = vmatprep.subr.mxu0 0.0
        %2704 = vmatpush1.msra.mxu0 0.0
        %2705 = vmatprep.subr.mxu0 0.0
        %2706 = vmatpush1.msra.mxu0 0.0
        %2707 = vmatprep.subr.mxu0 0.0
        %2708 = vmatpush1.msra.mxu0 0.0
        %2709 = vmatprep.subr.mxu0 0.0
        %2710 = vmatpush1.msra.mxu0 0.0
        %2711 = vmatprep.subr.mxu0 0.0
        %2712 = vmatpush1.msra.mxu0 0.0
        %2713 = vmatprep.subr.mxu0 0.0
        %2714 = vmatpush1.msra.mxu0 0.0
        %2715 = vmatprep.subr.mxu0 0.0
        %2716 = vmatpush1.msra.mxu0 0.0
        %2717 = vmatprep.subr.mxu0 0.0
        %2718 = vmatpush1.msra.mxu0 0.0
        %2719 = vmatprep.subr.mxu0 0.0
        %2720 = vmatpush1.msra.mxu0 0.0
        %2721 = vmatprep.subr.mxu0 0.0
        %2722 = vmatpush1.msra.mxu0 0.0
        %2723 = vmatprep.subr.mxu0 0.0
        %2724 = vmatpush1.msra.mxu0 0.0
        %2725 = vmatprep.subr.mxu0 0.0
        %2726 = vmatpush1.msra.mxu0 0.0
        %2727 = vmatprep.subr.mxu0 0.0
        %2728 = vmatpush1.msra.mxu0 0.0
        %2729 = vmatprep.subr.mxu0 0.0
        %2730 = vmatpush1.msra.mxu0 0.0
        %2731 = vmatprep.subr.mxu0 0.0
        %2732 = vmatpush1.msra.mxu0 0.0
        %2733 = vmatprep.subr.mxu0 0.0
        %2734 = vmatpush1.msra.mxu0 0.0
        %2735 = vmatprep.subr.mxu0 0.0
        %2736 = vmatpush1.msra.mxu0 0.0
        %2737 = vmatprep.subr.mxu0 0.0
        %2738 = vmatpush1.msra.mxu0 0.0
        %2739 = vmatprep.subr.mxu0 0.0
        %2740 = vmatpush1.msra.mxu0 0.0
        %2741 = vmatprep.subr.mxu0 0.0
        %2742 = vmatpush1.msra.mxu0 0.0
        %2743 = vmatprep.subr.mxu0 0.0
        %2744 = vmatpush1.msra.mxu0 0.0
        %2745 = vmatprep.subr.mxu0 0.0
        %2746 = vmatpush1.msra.mxu0 0.0
        %2747 = vmatprep.mubr.f32.mxu0 0.0
        %2748 = vmatmul.mubr.f32.gmra.mrb[0].mxu0 %v2660
        %v2749 = vpop.f32.mrb[0].mxu0
        %v2750 = vadd.f32 0.0, %v2749
        %v2751 = vpop.f32.mrb[0].mxu0
        %2752 = vmatprep.mubr.f32.mxu0 0.0
        %2753 = vmatmul.mubr.f32.gmra.mrb[0].mxu0 %v2663
        %v2754 = vpop.f32.mrb[0].mxu0
        %v2755 = vadd.f32 0.0, %v2754
        %v2756 = vpop.f32.mrb[0].mxu0
        %2757 = vmatprep.mubr.f32.mxu0 0.0
        %2758 = vmatmul.mubr.f32.gmra.mrb[0].mxu0 %v2666
        %v2759 = vpop.f32.mrb[0].mxu0
        %v2760 = vadd.f32 0.0, %v2759
        %v2761 = vpop.f32.mrb[0].mxu0
        %2762 = vmatprep.mubr.f32.mxu0 0.0
        %2763 = vmatmul.mubr.f32.gmra.mrb[0].mxu0 %v2669
        %v2764 = vpop.f32.mrb[0].mxu0
        %v2765 = vadd.f32 0.0, %v2764
        %v2766 = vpop.f32.mrb[0].mxu0
        %2767 = vmatprep.mubr.f32.mxu0 0.0
        %2768 = vmatmul.mubr.f32.gmra.mrb[0].mxu0 %v2672
        %v2769 = vpop.f32.mrb[0].mxu0
        %v2770 = vadd.f32 0.0, %v2769
        %v2771 = vpop.f32.mrb[0].mxu0
        %2772 = vmatprep.mubr.f32.mxu0 0.0
        %2773 = vmatmul.mubr.f32.gmra.mrb[0].mxu0 %v2675
        %v2774 = vpop.f32.mrb[0].mxu0
        %v2775 = vadd.f32 0.0, %v2774
        %v2776 = vpop.f32.mrb[0].mxu0
        %2777 = vmatprep.mubr.f32.mxu0 0.0
        %2778 = vmatmul.mubr.f32.gmra.mrb[0].mxu0 %v2678
        %v2779 = vpop.f32.mrb[0].mxu0
        %v2780 = vadd.f32 0.0, %v2779
        %v2781 = vpop.f32.mrb[0].mxu0
        %2782 = vmatprep.mubr.f32.mxu0 0.0
        %2783 = vmatmul.mubr.f32.gmra.mrb[0].mxu0 %v2681
        %v2784 = vpop.f32.mrb[0].mxu0
        %v2785 = vadd.f32 0.0, %v2784
        %v2786 = vpop.f32.mrb[0].mxu0
        %2787 = vdwg.mxu0
        %v2788 = vld [vmem:[%s16] sm:$0xff]
        %v2789 = vld [vmem:[%s16 + $0x8] sm:$0xff]
        %v2790 = vld [vmem:[%s16 + $0x10] sm:$0xff]
        %v2791 = vld [vmem:[%s16 + $0x18] sm:$0xff]
        %v2792 = vld [vmem:[%s17] sm:$0xff]
        %v2793 = vld [vmem:[%s17 + $0x8] sm:$0xff]
        %v2794 = vld [vmem:[%s17 + $0x10] sm:$0xff]
        %v2795 = vld [vmem:[%s17 + $0x18] sm:$0xff]
        %v2797 = vsel %vm1571, %v2750, 0
        %v2800 = vsel %vm1571, %v2755, 0
        %v2803 = vsel %vm1571, %v2760, 0
        %v2806 = vsel %vm1571, %v2765, 0
        %v2809 = vsel %vm1571, %v2770, 0
        %v2812 = vsel %vm1571, %v2775, 0
        %v2815 = vsel %vm1571, %v2780, 0
        %v2818 = vsel %vm1571, %v2785, 0
        %2820 = vmatprep.subr.mxu0 0.0
        %2821 = vmatpush1.msra.mxu0 %v2792
        %2822 = vmatprep.subr.mxu0 0.0
        %2823 = vmatpush1.msra.mxu0 %v2793
        %2824 = vmatprep.subr.mxu0 0.0
        %2825 = vmatpush1.msra.mxu0 %v2794
        %2826 = vmatprep.subr.mxu0 0.0
        %2827 = vmatpush1.msra.mxu0 %v2795
        %2828 = vmatprep.subr.mxu0 0.0
        %2829 = vmatpush1.msra.mxu0 0.0
        %2830 = vmatprep.subr.mxu0 0.0
        %2831 = vmatpush1.msra.mxu0 0.0
        %2832 = vmatprep.subr.mxu0 0.0
        %2833 = vmatpush1.msra.mxu0 0.0
        %2834 = vmatprep.subr.mxu0 0.0
        %2835 = vmatpush1.msra.mxu0 0.0
        %2836 = vmatprep.subr.mxu0 0.0
        %2837 = vmatpush1.msra.mxu0 0.0
        %2838 = vmatprep.subr.mxu0 0.0
        %2839 = vmatpush1.msra.mxu0 0.0
        %2840 = vmatprep.subr.mxu0 0.0
        %2841 = vmatpush1.msra.mxu0 0.0
        %2842 = vmatprep.subr.mxu0 0.0
        %2843 = vmatpush1.msra.mxu0 0.0
        %2844 = vmatprep.subr.mxu0 0.0
        %2845 = vmatpush1.msra.mxu0 0.0
        %2846 = vmatprep.subr.mxu0 0.0
        %2847 = vmatpush1.msra.mxu0 0.0
        %2848 = vmatprep.subr.mxu0 0.0
        %2849 = vmatpush1.msra.mxu0 0.0
        %2850 = vmatprep.subr.mxu0 0.0
        %2851 = vmatpush1.msra.mxu0 0.0
        %2852 = vmatprep.subr.mxu0 0.0
        %2853 = vmatpush1.msra.mxu0 0.0
        %2854 = vmatprep.subr.mxu0 0.0
        %2855 = vmatpush1.msra.mxu0 0.0
        %2856 = vmatprep.subr.mxu0 0.0
        %2857 = vmatpush1.msra.mxu0 0.0
        %2858 = vmatprep.subr.mxu0 0.0
        %2859 = vmatpush1.msra.mxu0 0.0
        %2860 = vmatprep.subr.mxu0 0.0
        %2861 = vmatpush1.msra.mxu0 0.0
        %2862 = vmatprep.subr.mxu0 0.0
        %2863 = vmatpush1.msra.mxu0 0.0
        %2864 = vmatprep.subr.mxu0 0.0
        %2865 = vmatpush1.msra.mxu0 0.0
        %2866 = vmatprep.subr.mxu0 0.0
        %2867 = vmatpush1.msra.mxu0 0.0
        %2868 = vmatprep.subr.mxu0 0.0
        %2869 = vmatpush1.msra.mxu0 0.0
        %2870 = vmatprep.subr.mxu0 0.0
        %2871 = vmatpush1.msra.mxu0 0.0
        %2872 = vmatprep.subr.mxu0 0.0
        %2873 = vmatpush1.msra.mxu0 0.0
        %2874 = vmatprep.subr.mxu0 0.0
        %2875 = vmatpush1.msra.mxu0 0.0
        %2876 = vmatprep.subr.mxu0 0.0
        %2877 = vmatpush1.msra.mxu0 0.0
        %2878 = vmatprep.subr.mxu0 0.0
        %2879 = vmatpush1.msra.mxu0 0.0
        %2880 = vmatprep.subr.mxu0 0.0
        %2881 = vmatpush1.msra.mxu0 0.0
        %2882 = vmatprep.subr.mxu0 0.0
        %2883 = vmatpush1.msra.mxu0 0.0
        %2884 = vmatprep.mubr.f32.mxu0 0.0
        %2885 = vmatmul.mubr.f32.gmra.mrb[0].mxu0 %v2797
        %v2886 = vpop.f32.mrb[0].mxu0
        %v2887 = vadd.f32 0.0, %v2886
        %v2888 = vpop.f32.mrb[0].mxu0
        %2889 = vmatprep.mubr.f32.mxu0 0.0
        %2890 = vmatmul.mubr.f32.gmra.mrb[0].mxu0 %v2800
        %v2891 = vpop.f32.mrb[0].mxu0
        %v2892 = vadd.f32 0.0, %v2891
        %v2893 = vpop.f32.mrb[0].mxu0
        %2894 = vmatprep.mubr.f32.mxu0 0.0
        %2895 = vmatmul.mubr.f32.gmra.mrb[0].mxu0 %v2803
        %v2896 = vpop.f32.mrb[0].mxu0
        %v2897 = vadd.f32 0.0, %v2896
        %v2898 = vpop.f32.mrb[0].mxu0
        %2899 = vmatprep.mubr.f32.mxu0 0.0
        %2900 = vmatmul.mubr.f32.gmra.mrb[0].mxu0 %v2806
        %v2901 = vpop.f32.mrb[0].mxu0
        %v2902 = vadd.f32 0.0, %v2901
        %v2903 = vpop.f32.mrb[0].mxu0
        %2904 = vmatprep.mubr.f32.mxu0 0.0
        %2905 = vmatmul.mubr.f32.gmra.mrb[0].mxu0 %v2809
        %v2906 = vpop.f32.mrb[0].mxu0
        %v2907 = vadd.f32 0.0, %v2906
        %v2908 = vpop.f32.mrb[0].mxu0
        %2909 = vmatprep.mubr.f32.mxu0 0.0
        %2910 = vmatmul.mubr.f32.gmra.mrb[0].mxu0 %v2812
        %v2911 = vpop.f32.mrb[0].mxu0
        %v2912 = vadd.f32 0.0, %v2911
        %v2913 = vpop.f32.mrb[0].mxu0
        %2914 = vmatprep.mubr.f32.mxu0 0.0
        %2915 = vmatmul.mubr.f32.gmra.mrb[0].mxu0 %v2815
        %v2916 = vpop.f32.mrb[0].mxu0
        %v2917 = vadd.f32 0.0, %v2916
        %v2918 = vpop.f32.mrb[0].mxu0
        %2919 = vmatprep.mubr.f32.mxu0 0.0
        %2920 = vmatmul.mubr.f32.gmra.mrb[0].mxu0 %v2818
        %v2921 = vpop.f32.mrb[0].mxu0
        %v2922 = vadd.f32 0.0, %v2921
        %v2923 = vpop.f32.mrb[0].mxu0
        %2924 = vdwg.mxu0
        %v2926 = vsel %vm1571, %v1094, 0
        %v2929 = vsel %vm1571, %v1095, 0
        %v2932 = vsel %vm1571, %v1096, 0
        %v2935 = vsel %vm1571, %v1097, 0
        %v2938 = vsel %vm1571, %v1098, 0
        %v2941 = vsel %vm1571, %v1099, 0
        %v2944 = vsel %vm1571, %v1100, 0
        %v2947 = vsel %vm1571, %v1101, 0
        %2949 = vmatprep.subr.mxu0 0.0
        %2950 = vmatpush1.msra.mxu0 %v2788
        %2951 = vmatprep.subr.mxu0 0.0
        %2952 = vmatpush1.msra.mxu0 %v2789
        %2953 = vmatprep.subr.mxu0 0.0
        %2954 = vmatpush1.msra.mxu0 %v2790
        %2955 = vmatprep.subr.mxu0 0.0
        %2956 = vmatpush1.msra.mxu0 %v2791
        %2957 = vmatprep.subr.mxu0 0.0
        %2958 = vmatpush1.msra.mxu0 0.0
        %2959 = vmatprep.subr.mxu0 0.0
        %2960 = vmatpush1.msra.mxu0 0.0
        %2961 = vmatprep.subr.mxu0 0.0
        %2962 = vmatpush1.msra.mxu0 0.0
        %2963 = vmatprep.subr.mxu0 0.0
        %2964 = vmatpush1.msra.mxu0 0.0
        %2965 = vmatprep.subr.mxu0 0.0
        %2966 = vmatpush1.msra.mxu0 0.0
        %2967 = vmatprep.subr.mxu0 0.0
        %2968 = vmatpush1.msra.mxu0 0.0
        %2969 = vmatprep.subr.mxu0 0.0
        %2970 = vmatpush1.msra.mxu0 0.0
        %2971 = vmatprep.subr.mxu0 0.0
        %2972 = vmatpush1.msra.mxu0 0.0
        %2973 = vmatprep.subr.mxu0 0.0
        %2974 = vmatpush1.msra.mxu0 0.0
        %2975 = vmatprep.subr.mxu0 0.0
        %2976 = vmatpush1.msra.mxu0 0.0
        %2977 = vmatprep.subr.mxu0 0.0
        %2978 = vmatpush1.msra.mxu0 0.0
        %2979 = vmatprep.subr.mxu0 0.0
        %2980 = vmatpush1.msra.mxu0 0.0
        %2981 = vmatprep.subr.mxu0 0.0
        %2982 = vmatpush1.msra.mxu0 0.0
        %2983 = vmatprep.subr.mxu0 0.0
        %2984 = vmatpush1.msra.mxu0 0.0
        %2985 = vmatprep.subr.mxu0 0.0
        %2986 = vmatpush1.msra.mxu0 0.0
        %2987 = vmatprep.subr.mxu0 0.0
        %2988 = vmatpush1.msra.mxu0 0.0
        %2989 = vmatprep.subr.mxu0 0.0
        %2990 = vmatpush1.msra.mxu0 0.0
        %2991 = vmatprep.subr.mxu0 0.0
        %2992 = vmatpush1.msra.mxu0 0.0
        %2993 = vmatprep.subr.mxu0 0.0
        %2994 = vmatpush1.msra.mxu0 0.0
        %2995 = vmatprep.subr.mxu0 0.0
        %2996 = vmatpush1.msra.mxu0 0.0
        %2997 = vmatprep.subr.mxu0 0.0
        %2998 = vmatpush1.msra.mxu0 0.0
        %2999 = vmatprep.subr.mxu0 0.0
        %3000 = vmatpush1.msra.mxu0 0.0
        %3001 = vmatprep.subr.mxu0 0.0
        %3002 = vmatpush1.msra.mxu0 0.0
        %3003 = vmatprep.subr.mxu0 0.0
        %3004 = vmatpush1.msra.mxu0 0.0
        %3005 = vmatprep.subr.mxu0 0.0
        %3006 = vmatpush1.msra.mxu0 0.0
        %3007 = vmatprep.subr.mxu0 0.0
        %3008 = vmatpush1.msra.mxu0 0.0
        %3009 = vmatprep.subr.mxu0 0.0
        %3010 = vmatpush1.msra.mxu0 0.0
        %3011 = vmatprep.subr.mxu0 0.0
        %3012 = vmatpush1.msra.mxu0 0.0
        %3013 = vmatprep.mubr.f32.mxu0 0.0
        %3014 = vmatmul.mubr.f32.gmra.mrb[0].mxu0 %v2926
        %v3015 = vpop.f32.mrb[0].mxu0
        %v3016 = vadd.f32 %v2887, %v3015
        %v3017 = vpop.f32.mrb[0].mxu0
        %3018 = vmatprep.mubr.f32.mxu0 0.0
        %3019 = vmatmul.mubr.f32.gmra.mrb[0].mxu0 %v2929
        %v3020 = vpop.f32.mrb[0].mxu0
        %v3021 = vadd.f32 %v2892, %v3020
        %v3022 = vpop.f32.mrb[0].mxu0
        %3023 = vmatprep.mubr.f32.mxu0 0.0
        %3024 = vmatmul.mubr.f32.gmra.mrb[0].mxu0 %v2932
        %v3025 = vpop.f32.mrb[0].mxu0
        %v3026 = vadd.f32 %v2897, %v3025
        %v3027 = vpop.f32.mrb[0].mxu0
        %3028 = vmatprep.mubr.f32.mxu0 0.0
        %3029 = vmatmul.mubr.f32.gmra.mrb[0].mxu0 %v2935
        %v3030 = vpop.f32.mrb[0].mxu0
        %v3031 = vadd.f32 %v2902, %v3030
        %v3032 = vpop.f32.mrb[0].mxu0
        %3033 = vmatprep.mubr.f32.mxu0 0.0
        %3034 = vmatmul.mubr.f32.gmra.mrb[0].mxu0 %v2938
        %v3035 = vpop.f32.mrb[0].mxu0
        %v3036 = vadd.f32 %v2907, %v3035
        %v3037 = vpop.f32.mrb[0].mxu0
        %3038 = vmatprep.mubr.f32.mxu0 0.0
        %3039 = vmatmul.mubr.f32.gmra.mrb[0].mxu0 %v2941
        %v3040 = vpop.f32.mrb[0].mxu0
        %v3041 = vadd.f32 %v2912, %v3040
        %v3042 = vpop.f32.mrb[0].mxu0
        %3043 = vmatprep.mubr.f32.mxu0 0.0
        %3044 = vmatmul.mubr.f32.gmra.mrb[0].mxu0 %v2944
        %v3045 = vpop.f32.mrb[0].mxu0
        %v3046 = vadd.f32 %v2917, %v3045
        %v3047 = vpop.f32.mrb[0].mxu0
        %3048 = vmatprep.mubr.f32.mxu0 0.0
        %3049 = vmatmul.mubr.f32.gmra.mrb[0].mxu0 %v2947
        %v3050 = vpop.f32.mrb[0].mxu0
        %v3051 = vadd.f32 %v2922, %v3050
        %v3052 = vpop.f32.mrb[0].mxu0
        %3053 = vdwg.mxu0
        %v3054 = vld [vmem:[%s18] sm:$0x1]
        %v3056 = vlaneseq
        %v3057 = vshrl.u32 %v3056, 7
        %v3058 = vsub.s32 0, %v3057
        %v3059 = vrot.slane %v3054, %v3058
        %v3061 = vadd.f32 %v3016, %v3059
        %v3062 = vadd.f32 %v3021, %v3059
        %v3063 = vadd.f32 %v3026, %v3059
        %v3064 = vadd.f32 %v3031, %v3059
        %v3065 = vadd.f32 %v3036, %v3059
        %v3066 = vadd.f32 %v3041, %v3059
        %v3067 = vadd.f32 %v3046, %v3059
        %v3068 = vadd.f32 %v3051, %v3059
        %v3069 = vld [vmem:[%s19] sm:$0xff]
        %v3070 = vld [vmem:[%s19 + $0x8] sm:$0xff]
        %v3071 = vld [vmem:[%s19 + $0x10] sm:$0xff]
        %v3072 = vld [vmem:[%s19 + $0x18] sm:$0xff]
        %v3073 = vld [vmem:[%s20] sm:$0x1]
        %v3075 = vlaneseq
        %v3076 = vshrl.u32 %v3075, 7
        %v3077 = vsub.s32 0, %v3076
        %v3078 = vrot.slane %v3073, %v3077
        %v3081 = vsel %vm1571, %v3061, 0
        %v3084 = vsel %vm1571, %v3062, 0
        %v3087 = vsel %vm1571, %v3063, 0
        %v3090 = vsel %vm1571, %v3064, 0
        %v3093 = vsel %vm1571, %v3065, 0
        %v3096 = vsel %vm1571, %v3066, 0
        %v3099 = vsel %vm1571, %v3067, 0
        %v3102 = vsel %vm1571, %v3068, 0
        %3104 = vmatprep.subr.mxu0 0.0
        %3105 = vmatpush1.msra.mxu0 %v3069
        %3106 = vmatprep.subr.mxu0 0.0
        %3107 = vmatpush1.msra.mxu0 %v3070
        %3108 = vmatprep.subr.mxu0 0.0
        %3109 = vmatpush1.msra.mxu0 %v3071
        %3110 = vmatprep.subr.mxu0 0.0
        %3111 = vmatpush1.msra.mxu0 %v3072
        %3112 = vmatprep.subr.mxu0 0.0
        %3113 = vmatpush1.msra.mxu0 0.0
        %3114 = vmatprep.subr.mxu0 0.0
        %3115 = vmatpush1.msra.mxu0 0.0
        %3116 = vmatprep.subr.mxu0 0.0
        %3117 = vmatpush1.msra.mxu0 0.0
        %3118 = vmatprep.subr.mxu0 0.0
        %3119 = vmatpush1.msra.mxu0 0.0
        %3120 = vmatprep.subr.mxu0 0.0
        %3121 = vmatpush1.msra.mxu0 0.0
        %3122 = vmatprep.subr.mxu0 0.0
        %3123 = vmatpush1.msra.mxu0 0.0
        %3124 = vmatprep.subr.mxu0 0.0
        %3125 = vmatpush1.msra.mxu0 0.0
        %3126 = vmatprep.subr.mxu0 0.0
        %3127 = vmatpush1.msra.mxu0 0.0
        %3128 = vmatprep.subr.mxu0 0.0
        %3129 = vmatpush1.msra.mxu0 0.0
        %3130 = vmatprep.subr.mxu0 0.0
        %3131 = vmatpush1.msra.mxu0 0.0
        %3132 = vmatprep.subr.mxu0 0.0
        %3133 = vmatpush1.msra.mxu0 0.0
        %3134 = vmatprep.subr.mxu0 0.0
        %3135 = vmatpush1.msra.mxu0 0.0
        %3136 = vmatprep.subr.mxu0 0.0
        %3137 = vmatpush1.msra.mxu0 0.0
        %3138 = vmatprep.subr.mxu0 0.0
        %3139 = vmatpush1.msra.mxu0 0.0
        %3140 = vmatprep.subr.mxu0 0.0
        %3141 = vmatpush1.msra.mxu0 0.0
        %3142 = vmatprep.subr.mxu0 0.0
        %3143 = vmatpush1.msra.mxu0 0.0
        %3144 = vmatprep.subr.mxu0 0.0
        %3145 = vmatpush1.msra.mxu0 0.0
        %3146 = vmatprep.subr.mxu0 0.0
        %3147 = vmatpush1.msra.mxu0 0.0
        %3148 = vmatprep.subr.mxu0 0.0
        %3149 = vmatpush1.msra.mxu0 0.0
        %3150 = vmatprep.subr.mxu0 0.0
        %3151 = vmatpush1.msra.mxu0 0.0
        %3152 = vmatprep.subr.mxu0 0.0
        %3153 = vmatpush1.msra.mxu0 0.0
        %3154 = vmatprep.subr.mxu0 0.0
        %3155 = vmatpush1.msra.mxu0 0.0
        %3156 = vmatprep.subr.mxu0 0.0
        %3157 = vmatpush1.msra.mxu0 0.0
        %3158 = vmatprep.subr.mxu0 0.0
        %3159 = vmatpush1.msra.mxu0 0.0
        %3160 = vmatprep.subr.mxu0 0.0
        %3161 = vmatpush1.msra.mxu0 0.0
        %3162 = vmatprep.subr.mxu0 0.0
        %3163 = vmatpush1.msra.mxu0 0.0
        %3164 = vmatprep.subr.mxu0 0.0
        %3165 = vmatpush1.msra.mxu0 0.0
        %3166 = vmatprep.subr.mxu0 0.0
        %3167 = vmatpush1.msra.mxu0 0.0
        %3168 = vmatprep.mubr.f32.mxu0 0.0
        %3169 = vmatmul.mubr.f32.gmra.mrb[0].mxu0 %v3081
        %v3170 = vpop.f32.mrb[0].mxu0
        %v3171 = vadd.f32 %v3078, %v3170
        %v3172 = vpop.f32.mrb[0].mxu0
        %3173 = vmatprep.mubr.f32.mxu0 0.0
        %3174 = vmatmul.mubr.f32.gmra.mrb[0].mxu0 %v3084
        %v3175 = vpop.f32.mrb[0].mxu0
        %v3176 = vadd.f32 %v3078, %v3175
        %v3177 = vpop.f32.mrb[0].mxu0
        %3178 = vmatprep.mubr.f32.mxu0 0.0
        %3179 = vmatmul.mubr.f32.gmra.mrb[0].mxu0 %v3087
        %v3180 = vpop.f32.mrb[0].mxu0
        %v3181 = vadd.f32 %v3078, %v3180
        %v3182 = vpop.f32.mrb[0].mxu0
        %3183 = vmatprep.mubr.f32.mxu0 0.0
        %3184 = vmatmul.mubr.f32.gmra.mrb[0].mxu0 %v3090
        %v3185 = vpop.f32.mrb[0].mxu0
        %v3186 = vadd.f32 %v3078, %v3185
        %v3187 = vpop.f32.mrb[0].mxu0
        %3188 = vmatprep.mubr.f32.mxu0 0.0
        %3189 = vmatmul.mubr.f32.gmra.mrb[0].mxu0 %v3093
        %v3190 = vpop.f32.mrb[0].mxu0
        %v3191 = vadd.f32 %v3078, %v3190
        %v3192 = vpop.f32.mrb[0].mxu0
        %3193 = vmatprep.mubr.f32.mxu0 0.0
        %3194 = vmatmul.mubr.f32.gmra.mrb[0].mxu0 %v3096
        %v3195 = vpop.f32.mrb[0].mxu0
        %v3196 = vadd.f32 %v3078, %v3195
        %v3197 = vpop.f32.mrb[0].mxu0
        %3198 = vmatprep.mubr.f32.mxu0 0.0
        %3199 = vmatmul.mubr.f32.gmra.mrb[0].mxu0 %v3099
        %v3200 = vpop.f32.mrb[0].mxu0
        %v3201 = vadd.f32 %v3078, %v3200
        %v3202 = vpop.f32.mrb[0].mxu0
        %3203 = vmatprep.mubr.f32.mxu0 0.0
        %3204 = vmatmul.mubr.f32.gmra.mrb[0].mxu0 %v3102
        %v3205 = vpop.f32.mrb[0].mxu0
        %v3206 = vadd.f32 %v3078, %v3205
        %v3207 = vpop.f32.mrb[0].mxu0
        %3208 = vdwg.mxu0
        %v3209 = vlaneseq
        %v3210 = vshrl.u32 %v3209, 7
        %v3211 = vsub.s32 0, %v3210
        %v3212 = vrot.slane %v1081, %v3211
        %v3213 = vadd.f32 %v3171, %v3212
        %v3214 = vadd.f32 %v3176, %v3212
        %v3215 = vadd.f32 %v3181, %v3212
        %v3216 = vadd.f32 %v3186, %v3212
        %v3217 = vadd.f32 %v3191, %v3212
        %v3218 = vadd.f32 %v3196, %v3212
        %v3219 = vadd.f32 %v3201, %v3212
        %v3220 = vadd.f32 %v3206, %v3212
        %v3221 = vld [vmem:[%s21] sm:$0xff]
        %v3222 = vld [vmem:[%s21 + $0x8] sm:$0xff]
        %v3223 = vld [vmem:[%s21 + $0x10] sm:$0xff]
        %v3224 = vld [vmem:[%s21 + $0x18] sm:$0xff]
        %v3225 = vld [vmem:[%s22] sm:$0xff]
        %v3226 = vld [vmem:[%s22 + $0x8] sm:$0xff]
        %v3227 = vld [vmem:[%s22 + $0x10] sm:$0xff]
        %v3228 = vld [vmem:[%s22 + $0x18] sm:$0xff]
        %3229 = vmatprep.subr.mxu0 0.0
        %3230 = vmatpush1.msra.mxu0 %v3225
        %3231 = vmatprep.subr.mxu0 0.0
        %3232 = vmatpush1.msra.mxu0 %v3226
        %3233 = vmatprep.subr.mxu0 0.0
        %3234 = vmatpush1.msra.mxu0 %v3227
        %3235 = vmatprep.subr.mxu0 0.0
        %3236 = vmatpush1.msra.mxu0 %v3228
        %3237 = vmatprep.subr.mxu0 0.0
        %3238 = vmatpush1.msra.mxu0 0.0
        %3239 = vmatprep.subr.mxu0 0.0
        %3240 = vmatpush1.msra.mxu0 0.0
        %3241 = vmatprep.subr.mxu0 0.0
        %3242 = vmatpush1.msra.mxu0 0.0
        %3243 = vmatprep.subr.mxu0 0.0
        %3244 = vmatpush1.msra.mxu0 0.0
        %3245 = vmatprep.subr.mxu0 0.0
        %3246 = vmatpush1.msra.mxu0 0.0
        %3247 = vmatprep.subr.mxu0 0.0
        %3248 = vmatpush1.msra.mxu0 0.0
        %3249 = vmatprep.subr.mxu0 0.0
        %3250 = vmatpush1.msra.mxu0 0.0
        %3251 = vmatprep.subr.mxu0 0.0
        %3252 = vmatpush1.msra.mxu0 0.0
        %3253 = vmatprep.subr.mxu0 0.0
        %3254 = vmatpush1.msra.mxu0 0.0
        %3255 = vmatprep.subr.mxu0 0.0
        %3256 = vmatpush1.msra.mxu0 0.0
        %3257 = vmatprep.subr.mxu0 0.0
        %3258 = vmatpush1.msra.mxu0 0.0
        %3259 = vmatprep.subr.mxu0 0.0
        %3260 = vmatpush1.msra.mxu0 0.0
        %3261 = vmatprep.subr.mxu0 0.0
        %3262 = vmatpush1.msra.mxu0 0.0
        %3263 = vmatprep.subr.mxu0 0.0
        %3264 = vmatpush1.msra.mxu0 0.0
        %3265 = vmatprep.subr.mxu0 0.0
        %3266 = vmatpush1.msra.mxu0 0.0
        %3267 = vmatprep.subr.mxu0 0.0
        %3268 = vmatpush1.msra.mxu0 0.0
        %3269 = vmatprep.subr.mxu0 0.0
        %3270 = vmatpush1.msra.mxu0 0.0
        %3271 = vmatprep.subr.mxu0 0.0
        %3272 = vmatpush1.msra.mxu0 0.0
        %3273 = vmatprep.subr.mxu0 0.0
        %3274 = vmatpush1.msra.mxu0 0.0
        %3275 = vmatprep.subr.mxu0 0.0
        %3276 = vmatpush1.msra.mxu0 0.0
        %3277 = vmatprep.subr.mxu0 0.0
        %3278 = vmatpush1.msra.mxu0 0.0
        %3279 = vmatprep.subr.mxu0 0.0
        %3280 = vmatpush1.msra.mxu0 0.0
        %3281 = vmatprep.subr.mxu0 0.0
        %3282 = vmatpush1.msra.mxu0 0.0
        %3283 = vmatprep.subr.mxu0 0.0
        %3284 = vmatpush1.msra.mxu0 0.0
        %3285 = vmatprep.subr.mxu0 0.0
        %3286 = vmatpush1.msra.mxu0 0.0
        %3287 = vmatprep.subr.mxu0 0.0
        %3288 = vmatpush1.msra.mxu0 0.0
        %3289 = vmatprep.subr.mxu0 0.0
        %3290 = vmatpush1.msra.mxu0 0.0
        %3291 = vmatprep.subr.mxu0 0.0
        %3292 = vmatpush1.msra.mxu0 0.0
        %3293 = vmatprep.mubr.f32.mxu0 0.0
        %3294 = vmatmul.mubr.f32.gmra.mrb[0].mxu0 %v2797
        %v3295 = vpop.f32.mrb[0].mxu0
        %v3296 = vadd.f32 0.0, %v3295
        %v3297 = vpop.f32.mrb[0].mxu0
        %3298 = vmatprep.mubr.f32.mxu0 0.0
        %3299 = vmatmul.mubr.f32.gmra.mrb[0].mxu0 %v2800
        %v3300 = vpop.f32.mrb[0].mxu0
        %v3301 = vadd.f32 0.0, %v3300
        %v3302 = vpop.f32.mrb[0].mxu0
        %3303 = vmatprep.mubr.f32.mxu0 0.0
        %3304 = vmatmul.mubr.f32.gmra.mrb[0].mxu0 %v2803
        %v3305 = vpop.f32.mrb[0].mxu0
        %v3306 = vadd.f32 0.0, %v3305
        %v3307 = vpop.f32.mrb[0].mxu0
        %3308 = vmatprep.mubr.f32.mxu0 0.0
        %3309 = vmatmul.mubr.f32.gmra.mrb[0].mxu0 %v2806
        %v3310 = vpop.f32.mrb[0].mxu0
        %v3311 = vadd.f32 0.0, %v3310
        %v3312 = vpop.f32.mrb[0].mxu0
        %3313 = vmatprep.mubr.f32.mxu0 0.0
        %3314 = vmatmul.mubr.f32.gmra.mrb[0].mxu0 %v2809
        %v3315 = vpop.f32.mrb[0].mxu0
        %v3316 = vadd.f32 0.0, %v3315
        %v3317 = vpop.f32.mrb[0].mxu0
        %3318 = vmatprep.mubr.f32.mxu0 0.0
        %3319 = vmatmul.mubr.f32.gmra.mrb[0].mxu0 %v2812
        %v3320 = vpop.f32.mrb[0].mxu0
        %v3321 = vadd.f32 0.0, %v3320
        %v3322 = vpop.f32.mrb[0].mxu0
        %3323 = vmatprep.mubr.f32.mxu0 0.0
        %3324 = vmatmul.mubr.f32.gmra.mrb[0].mxu0 %v2815
        %v3325 = vpop.f32.mrb[0].mxu0
        %v3326 = vadd.f32 0.0, %v3325
        %v3327 = vpop.f32.mrb[0].mxu0
        %3328 = vmatprep.mubr.f32.mxu0 0.0
        %3329 = vmatmul.mubr.f32.gmra.mrb[0].mxu0 %v2818
        %v3330 = vpop.f32.mrb[0].mxu0
        %v3331 = vadd.f32 0.0, %v3330
        %v3332 = vpop.f32.mrb[0].mxu0
        %3333 = vdwg.mxu0
        %v3335 = vsel %vm1571, %v3213, 0
        %v3338 = vsel %vm1571, %v3214, 0
        %v3341 = vsel %vm1571, %v3215, 0
        %v3344 = vsel %vm1571, %v3216, 0
        %v3347 = vsel %vm1571, %v3217, 0
        %v3350 = vsel %vm1571, %v3218, 0
        %v3353 = vsel %vm1571, %v3219, 0
        %v3356 = vsel %vm1571, %v3220, 0
        %3358 = vmatprep.subr.mxu0 0.0
        %3359 = vmatpush1.msra.mxu0 %v3221
        %3360 = vmatprep.subr.mxu0 0.0
        %3361 = vmatpush1.msra.mxu0 %v3222
        %3362 = vmatprep.subr.mxu0 0.0
        %3363 = vmatpush1.msra.mxu0 %v3223
        %3364 = vmatprep.subr.mxu0 0.0
        %3365 = vmatpush1.msra.mxu0 %v3224
        %3366 = vmatprep.subr.mxu0 0.0
        %3367 = vmatpush1.msra.mxu0 0.0
        %3368 = vmatprep.subr.mxu0 0.0
        %3369 = vmatpush1.msra.mxu0 0.0
        %3370 = vmatprep.subr.mxu0 0.0
        %3371 = vmatpush1.msra.mxu0 0.0
        %3372 = vmatprep.subr.mxu0 0.0
        %3373 = vmatpush1.msra.mxu0 0.0
        %3374 = vmatprep.subr.mxu0 0.0
        %3375 = vmatpush1.msra.mxu0 0.0
        %3376 = vmatprep.subr.mxu0 0.0
        %3377 = vmatpush1.msra.mxu0 0.0
        %3378 = vmatprep.subr.mxu0 0.0
        %3379 = vmatpush1.msra.mxu0 0.0
        %3380 = vmatprep.subr.mxu0 0.0
        %3381 = vmatpush1.msra.mxu0 0.0
        %3382 = vmatprep.subr.mxu0 0.0
        %3383 = vmatpush1.msra.mxu0 0.0
        %3384 = vmatprep.subr.mxu0 0.0
        %3385 = vmatpush1.msra.mxu0 0.0
        %3386 = vmatprep.subr.mxu0 0.0
        %3387 = vmatpush1.msra.mxu0 0.0
        %3388 = vmatprep.subr.mxu0 0.0
        %3389 = vmatpush1.msra.mxu0 0.0
        %3390 = vmatprep.subr.mxu0 0.0
        %3391 = vmatpush1.msra.mxu0 0.0
        %3392 = vmatprep.subr.mxu0 0.0
        %3393 = vmatpush1.msra.mxu0 0.0
        %3394 = vmatprep.subr.mxu0 0.0
        %3395 = vmatpush1.msra.mxu0 0.0
        %3396 = vmatprep.subr.mxu0 0.0
        %3397 = vmatpush1.msra.mxu0 0.0
        %3398 = vmatprep.subr.mxu0 0.0
        %3399 = vmatpush1.msra.mxu0 0.0
        %3400 = vmatprep.subr.mxu0 0.0
        %3401 = vmatpush1.msra.mxu0 0.0
        %3402 = vmatprep.subr.mxu0 0.0
        %3403 = vmatpush1.msra.mxu0 0.0
        %3404 = vmatprep.subr.mxu0 0.0
        %3405 = vmatpush1.msra.mxu0 0.0
        %3406 = vmatprep.subr.mxu0 0.0
        %3407 = vmatpush1.msra.mxu0 0.0
        %3408 = vmatprep.subr.mxu0 0.0
        %3409 = vmatpush1.msra.mxu0 0.0
        %3410 = vmatprep.subr.mxu0 0.0
        %3411 = vmatpush1.msra.mxu0 0.0
        %3412 = vmatprep.subr.mxu0 0.0
        %3413 = vmatpush1.msra.mxu0 0.0
        %3414 = vmatprep.subr.mxu0 0.0
        %3415 = vmatpush1.msra.mxu0 0.0
        %3416 = vmatprep.subr.mxu0 0.0
        %3417 = vmatpush1.msra.mxu0 0.0
        %3418 = vmatprep.subr.mxu0 0.0
        %3419 = vmatpush1.msra.mxu0 0.0
        %3420 = vmatprep.subr.mxu0 0.0
        %3421 = vmatpush1.msra.mxu0 0.0
        %3422 = vmatprep.mubr.f32.mxu0 0.0
        %3423 = vmatmul.mubr.f32.gmra.mrb[0].mxu0 %v3335
        %v3424 = vpop.f32.mrb[0].mxu0
        %v3425 = vadd.f32 %v3296, %v3424
        %v3426 = vpop.f32.mrb[0].mxu0
        %3427 = vmatprep.mubr.f32.mxu0 0.0
        %3428 = vmatmul.mubr.f32.gmra.mrb[0].mxu0 %v3338
        %v3429 = vpop.f32.mrb[0].mxu0
        %v3430 = vadd.f32 %v3301, %v3429
        %v3431 = vpop.f32.mrb[0].mxu0
        %3432 = vmatprep.mubr.f32.mxu0 0.0
        %3433 = vmatmul.mubr.f32.gmra.mrb[0].mxu0 %v3341
        %v3434 = vpop.f32.mrb[0].mxu0
        %v3435 = vadd.f32 %v3306, %v3434
        %v3436 = vpop.f32.mrb[0].mxu0
        %3437 = vmatprep.mubr.f32.mxu0 0.0
        %3438 = vmatmul.mubr.f32.gmra.mrb[0].mxu0 %v3344
        %v3439 = vpop.f32.mrb[0].mxu0
        %v3440 = vadd.f32 %v3311, %v3439
        %v3441 = vpop.f32.mrb[0].mxu0
        %3442 = vmatprep.mubr.f32.mxu0 0.0
        %3443 = vmatmul.mubr.f32.gmra.mrb[0].mxu0 %v3347
        %v3444 = vpop.f32.mrb[0].mxu0
        %v3445 = vadd.f32 %v3316, %v3444
        %v3446 = vpop.f32.mrb[0].mxu0
        %3447 = vmatprep.mubr.f32.mxu0 0.0
        %3448 = vmatmul.mubr.f32.gmra.mrb[0].mxu0 %v3350
        %v3449 = vpop.f32.mrb[0].mxu0
        %v3450 = vadd.f32 %v3321, %v3449
        %v3451 = vpop.f32.mrb[0].mxu0
        %3452 = vmatprep.mubr.f32.mxu0 0.0
        %3453 = vmatmul.mubr.f32.gmra.mrb[0].mxu0 %v3353
        %v3454 = vpop.f32.mrb[0].mxu0
        %v3455 = vadd.f32 %v3326, %v3454
        %v3456 = vpop.f32.mrb[0].mxu0
        %3457 = vmatprep.mubr.f32.mxu0 0.0
        %3458 = vmatmul.mubr.f32.gmra.mrb[0].mxu0 %v3356
        %v3459 = vpop.f32.mrb[0].mxu0
        %v3460 = vadd.f32 %v3331, %v3459
        %v3461 = vpop.f32.mrb[0].mxu0
        %3462 = vdwg.mxu0
        %v3463 = vld [vmem:[%s23] sm:$0x1]
        %v3465 = vlaneseq
        %v3466 = vshrl.u32 %v3465, 7
        %v3467 = vsub.s32 0, %v3466
        %v3468 = vrot.slane %v3463, %v3467
        %v3470 = vadd.f32 %v3425, %v3468
        %v3471 = vadd.f32 %v3430, %v3468
        %v3472 = vadd.f32 %v3435, %v3468
        %v3473 = vadd.f32 %v3440, %v3468
        %v3474 = vadd.f32 %v3445, %v3468
        %v3475 = vadd.f32 %v3450, %v3468
        %v3476 = vadd.f32 %v3455, %v3468
        %v3477 = vadd.f32 %v3460, %v3468
        %v3478 = vld [vmem:[%s24] sm:$0xff]
        %v3479 = vld [vmem:[%s24 + $0x8] sm:$0xff]
        %v3480 = vld [vmem:[%s24 + $0x10] sm:$0xff]
        %v3481 = vld [vmem:[%s24 + $0x18] sm:$0xff]
        %v3482 = vld [vmem:[%s25] sm:$0x1]
        %v3484 = vlaneseq
        %v3485 = vshrl.u32 %v3484, 7
        %v3486 = vsub.s32 0, %v3485
        %v3487 = vrot.slane %v3482, %v3486
        %v3490 = vsel %vm1571, %v3470, 0
        %v3493 = vsel %vm1571, %v3471, 0
        %v3496 = vsel %vm1571, %v3472, 0
        %v3499 = vsel %vm1571, %v3473, 0
        %v3502 = vsel %vm1571, %v3474, 0
        %v3505 = vsel %vm1571, %v3475, 0
        %v3508 = vsel %vm1571, %v3476, 0
        %v3511 = vsel %vm1571, %v3477, 0
        %3513 = vmatprep.subr.mxu0 0.0
        %3514 = vmatpush1.msra.mxu0 %v3478
        %3515 = vmatprep.subr.mxu0 0.0
        %3516 = vmatpush1.msra.mxu0 %v3479
        %3517 = vmatprep.subr.mxu0 0.0
        %3518 = vmatpush1.msra.mxu0 %v3480
        %3519 = vmatprep.subr.mxu0 0.0
        %3520 = vmatpush1.msra.mxu0 %v3481
        %3521 = vmatprep.subr.mxu0 0.0
        %3522 = vmatpush1.msra.mxu0 0.0
        %3523 = vmatprep.subr.mxu0 0.0
        %3524 = vmatpush1.msra.mxu0 0.0
        %3525 = vmatprep.subr.mxu0 0.0
        %3526 = vmatpush1.msra.mxu0 0.0
        %3527 = vmatprep.subr.mxu0 0.0
        %3528 = vmatpush1.msra.mxu0 0.0
        %3529 = vmatprep.subr.mxu0 0.0
        %3530 = vmatpush1.msra.mxu0 0.0
        %3531 = vmatprep.subr.mxu0 0.0
        %3532 = vmatpush1.msra.mxu0 0.0
        %3533 = vmatprep.subr.mxu0 0.0
        %3534 = vmatpush1.msra.mxu0 0.0
        %3535 = vmatprep.subr.mxu0 0.0
        %3536 = vmatpush1.msra.mxu0 0.0
        %3537 = vmatprep.subr.mxu0 0.0
        %3538 = vmatpush1.msra.mxu0 0.0
        %3539 = vmatprep.subr.mxu0 0.0
        %3540 = vmatpush1.msra.mxu0 0.0
        %3541 = vmatprep.subr.mxu0 0.0
        %3542 = vmatpush1.msra.mxu0 0.0
        %3543 = vmatprep.subr.mxu0 0.0
        %3544 = vmatpush1.msra.mxu0 0.0
        %3545 = vmatprep.subr.mxu0 0.0
        %3546 = vmatpush1.msra.mxu0 0.0
        %3547 = vmatprep.subr.mxu0 0.0
        %3548 = vmatpush1.msra.mxu0 0.0
        %3549 = vmatprep.subr.mxu0 0.0
        %3550 = vmatpush1.msra.mxu0 0.0
        %3551 = vmatprep.subr.mxu0 0.0
        %3552 = vmatpush1.msra.mxu0 0.0
        %3553 = vmatprep.subr.mxu0 0.0
        %3554 = vmatpush1.msra.mxu0 0.0
        %3555 = vmatprep.subr.mxu0 0.0
        %3556 = vmatpush1.msra.mxu0 0.0
        %3557 = vmatprep.subr.mxu0 0.0
        %3558 = vmatpush1.msra.mxu0 0.0
        %3559 = vmatprep.subr.mxu0 0.0
        %3560 = vmatpush1.msra.mxu0 0.0
        %3561 = vmatprep.subr.mxu0 0.0
        %3562 = vmatpush1.msra.mxu0 0.0
        %3563 = vmatprep.subr.mxu0 0.0
        %3564 = vmatpush1.msra.mxu0 0.0
        %3565 = vmatprep.subr.mxu0 0.0
        %3566 = vmatpush1.msra.mxu0 0.0
        %3567 = vmatprep.subr.mxu0 0.0
        %3568 = vmatpush1.msra.mxu0 0.0
        %3569 = vmatprep.subr.mxu0 0.0
        %3570 = vmatpush1.msra.mxu0 0.0
        %3571 = vmatprep.subr.mxu0 0.0
        %3572 = vmatpush1.msra.mxu0 0.0
        %3573 = vmatprep.subr.mxu0 0.0
        %3574 = vmatpush1.msra.mxu0 0.0
        %3575 = vmatprep.subr.mxu0 0.0
        %3576 = vmatpush1.msra.mxu0 0.0
        %3577 = vmatprep.mubr.f32.mxu0 0.0
        %3578 = vmatmul.mubr.f32.gmra.mrb[0].mxu0 %v3490
        %v3579 = vpop.f32.mrb[0].mxu0
        %v3580 = vadd.f32 %v3487, %v3579
        %v3581 = vpop.f32.mrb[0].mxu0
        %3582 = vmatprep.mubr.f32.mxu0 0.0
        %3583 = vmatmul.mubr.f32.gmra.mrb[0].mxu0 %v3493
        %v3584 = vpop.f32.mrb[0].mxu0
        %v3585 = vadd.f32 %v3487, %v3584
        %v3586 = vpop.f32.mrb[0].mxu0
        %3587 = vmatprep.mubr.f32.mxu0 0.0
        %3588 = vmatmul.mubr.f32.gmra.mrb[0].mxu0 %v3496
        %v3589 = vpop.f32.mrb[0].mxu0
        %v3590 = vadd.f32 %v3487, %v3589
        %v3591 = vpop.f32.mrb[0].mxu0
        %3592 = vmatprep.mubr.f32.mxu0 0.0
        %3593 = vmatmul.mubr.f32.gmra.mrb[0].mxu0 %v3499
        %v3594 = vpop.f32.mrb[0].mxu0
        %v3595 = vadd.f32 %v3487, %v3594
        %v3596 = vpop.f32.mrb[0].mxu0
        %3597 = vmatprep.mubr.f32.mxu0 0.0
        %3598 = vmatmul.mubr.f32.gmra.mrb[0].mxu0 %v3502
        %v3599 = vpop.f32.mrb[0].mxu0
        %v3600 = vadd.f32 %v3487, %v3599
        %v3601 = vpop.f32.mrb[0].mxu0
        %3602 = vmatprep.mubr.f32.mxu0 0.0
        %3603 = vmatmul.mubr.f32.gmra.mrb[0].mxu0 %v3505
        %v3604 = vpop.f32.mrb[0].mxu0
        %v3605 = vadd.f32 %v3487, %v3604
        %v3606 = vpop.f32.mrb[0].mxu0
        %3607 = vmatprep.mubr.f32.mxu0 0.0
        %3608 = vmatmul.mubr.f32.gmra.mrb[0].mxu0 %v3508
        %v3609 = vpop.f32.mrb[0].mxu0
        %v3610 = vadd.f32 %v3487, %v3609
        %v3611 = vpop.f32.mrb[0].mxu0
        %3612 = vmatprep.mubr.f32.mxu0 0.0
        %3613 = vmatmul.mubr.f32.gmra.mrb[0].mxu0 %v3511
        %v3614 = vpop.f32.mrb[0].mxu0
        %v3615 = vadd.f32 %v3487, %v3614
        %v3616 = vpop.f32.mrb[0].mxu0
        %3617 = vdwg.mxu0
        %3618 = vxpose.xlu0.b32.start [1/16] %v3580, 128
        %3619 = vxpose.xlu0.b32.cont [2/16] %v3585, 128
        %3620 = vxpose.xlu0.b32.cont [3/16] %v3590, 128
        %3621 = vxpose.xlu0.b32.cont [4/16] %v3595, 128
        %3622 = vxpose.xlu0.b32.cont [5/16] %v3600, 128
        %3623 = vxpose.xlu0.b32.cont [6/16] %v3605, 128
        %3624 = vxpose.xlu0.b32.cont [7/16] %v3610, 128
        %3625 = vxpose.xlu0.b32.cont [8/16] %v3615, 128
        %3626 = vxpose.xlu0.b32.cont [9/16] 0.0, 128
        %3627 = vxpose.xlu0.b32.cont [10/16] 0.0, 128
        %3628 = vxpose.xlu0.b32.cont [11/16] 0.0, 128
        %3629 = vxpose.xlu0.b32.cont [12/16] 0.0, 128
        %3630 = vxpose.xlu0.b32.cont [13/16] 0.0, 128
        %3631 = vxpose.xlu0.b32.cont [14/16] 0.0, 128
        %3632 = vxpose.xlu0.b32.cont [15/16] 0.0, 128
        %3633 = vxpose.xlu0.b32.end [16/16] 0.0, 128
        %v3634 = vpop.trf.xlu0
        %v3635 = vpop.trf.xlu0
        %v3636 = vpop.trf.xlu0
        %v3637 = vpop.trf.xlu0
        %v3638 = vpop.trf.xlu0
        %v3639 = vpop.trf.xlu0
        %v3640 = vpop.trf.xlu0
        %v3641 = vpop.trf.xlu0
        %v3642 = vpop.trf.xlu0
        %v3643 = vpop.trf.xlu0
        %v3644 = vpop.trf.xlu0
        %v3645 = vpop.trf.xlu0
        %v3646 = vpop.trf.xlu0
        %v3647 = vpop.trf.xlu0
        %v3648 = vpop.trf.xlu0
        %v3649 = vpop.trf.xlu0
        %3650 = vst.msk [vmem:[%s879] sm:$0xff] %vm1010, %v3634
        %3651 = vst.msk [vmem:[%s879 + $0x8] sm:$0xff] %vm1010, %v3635
        %3652 = vst.msk [vmem:[%s879 + $0x10] sm:$0xff] %vm1010, %v3636
        %3653 = vst.msk [vmem:[%s879 + $0x18] sm:$0xff] %vm1010, %v3637
        %s3654 = sand.u32 %s634, 1
        %s3655 = scalar_lea.sflag [#allocation3], %s3654
        %s3656 = sand.u32 %s634, 1
        %s3657 = smul.addr %s3656, 32
        %s3658 = scalar_lea.vmem [#allocation2], %s3657
        // Predicated region
        $region125: #{tpu_custom_call.1} parent=123 // pred_check
          %p3659 = pneg %p644
        $region126: #{tpu_custom_call.1} parent=123 // pred_check_branch
          %3661 = sbr.rel (%p3659) target = $region128
        $region127: #{tpu_custom_call.1} parent=123 // pred_region
          %s3663 = ssub.s32 512, 512
          %3664 = vsyncadd %s3655, %s3663
          %s3665 = smul.addr %s40, 4
          %s3666 = smul.addr %s3665, 128
          %s3667 = scalar_lea.hbm %s26, %s3666
          %s3668 = sshll.u32 %s3658, 4
          %s3669 = int_to_ptr.vmem [resolvable:$true] %s3668
          %3674 = dma.vmem_to_hbm [thread:$0]  %s3669, 512, %s3667, %s3655, 128, 128, 8
        $region128: #{tpu_custom_call.1} parent=123 // pred_fallthru
          _
      $region124: #{tpu_custom_call.1} parent=5 // pred_fallthru
        _
      %p3675 = scmp.le.s32.totalorder 2, %s35
      // Predicated region
      $region129: #{tpu_custom_call.1} parent=5 // pred_check
        %p3676 = pneg %p3675
      $region130: #{tpu_custom_call.1} parent=5 // pred_check_branch
        %3678 = sbr.rel (%p3676) target = $region132
      $region131: #{tpu_custom_call.1} parent=5 // pred_region
        %s3679 = ssub.s32 %s35, 2
        // Predicated region
        $region133: #{tpu_custom_call.1} parent=131 // pred_check
          %p3680 = pneg %p650
        $region134: #{tpu_custom_call.1} parent=131 // pred_check_branch
          %3682 = sbr.rel (%p3680) target = $region136
        $region135: #{tpu_custom_call.1} parent=131 // pred_region
          %s3683 = sand.u32 %s635, 1
          %s3684 = scalar_lea.sflag [#allocation3], %s3683
          %s3685 = sand.u32 %s635, 1
          %s3686 = smul.addr %s3685, 32
          %s3687 = scalar_lea.vmem [#allocation2], %s3686
          %3688 = dma.done %s3684, 512
        $region136: #{tpu_custom_call.1} parent=131 // pred_fallthru
          _
      $region132: #{tpu_custom_call.1} parent=5 // pred_fallthru
        _
    $region6: #{tpu_custom_call.1} parent=1 // loop_footer
      %s39 = sadd.s32 1, %s35
    $region7: #{tpu_custom_call.1} parent=1 // loop_footer_branch
      %34 = sbr.rel target = $region3
    $region8: #{tpu_custom_call.1} parent=1 // loop_exit
      _
    %3689 = vsyncpa [#allocation3], 1
    %s3690 = scalar_lea.sflag [#allocation3], 1
    %3691 = vsyncpa %s3690, 1

</llo_original>
